<compile_context>
chip_gen: v6e
topology: v6e:2x2x1
jax: 0.10.0
libtpu: 0.0.40
codegen_flags: <defaults>
</compile_context>

<pallas_src>
import functools

import jax
import jax.numpy as jnp
from jax.experimental import pallas as pl
from jax.experimental.pallas import tpu as pltpu


def _round_up(x, m):
    return pl.cdiv(x, m) * m


# ----------------------------- Pallas kernel ------------------------------ #

def _bilstm_block_kernel(len_ref, emb_ref, wih_ref, whh_ref, b_ref,
                         mb_ref, hfin_ref, cfin_ref,
                         xg_s, *, tt, b_pad, h_pad, unroll):
    """Both LSTM directions, Tt timesteps per grid step.

    Grid: (direction, time_block).  The time BlockSpecs walk forward for
    d == 0 and backward for d == 1; inside the block the unrolled loop also
    reverses its local order for d == 1.  hfin/cfin (resident output blocks,
    block index depends only on d) carry the recurrent state across blocks.
    mb_ref is this block's (tt*B, H_pad) slab of the fused memory bank; the
    direction selects which H_pad column block it lands in.
    """
    d = pl.program_id(0)           # 0 = forward, 1 = backward
    tb = pl.program_id(1)          # position along this direction's time walk
    nt = pl.num_programs(1)

    # Zero the recurrent state at the start of each direction's time walk.
    @pl.when(tb == 0)
    def _():
        hfin_ref[...] = jnp.zeros_like(hfin_ref)
        cfin_ref[...] = jnp.zeros_like(cfin_ref)

    # Input projection for the whole time block: one big MXU matmul (bf16 in,
    # f32 out), off the recurrence critical path.
    # (Tt*B, E) @ (E, 4H_pad) + (1, 4H_pad) -> (Tt*B, 4H_pad)
    xg_s[...] = (jnp.dot(emb_ref[...], wih_ref[0],
                         preferred_element_type=jnp.float32)
                 + b_ref[0])

    # Hoisted once per grid step (JAX does not CSE broadcasts in an unrolled
    # loop): lengths column broadcast across the H lanes for the vsel mask.
    len_bcast = jnp.broadcast_to(len_ref[...], (b_pad, h_pad))   # (B, H) int32

    # Global time-block index of this grid step (walk is reversed for d == 1).
    tblk = (1 - d) * tb + d * (nt - 1 - tb)

    def step(i, carry):
        h_prev, c_prev = carry
        # Local timestep inside the block (reversed for the backward dir).
        tloc = (1 - d) * i + d * (tt - 1 - i)
        gt = tblk * tt + tloc                       # global timestep
        row = pl.multiple_of(tloc * b_pad, b_pad)

        # Read W_hh from VMEM inside the loop (keeps it off the vreg budget).
        gates = (xg_s[pl.ds(row, b_pad), :]         # precomputed x·W_ih + b
                 + jnp.dot(h_prev.astype(whh_ref.dtype), whh_ref[0],
                           preferred_element_type=jnp.float32))   # (B, 4H_pad)

        # PyTorch LSTM gate order: i, f, g, o.  H_pad is a multiple of 128,
        # so every slice starts on a lane boundary (no relayout copies).
        i_g = jax.nn.sigmoid(gates[:, 0 * h_pad:1 * h_pad])
        f_g = jax.nn.sigmoid(gates[:, 1 * h_pad:2 * h_pad])
        g_g = jnp.tanh(gates[:, 2 * h_pad:3 * h_pad])
        o_g = jax.nn.sigmoid(gates[:, 3 * h_pad:4 * h_pad])

        c_new = f_g * c_prev + i_g * g_g
        h_new = o_g * jnp.tanh(c_new)

        # pack()/unpack() semantics: carry state past each sequence's end,
        # zero the padded output rows.  One compare + three vsel per step.
        m = gt < len_bcast                           # (B, H_pad) bool
        h = jnp.where(m, h_new, h_prev)
        c = jnp.where(m, c_new, c_prev)
        mb_ref[pl.ds(row, b_pad), :] = jnp.where(m, h_new, 0.0).astype(
            mb_ref.dtype)
        return h, c

    h_fin, c_fin = jax.lax.fori_loop(0, tt, step,
                                     (hfin_ref[0], cfin_ref[0]),
                                     unroll=unroll)

    # One state write-back per time block (not per timestep).
    hfin_ref[0] = h_fin
    cfin_ref[0] = c_fin


# ----------------------------- host wrapper -------------------------------- #

def _pad_gate_cols(w, H, H_pad):
    """(..., 4H) -> (..., 4*H_pad): each of the 4 gate blocks padded to H_pad."""
    if H_pad == H:
        return w
    pads = [(0, 0)] * (w.ndim - 1) + [(0, H_pad - H)]
    return jnp.concatenate(
        [jnp.pad(w[..., k * H:(k + 1) * H], pads) for k in range(4)], axis=-1)


def _bilstm(emb, lengths, wih, whh, bias, *, tt=None,
            mxu_dtype=jnp.bfloat16):
    """Run both LSTM directions over the full sequence in one pallas_call.

    emb: (T, B, E) f32; lengths: (B,) int32
    wih: (2, E, 4H); whh: (2, H, 4H); bias: (2, 1, 4H)
    Returns memory_bank (T, B, 2H), h_n (2, B, H), c_n (2, B, H).
    """
    T, B, E = emb.shape
    H = whh.shape[1]

    H_pad = _round_up(H, 128)      # lane-aligned gate slices / output tiles
    B_pad = _round_up(B, 8)        # sublane-aligned per-step rows

    # Time block: target >=512 rows into the block input-projection matmul
    # (MXU fill + grid-overhead amortization) without over-padding tiny T.
    if tt is None:
        tt = max(8, pl.cdiv(512, B_pad))
    tt = min(tt, _round_up(T, 8))
    T_pad = _round_up(T, tt)
    nt = T_pad // tt

    # Pad batch / time.  Padded timesteps and batch rows are masked out
    # in-kernel (length 0 / t >= length), so correctness is unaffected.
    if B_pad != B:
        emb = jnp.pad(emb, ((0, 0), (0, B_pad - B), (0, 0)))
        lengths = jnp.pad(lengths, (0, B_pad - B))
    if T_pad != T:
        emb = jnp.pad(emb, ((0, T_pad - T), (0, 0), (0, 0)))

    # Pad each gate's H columns (and W_hh's H rows) to H_pad.  The padded
    # columns carry zero pre-activations and zero state, and never feed back.
    wih_p = _pad_gate_cols(wih, H, H_pad).astype(mxu_dtype)        # (2,E,4Hp)
    whh_p = _pad_gate_cols(whh, H, H_pad)
    whh_p = jnp.pad(whh_p, ((0, 0), (0, H_pad - H), (0, 0))).astype(mxu_dtype)
    bias_p = _pad_gate_cols(bias, H, H_pad).astype(jnp.float32)    # (2,1,4Hp)

    emb2d = emb.reshape(T_pad * B_pad, E).astype(mxu_dtype)
    len_col = lengths.astype(jnp.int32).reshape(B_pad, 1)

    def twalk(d, tb):
        return (1 - d) * tb + d * (nt - 1 - tb)

    tmap2 = lambda d, tb: (twalk(d, tb), 0)           # emb time block
    mb_map = lambda d, tb: (twalk(d, tb), d)          # fused memory-bank slab
    dmap3 = lambda d, tb: (d, 0, 0)                   # per-direction / resident

    kernel = functools.partial(
        _bilstm_block_kernel, tt=tt, b_pad=B_pad, h_pad=H_pad,
        unroll=(True if tt <= 8 else 4))

    # Explicit VMEM budget (default scoped limit is only 16/32 MiB).
    itemsize = jnp.dtype(mxu_dtype).itemsize
    est = (2 * tt * B_pad * E * itemsize                # emb block (dbl-buf)
           + 2 * tt * B_pad * H_pad * 4                 # mb block (dbl-buf)
           + tt * B_pad * 4 * H_pad * 4                 # xg scratch
           + 2 * (E + H_pad) * 4 * H_pad * itemsize     # weights (dbl-buf)
           + 2 * 4 * H_pad * 4 + 4 * B_pad * H_pad * 4)
    vmem_limit = int(max(32 * 2 ** 20, min(64 * 2 ** 20, 4 * est)))

    out, h_n, c_n = pl.pallas_call(
        kernel,
        out_shape=(
            jax.ShapeDtypeStruct((T_pad * B_pad, 2 * H_pad), jnp.float32),
            jax.ShapeDtypeStruct((2, B_pad, H_pad), jnp.float32),
            jax.ShapeDtypeStruct((2, B_pad, H_pad), jnp.float32),
        ),
        grid_spec=pltpu.PrefetchScalarGridSpec(
            num_scalar_prefetch=0,
            grid=(2, nt),
            in_specs=[
                pl.BlockSpec((B_pad, 1), lambda d, tb: (0, 0)),   # lengths
                pl.BlockSpec((tt * B_pad, E), tmap2),             # emb block
                pl.BlockSpec((1, E, 4 * H_pad), dmap3),           # W_ih[d]
                pl.BlockSpec((1, H_pad, 4 * H_pad), dmap3),       # W_hh[d]
                pl.BlockSpec((1, 1, 4 * H_pad), dmap3),           # bias[d]
            ],
            out_specs=[
                pl.BlockSpec((tt * B_pad, H_pad), mb_map),        # memory bank
                pl.BlockSpec((1, B_pad, H_pad), dmap3),           # final h
                pl.BlockSpec((1, B_pad, H_pad), dmap3),           # final c
            ],
            scratch_shapes=[
                pltpu.VMEM((tt * B_pad, 4 * H_pad), jnp.float32),  # x·W_ih + b
            ],
        ),
        compiler_params=pltpu.CompilerParams(
            dimension_semantics=("parallel", "arbitrary"),   # megacore on v7x
            vmem_limit_bytes=vmem_limit),
    )(len_col, emb2d, wih_p, whh_p, bias_p)

    out3 = out.reshape(T_pad, B_pad, 2 * H_pad)
    if H_pad == H:
        memory_bank = out3[:T, :B, :]           # already fused (T, B, 2H)
    else:
        # Only taken when H is not 128-aligned: drop the padded gate lanes.
        memory_bank = jnp.concatenate(
            [out3[:T, :B, :H], out3[:T, :B, H_pad:H_pad + H]], axis=-1)
    return memory_bank, h_n[:, :B, :H], c_n[:, :B, :H]


# --------------------------- RNNEncoder forward ---------------------------- #

def fix_brnn_hidden(h):
    # h: (num_layers * 2, B, H) -> (num_layers, B, 2H)
    return jnp.concatenate([h[0:h.shape[0]:2], h[1:h.shape[0]:2]], axis=2)


def rnn_encoder_forward(params, src, lengths, *, tt=None,
                        mxu_dtype=jnp.bfloat16):
    """src: (T, B) int32 token ids; lengths: (B,) int32."""
    emb = params["emb_table"][src]                            # (T, B, E)

    wih = jnp.stack([params["wih_f"], params["wih_b"]])       # (2, E, 4H)
    whh = jnp.stack([params["whh_f"], params["whh_b"]])       # (2, H, 4H)
    bias = jnp.stack([params["b_f"], params["b_b"]])          # (2, 1, 4H)

    memory_bank, h_n, c_n = _bilstm(emb, lengths, wih, whh, bias,
                                    tt=tt, mxu_dtype=mxu_dtype)
    encoder_final = (fix_brnn_hidden(h_n), fix_brnn_hidden(c_n))  # (1,B,2H)
    return encoder_final, memory_bank


# ------------------------------ pure-JAX ref -------------------------------- #

def _ref_lstm_direction(emb, mask, wih, whh, b, reverse, mxu_dtype):
    T, B, E = emb.shape
    H = whh.shape[0]
    emb_c = emb.astype(mxu_dtype)
    wih_c = wih.astype(mxu_dtype)
    whh_c = whh.astype(mxu_dtype)
    h = jnp.zeros((B, H), jnp.float32)
    c = jnp.zeros((B, H), jnp.float32)
    outs = [None] * T
    ts = range(T - 1, -1, -1) if reverse else range(T)
    for t in ts:
        x, m = emb_c[t], mask[t]
        gates = (jnp.dot(x, wih_c, preferred_element_type=jnp.float32)
                 + jnp.dot(h.astype(mxu_dtype), whh_c,
                           preferred_element_type=jnp.float32)
                 + b)
        i = jax.nn.sigmoid(gates[:, :H])
        f = jax.nn.sigmoid(gates[:, H:2 * H])
        g = jnp.tanh(gates[:, 2 * H:3 * H])
        o = jax.nn.sigmoid(gates[:, 3 * H:])
        c_new = f * c + i * g
        h_new = o * jnp.tanh(c_new)
        h = m * h_new + (1.0 - m) * h
        c = m * c_new + (1.0 - m) * c
        outs[t] = m * h_new
    return jnp.stack(outs), h, c


def ref_forward(params, src, lengths, mxu_dtype=jnp.bfloat16):
    T, B = src.shape
    emb = params["emb_table"][src]
    mask = (jnp.arange(T)[:, None] < lengths[None, :]
            ).astype(jnp.float32)[:, :, None]
    of, hf, cf = _ref_lstm_direction(emb, mask, params["wih_f"],
                                     params["whh_f"], params["b_f"],
                                     False, mxu_dtype)
    ob, hb, cb = _ref_lstm_direction(emb, mask, params["wih_b"],
                                     params["whh_b"], params["b_b"],
                                     True, mxu_dtype)
    mb = jnp.concatenate([of, ob], axis=2)
    h_n = jnp.stack([hf, hb], axis=0)
    c_n = jnp.stack([cf, cb], axis=0)
    return (fix_brnn_hidden(h_n), fix_brnn_hidden(c_n)), mb


# ---------------------------------- main ----------------------------------- #

if __name__ == "__main__":
    T, B, E, H, V = 8, 8, 32, 32, 16

    key = jax.random.PRNGKey(0)
    k = jax.random.split(key, 8)
    params = {
        "emb_table": jax.random.normal(k[0], (V, E), jnp.float32) * 0.5,
        "wih_f": jax.random.normal(k[1], (E, 4 * H), jnp.float32) * 0.1,
        "whh_f": jax.random.normal(k[2], (H, 4 * H), jnp.float32) * 0.1,
        "b_f":   jax.random.normal(k[3], (1, 4 * H), jnp.float32) * 0.1,
        "wih_b": jax.random.normal(k[4], (E, 4 * H), jnp.float32) * 0.1,
        "whh_b": jax.random.normal(k[5], (H, 4 * H), jnp.float32) * 0.1,
        "b_b":   jax.random.normal(k[6], (1, 4 * H), jnp.float32) * 0.1,
    }

    src = jax.random.randint(k[7], (T, B), 0, V, jnp.int32)
    lengths = jnp.array([8, 7, 6, 5, 4, 3, 2, 1], jnp.int32)

    (h_n, c_n), memory_bank = jax.block_until_ready(
        rnn_encoder_forward(params, src, lengths))

    assert h_n.shape == (1, B, 2 * H)
    assert c_n.shape == (1, B, 2 * H)
    assert memory_bank.shape == (T, B, 2 * H)

    # correctness check against a pure-JAX reference (same bf16 MXU casts)
    (h_r, c_r), mb_r = ref_forward(params, src, lengths)
    assert jnp.allclose(memory_bank, mb_r, atol=1e-2, rtol=1e-2)
    assert jnp.allclose(h_n, h_r, atol=1e-2, rtol=1e-2)
    assert jnp.allclose(c_n, c_r, atol=1e-2, rtol=1e-2)

    print("KERNEL_OK")
</pallas_src>

<mosaic_0001>
module attributes {stable_mosaic.version = 11 : i64} {
  func.func @_bilstm_block_kernel(%arg0: i32, %arg1: i32, %arg2: memref<8x1xi32, #tpu.memory_space<vmem>>, %arg3: memref<64x32xbf16, #tpu.memory_space<vmem>>, %arg4: memref<1x32x512xbf16, #tpu.memory_space<vmem>>, %arg5: memref<1x128x512xbf16, #tpu.memory_space<vmem>>, %arg6: memref<1x1x512xf32, #tpu.memory_space<vmem>>, %arg7: memref<64x128xf32, #tpu.memory_space<vmem>>, %arg8: memref<1x8x128xf32, #tpu.memory_space<vmem>>, %arg9: memref<1x8x128xf32, #tpu.memory_space<vmem>>, %arg10: memref<64x512xf32, #tpu.memory_space<vmem>>) attributes {dimension_semantics = [#tpu.dimension_semantics<parallel>, #tpu.dimension_semantics<arbitrary>], iteration_bounds = array<i64: 2, 1>, scalar_prefetch = 0 : i64, scratch_operands = 1 : i64, tpu.core_type = #tpu.core_type<tc>, window_params = [{pipeline_mode = #tpu.pipeline_mode<synchronous>, transform_indices = @transform_0, window_bounds = array<i64: 8, 1>}, {transform_indices = @transform_1, window_bounds = array<i64: 64, 32>}, {transform_indices = @transform_2, window_bounds = array<i64: 1, 32, 512>}, {transform_indices = @transform_3, window_bounds = array<i64: 1, 128, 512>}, {transform_indices = @transform_4, window_bounds = array<i64: 1, 1, 512>}, {transform_indices = @transform_5, window_bounds = array<i64: 64, 128>}, {transform_indices = @transform_6, window_bounds = array<i64: 1, 8, 128>}, {transform_indices = @transform_7, window_bounds = array<i64: 1, 8, 128>}]} {
    %c0_i32 = arith.constant 0 : i32
    %0 = arith.cmpi eq, %arg1, %c0_i32 : i32
    %1 = arith.extui %0 : i1 to i32
    %c0_i32_0 = arith.constant 0 : i32
    %2 = arith.cmpi ne, %1, %c0_i32_0 : i32
    scf.if %2 {
      %cst_139 = arith.constant 0.000000e+00 : f32
      %422 = vector.broadcast %cst_139 : f32 to vector<1x8x128xf32>
      %c0_140 = arith.constant 0 : index
      %c0_141 = arith.constant 0 : index
      %c0_142 = arith.constant 0 : index
      %423 = vector.load %arg8[%c0_140, %c0_141, %c0_142] : memref<1x8x128xf32, #tpu.memory_space<vmem>>, vector<1x8x128xf32>
      tpu.vector_store %arg8[%c0_140, %c0_141, %c0_142], %422 {strides = array<i32>} : memref<1x8x128xf32, #tpu.memory_space<vmem>>, vector<1x8x128xf32>,
      %cst_143 = arith.constant 0.000000e+00 : f32
      %424 = vector.broadcast %cst_143 : f32 to vector<1x8x128xf32>
      %c0_144 = arith.constant 0 : index
      %c0_145 = arith.constant 0 : index
      %c0_146 = arith.constant 0 : index
      %425 = vector.load %arg9[%c0_144, %c0_145, %c0_146] : memref<1x8x128xf32, #tpu.memory_space<vmem>>, vector<1x8x128xf32>
      tpu.vector_store %arg9[%c0_144, %c0_145, %c0_146], %424 {strides = array<i32>} : memref<1x8x128xf32, #tpu.memory_space<vmem>>, vector<1x8x128xf32>,
    } else {
    }
    %c0 = arith.constant 0 : index
    %c0_1 = arith.constant 0 : index
    %3 = vector.load %arg3[%c0, %c0_1] : memref<64x32xbf16, #tpu.memory_space<vmem>>, vector<64x32xbf16>
    %c0_2 = arith.constant 0 : index
    %c0_3 = arith.constant 0 : index
    %c0_4 = arith.constant 0 : index
    %4 = vector.load %arg4[%c0_2, %c0_3, %c0_4] : memref<1x32x512xbf16, #tpu.memory_space<vmem>>, vector<1x32x512xbf16>
    %5 = vector.shape_cast %4 : vector<1x32x512xbf16> to vector<32x512xbf16>
    %cst = arith.constant dense<0.000000e+00> : vector<64x512xf32>
    %6 = tpu.matmul %3, %5, %cst {dimension_numbers = #tpu.dot_dimension_numbers<[1], [0], [0], [1], [0, 0, 1, 1], [], []>} : vector<64x32xbf16>, vector<32x512xbf16>, vector<64x512xf32> -> vector<64x512xf32>
    %c0_5 = arith.constant 0 : index
    %c0_6 = arith.constant 0 : index
    %c0_7 = arith.constant 0 : index
    %7 = vector.load %arg6[%c0_5, %c0_6, %c0_7] : memref<1x1x512xf32, #tpu.memory_space<vmem>>, vector<1x1x512xf32>
    %8 = vector.shape_cast %7 : vector<1x1x512xf32> to vector<1x512xf32>
    %9 = vector.broadcast %8 : vector<1x512xf32> to vector<64x512xf32>
    %10 = arith.addf %6, %9 : vector<64x512xf32>
    %c0_8 = arith.constant 0 : index
    %c0_9 = arith.constant 0 : index
    %11 = vector.load %arg10[%c0_8, %c0_9] : memref<64x512xf32, #tpu.memory_space<vmem>>, vector<64x512xf32>
    tpu.vector_store %arg10[%c0_8, %c0_9], %10 {strides = array<i32>} : memref<64x512xf32, #tpu.memory_space<vmem>>, vector<64x512xf32>,
    %c0_10 = arith.constant 0 : index
    %c0_11 = arith.constant 0 : index
    %12 = vector.load %arg2[%c0_10, %c0_11] : memref<8x1xi32, #tpu.memory_space<vmem>>, vector<8x1xi32>
    %13 = vector.shape_cast %12 : vector<8x1xi32> to vector<8x1xi32>
    %14 = vector.broadcast %13 : vector<8x1xi32> to vector<8x128xi32>
    %c1_i32 = arith.constant 1 : i32
    %15 = arith.subi %c1_i32, %arg0 : i32
    %16 = arith.muli %15, %arg1 : i32
    %c0_i32_12 = arith.constant 0 : i32
    %17 = arith.subi %c0_i32_12, %arg1 : i32
    %18 = arith.muli %arg0, %17 : i32
    %19 = arith.addi %16, %18 : i32
    %c0_13 = arith.constant 0 : index
    %c0_14 = arith.constant 0 : index
    %c0_15 = arith.constant 0 : index
    %20 = vector.load %arg8[%c0_13, %c0_14, %c0_15] : memref<1x8x128xf32, #tpu.memory_space<vmem>>, vector<1x8x128xf32>
    %21 = vector.shape_cast %20 : vector<1x8x128xf32> to vector<8x128xf32>
    %c0_16 = arith.constant 0 : index
    %c0_17 = arith.constant 0 : index
    %c0_18 = arith.constant 0 : index
    %22 = vector.load %arg9[%c0_16, %c0_17, %c0_18] : memref<1x8x128xf32, #tpu.memory_space<vmem>>, vector<1x8x128xf32>
    %23 = vector.shape_cast %22 : vector<1x8x128xf32> to vector<8x128xf32>
    %c0_i32_19 = arith.constant 0 : i32
    %c1_i32_20 = arith.constant 1 : i32
    %24 = arith.subi %c1_i32_20, %arg0 : i32
    %25 = arith.muli %24, %c0_i32_19 : i32
    %c7_i32 = arith.constant 7 : i32
    %26 = arith.subi %c7_i32, %c0_i32_19 : i32
    %27 = arith.muli %arg0, %26 : i32
    %28 = arith.addi %25, %27 : i32
    %c8_i32 = arith.constant 8 : i32
    %29 = arith.muli %19, %c8_i32 : i32
    %30 = arith.addi %29, %28 : i32
    %c8_i32_21 = arith.constant 8 : i32
    %31 = arith.muli %28, %c8_i32_21 : i32
    %32 = tpu.assume_multiple %31, 8 : i32
    %33 = arith.index_cast %32 : i32 to index
    %c0_22 = arith.constant 0 : index
    %34 = vector.load %arg10[%33, %c0_22] : memref<64x512xf32, #tpu.memory_space<vmem>>, vector<8x512xf32>
    %35 = arith.truncf %21 : vector<8x128xf32> to vector<8x128xbf16>
    %c0_23 = arith.constant 0 : index
    %c0_24 = arith.constant 0 : index
    %c0_25 = arith.constant 0 : index
    %36 = vector.load %arg5[%c0_23, %c0_24, %c0_25] : memref<1x128x512xbf16, #tpu.memory_space<vmem>>, vector<1x128x512xbf16>
    %37 = vector.shape_cast %36 : vector<1x128x512xbf16> to vector<128x512xbf16>
    %cst_26 = arith.constant dense<0.000000e+00> : vector<8x512xf32>
    %38 = tpu.matmul %35, %37, %cst_26 {dimension_numbers = #tpu.dot_dimension_numbers<[1], [0], [0], [1], [0, 0, 1, 1], [], []>} : vector<8x128xbf16>, vector<128x512xbf16>, vector<8x512xf32> -> vector<8x512xf32>
    %39 = arith.addf %34, %38 : vector<8x512xf32>
    %40 = vector.extract_strided_slice %39 {offsets = [0, 0], sizes = [8, 128], strides = [1, 1]} : vector<8x512xf32> to vector<8x128xf32>
    %41 = arith.negf %40 : vector<8x128xf32>
    %42 = math.exp %41 : vector<8x128xf32>
    %cst_27 = arith.constant 1.000000e+00 : f32
    %43 = vector.broadcast %cst_27 : f32 to vector<8x128xf32>
    %44 = arith.addf %43, %42 : vector<8x128xf32>
    %45 = arith.divf %43, %44 : vector<8x128xf32>
    %46 = vector.extract_strided_slice %39 {offsets = [0, 128], sizes = [8, 128], strides = [1, 1]} : vector<8x512xf32> to vector<8x128xf32>
    %47 = arith.negf %46 : vector<8x128xf32>
    %48 = math.exp %47 : vector<8x128xf32>
    %cst_28 = arith.constant 1.000000e+00 : f32
    %49 = vector.broadcast %cst_28 : f32 to vector<8x128xf32>
    %50 = arith.addf %49, %48 : vector<8x128xf32>
    %51 = arith.divf %49, %50 : vector<8x128xf32>
    %52 = vector.extract_strided_slice %39 {offsets = [0, 256], sizes = [8, 128], strides = [1, 1]} : vector<8x512xf32> to vector<8x128xf32>
    %53 = math.tanh %52 : vector<8x128xf32>
    %54 = vector.extract_strided_slice %39 {offsets = [0, 384], sizes = [8, 128], strides = [1, 1]} : vector<8x512xf32> to vector<8x128xf32>
    %55 = arith.negf %54 : vector<8x128xf32>
    %56 = math.exp %55 : vector<8x128xf32>
    %cst_29 = arith.constant 1.000000e+00 : f32
    %57 = vector.broadcast %cst_29 : f32 to vector<8x128xf32>
    %58 = arith.addf %57, %56 : vector<8x128xf32>
    %59 = arith.divf %57, %58 : vector<8x128xf32>
    %60 = arith.mulf %51, %23 : vector<8x128xf32>
    %61 = arith.mulf %45, %53 : vector<8x128xf32>
    %62 = arith.addf %60, %61 : vector<8x128xf32>
    %63 = math.tanh %62 : vector<8x128xf32>
    %64 = arith.mulf %59, %63 : vector<8x128xf32>
    %65 = vector.broadcast %30 : i32 to vector<8x128xi32>
    %66 = arith.cmpi slt, %65, %14 : vector<8x128xi32>
    %67 = arith.select %66, %64, %21 : vector<8x128xi1>, vector<8x128xf32>
    %68 = arith.select %66, %62, %23 : vector<8x128xi1>, vector<8x128xf32>
    %cst_30 = arith.constant 0.000000e+00 : f32
    %69 = vector.broadcast %cst_30 : f32 to vector<8x128xf32>
    %70 = arith.select %66, %64, %69 : vector<8x128xi1>, vector<8x128xf32>
    %71 = arith.index_cast %32 : i32 to index
    %c0_31 = arith.constant 0 : index
    %72 = vector.load %arg7[%71, %c0_31] : memref<64x128xf32, #tpu.memory_space<vmem>>, vector<8x128xf32>
    tpu.vector_store %arg7[%71, %c0_31], %70 {strides = array<i32>} : memref<64x128xf32, #tpu.memory_space<vmem>>, vector<8x128xf32>,
    %c1_i32_32 = arith.constant 1 : i32
    %c1_i32_33 = arith.constant 1 : i32
    %73 = arith.subi %c1_i32_33, %arg0 : i32
    %74 = arith.muli %73, %c1_i32_32 : i32
    %c7_i32_34 = arith.constant 7 : i32
    %75 = arith.subi %c7_i32_34, %c1_i32_32 : i32
    %76 = arith.muli %arg0, %75 : i32
    %77 = arith.addi %74, %76 : i32
    %c8_i32_35 = arith.constant 8 : i32
    %78 = arith.muli %19, %c8_i32_35 : i32
    %79 = arith.addi %78, %77 : i32
    %c8_i32_36 = arith.constant 8 : i32
    %80 = arith.muli %77, %c8_i32_36 : i32
    %81 = tpu.assume_multiple %80, 8 : i32
    %82 = arith.index_cast %81 : i32 to index
    %c0_37 = arith.constant 0 : index
    %83 = vector.load %arg10[%82, %c0_37] : memref<64x512xf32, #tpu.memory_space<vmem>>, vector<8x512xf32>
    %84 = arith.truncf %67 : vector<8x128xf32> to vector<8x128xbf16>
    %c0_38 = arith.constant 0 : index
    %c0_39 = arith.constant 0 : index
    %c0_40 = arith.constant 0 : index
    %85 = vector.load %arg5[%c0_38, %c0_39, %c0_40] : memref<1x128x512xbf16, #tpu.memory_space<vmem>>, vector<1x128x512xbf16>
    %86 = vector.shape_cast %85 : vector<1x128x512xbf16> to vector<128x512xbf16>
    %cst_41 = arith.constant dense<0.000000e+00> : vector<8x512xf32>
    %87 = tpu.matmul %84, %86, %cst_41 {dimension_numbers = #tpu.dot_dimension_numbers<[1], [0], [0], [1], [0, 0, 1, 1], [], []>} : vector<8x128xbf16>, vector<128x512xbf16>, vector<8x512xf32> -> vector<8x512xf32>
    %88 = arith.addf %83, %87 : vector<8x512xf32>
    %89 = vector.extract_strided_slice %88 {offsets = [0, 0], sizes = [8, 128], strides = [1, 1]} : vector<8x512xf32> to vector<8x128xf32>
    %90 = arith.negf %89 : vector<8x128xf32>
    %91 = math.exp %90 : vector<8x128xf32>
    %cst_42 = arith.constant 1.000000e+00 : f32
    %92 = vector.broadcast %cst_42 : f32 to vector<8x128xf32>
    %93 = arith.addf %92, %91 : vector<8x128xf32>
    %94 = arith.divf %92, %93 : vector<8x128xf32>
    %95 = vector.extract_strided_slice %88 {offsets = [0, 128], sizes = [8, 128], strides = [1, 1]} : vector<8x512xf32> to vector<8x128xf32>
    %96 = arith.negf %95 : vector<8x128xf32>
    %97 = math.exp %96 : vector<8x128xf32>
    %cst_43 = arith.constant 1.000000e+00 : f32
    %98 = vector.broadcast %cst_43 : f32 to vector<8x128xf32>
    %99 = arith.addf %98, %97 : vector<8x128xf32>
    %100 = arith.divf %98, %99 : vector<8x128xf32>
    %101 = vector.extract_strided_slice %88 {offsets = [0, 256], sizes = [8, 128], strides = [1, 1]} : vector<8x512xf32> to vector<8x128xf32>
    %102 = math.tanh %101 : vector<8x128xf32>
    %103 = vector.extract_strided_slice %88 {offsets = [0, 384], sizes = [8, 128], strides = [1, 1]} : vector<8x512xf32> to vector<8x128xf32>
    %104 = arith.negf %103 : vector<8x128xf32>
    %105 = math.exp %104 : vector<8x128xf32>
    %cst_44 = arith.constant 1.000000e+00 : f32
    %106 = vector.broadcast %cst_44 : f32 to vector<8x128xf32>
    %107 = arith.addf %106, %105 : vector<8x128xf32>
    %108 = arith.divf %106, %107 : vector<8x128xf32>
    %109 = arith.mulf %100, %68 : vector<8x128xf32>
    %110 = arith.mulf %94, %102 : vector<8x128xf32>
    %111 = arith.addf %109, %110 : vector<8x128xf32>
    %112 = math.tanh %111 : vector<8x128xf32>
    %113 = arith.mulf %108, %112 : vector<8x128xf32>
    %114 = vector.broadcast %79 : i32 to vector<8x128xi32>
    %115 = arith.cmpi slt, %114, %14 : vector<8x128xi32>
    %116 = arith.select %115, %113, %67 : vector<8x128xi1>, vector<8x128xf32>
    %117 = arith.select %115, %111, %68 : vector<8x128xi1>, vector<8x128xf32>
    %cst_45 = arith.constant 0.000000e+00 : f32
    %118 = vector.broadcast %cst_45 : f32 to vector<8x128xf32>
    %119 = arith.select %115, %113, %118 : vector<8x128xi1>, vector<8x128xf32>
    %120 = arith.index_cast %81 : i32 to index
    %c0_46 = arith.constant 0 : index
    %121 = vector.load %arg7[%120, %c0_46] : memref<64x128xf32, #tpu.memory_space<vmem>>, vector<8x128xf32>
    tpu.vector_store %arg7[%120, %c0_46], %119 {strides = array<i32>} : memref<64x128xf32, #tpu.memory_space<vmem>>, vector<8x128xf32>,
    %c2_i32 = arith.constant 2 : i32
    %c1_i32_47 = arith.constant 1 : i32
    %122 = arith.subi %c1_i32_47, %arg0 : i32
    %123 = arith.muli %122, %c2_i32 : i32
    %c7_i32_48 = arith.constant 7 : i32
    %124 = arith.subi %c7_i32_48, %c2_i32 : i32
    %125 = arith.muli %arg0, %124 : i32
    %126 = arith.addi %123, %125 : i32
    %c8_i32_49 = arith.constant 8 : i32
    %127 = arith.muli %19, %c8_i32_49 : i32
    %128 = arith.addi %127, %126 : i32
    %c8_i32_50 = arith.constant 8 : i32
    %129 = arith.muli %126, %c8_i32_50 : i32
    %130 = tpu.assume_multiple %129, 8 : i32
    %131 = arith.index_cast %130 : i32 to index
    %c0_51 = arith.constant 0 : index
    %132 = vector.load %arg10[%131, %c0_51] : memref<64x512xf32, #tpu.memory_space<vmem>>, vector<8x512xf32>
    %133 = arith.truncf %116 : vector<8x128xf32> to vector<8x128xbf16>
    %c0_52 = arith.constant 0 : index
    %c0_53 = arith.constant 0 : index
    %c0_54 = arith.constant 0 : index
    %134 = vector.load %arg5[%c0_52, %c0_53, %c0_54] : memref<1x128x512xbf16, #tpu.memory_space<vmem>>, vector<1x128x512xbf16>
    %135 = vector.shape_cast %134 : vector<1x128x512xbf16> to vector<128x512xbf16>
    %cst_55 = arith.constant dense<0.000000e+00> : vector<8x512xf32>
    %136 = tpu.matmul %133, %135, %cst_55 {dimension_numbers = #tpu.dot_dimension_numbers<[1], [0], [0], [1], [0, 0, 1, 1], [], []>} : vector<8x128xbf16>, vector<128x512xbf16>, vector<8x512xf32> -> vector<8x512xf32>
    %137 = arith.addf %132, %136 : vector<8x512xf32>
    %138 = vector.extract_strided_slice %137 {offsets = [0, 0], sizes = [8, 128], strides = [1, 1]} : vector<8x512xf32> to vector<8x128xf32>
    %139 = arith.negf %138 : vector<8x128xf32>
    %140 = math.exp %139 : vector<8x128xf32>
    %cst_56 = arith.constant 1.000000e+00 : f32
    %141 = vector.broadcast %cst_56 : f32 to vector<8x128xf32>
    %142 = arith.addf %141, %140 : vector<8x128xf32>
    %143 = arith.divf %141, %142 : vector<8x128xf32>
    %144 = vector.extract_strided_slice %137 {offsets = [0, 128], sizes = [8, 128], strides = [1, 1]} : vector<8x512xf32> to vector<8x128xf32>
    %145 = arith.negf %144 : vector<8x128xf32>
    %146 = math.exp %145 : vector<8x128xf32>
    %cst_57 = arith.constant 1.000000e+00 : f32
    %147 = vector.broadcast %cst_57 : f32 to vector<8x128xf32>
    %148 = arith.addf %147, %146 : vector<8x128xf32>
    %149 = arith.divf %147, %148 : vector<8x128xf32>
    %150 = vector.extract_strided_slice %137 {offsets = [0, 256], sizes = [8, 128], strides = [1, 1]} : vector<8x512xf32> to vector<8x128xf32>
    %151 = math.tanh %150 : vector<8x128xf32>
    %152 = vector.extract_strided_slice %137 {offsets = [0, 384], sizes = [8, 128], strides = [1, 1]} : vector<8x512xf32> to vector<8x128xf32>
    %153 = arith.negf %152 : vector<8x128xf32>
    %154 = math.exp %153 : vector<8x128xf32>
    %cst_58 = arith.constant 1.000000e+00 : f32
    %155 = vector.broadcast %cst_58 : f32 to vector<8x128xf32>
    %156 = arith.addf %155, %154 : vector<8x128xf32>
    %157 = arith.divf %155, %156 : vector<8x128xf32>
    %158 = arith.mulf %149, %117 : vector<8x128xf32>
    %159 = arith.mulf %143, %151 : vector<8x128xf32>
    %160 = arith.addf %158, %159 : vector<8x128xf32>
    %161 = math.tanh %160 : vector<8x128xf32>
    %162 = arith.mulf %157, %161 : vector<8x128xf32>
    %163 = vector.broadcast %128 : i32 to vector<8x128xi32>
    %164 = arith.cmpi slt, %163, %14 : vector<8x128xi32>
    %165 = arith.select %164, %162, %116 : vector<8x128xi1>, vector<8x128xf32>
    %166 = arith.select %164, %160, %117 : vector<8x128xi1>, vector<8x128xf32>
    %cst_59 = arith.constant 0.000000e+00 : f32
    %167 = vector.broadcast %cst_59 : f32 to vector<8x128xf32>
    %168 = arith.select %164, %162, %167 : vector<8x128xi1>, vector<8x128xf32>
    %169 = arith.index_cast %130 : i32 to index
    %c0_60 = arith.constant 0 : index
    %170 = vector.load %arg7[%169, %c0_60] : memref<64x128xf32, #tpu.memory_space<vmem>>, vector<8x128xf32>
    tpu.vector_store %arg7[%169, %c0_60], %168 {strides = array<i32>} : memref<64x128xf32, #tpu.memory_space<vmem>>, vector<8x128xf32>,
    %c3_i32 = arith.constant 3 : i32
    %c1_i32_61 = arith.constant 1 : i32
    %171 = arith.subi %c1_i32_61, %arg0 : i32
    %172 = arith.muli %171, %c3_i32 : i32
    %c7_i32_62 = arith.constant 7 : i32
    %173 = arith.subi %c7_i32_62, %c3_i32 : i32
    %174 = arith.muli %arg0, %173 : i32
    %175 = arith.addi %172, %174 : i32
    %c8_i32_63 = arith.constant 8 : i32
    %176 = arith.muli %19, %c8_i32_63 : i32
    %177 = arith.addi %176, %175 : i32
    %c8_i32_64 = arith.constant 8 : i32
    %178 = arith.muli %175, %c8_i32_64 : i32
    %179 = tpu.assume_multiple %178, 8 : i32
    %180 = arith.index_cast %179 : i32 to index
    %c0_65 = arith.constant 0 : index
    %181 = vector.load %arg10[%180, %c0_65] : memref<64x512xf32, #tpu.memory_space<vmem>>, vector<8x512xf32>
    %182 = arith.truncf %165 : vector<8x128xf32> to vector<8x128xbf16>
    %c0_66 = arith.constant 0 : index
    %c0_67 = arith.constant 0 : index
    %c0_68 = arith.constant 0 : index
    %183 = vector.load %arg5[%c0_66, %c0_67, %c0_68] : memref<1x128x512xbf16, #tpu.memory_space<vmem>>, vector<1x128x512xbf16>
    %184 = vector.shape_cast %183 : vector<1x128x512xbf16> to vector<128x512xbf16>
    %cst_69 = arith.constant dense<0.000000e+00> : vector<8x512xf32>
    %185 = tpu.matmul %182, %184, %cst_69 {dimension_numbers = #tpu.dot_dimension_numbers<[1], [0], [0], [1], [0, 0, 1, 1], [], []>} : vector<8x128xbf16>, vector<128x512xbf16>, vector<8x512xf32> -> vector<8x512xf32>
    %186 = arith.addf %181, %185 : vector<8x512xf32>
    %187 = vector.extract_strided_slice %186 {offsets = [0, 0], sizes = [8, 128], strides = [1, 1]} : vector<8x512xf32> to vector<8x128xf32>
    %188 = arith.negf %187 : vector<8x128xf32>
    %189 = math.exp %188 : vector<8x128xf32>
    %cst_70 = arith.constant 1.000000e+00 : f32
    %190 = vector.broadcast %cst_70 : f32 to vector<8x128xf32>
    %191 = arith.addf %190, %189 : vector<8x128xf32>
    %192 = arith.divf %190, %191 : vector<8x128xf32>
    %193 = vector.extract_strided_slice %186 {offsets = [0, 128], sizes = [8, 128], strides = [1, 1]} : vector<8x512xf32> to vector<8x128xf32>
    %194 = arith.negf %193 : vector<8x128xf32>
    %195 = math.exp %194 : vector<8x128xf32>
    %cst_71 = arith.constant 1.000000e+00 : f32
    %196 = vector.broadcast %cst_71 : f32 to vector<8x128xf32>
    %197 = arith.addf %196, %195 : vector<8x128xf32>
    %198 = arith.divf %196, %197 : vector<8x128xf32>
    %199 = vector.extract_strided_slice %186 {offsets = [0, 256], sizes = [8, 128], strides = [1, 1]} : vector<8x512xf32> to vector<8x128xf32>
    %200 = math.tanh %199 : vector<8x128xf32>
    %201 = vector.extract_strided_slice %186 {offsets = [0, 384], sizes = [8, 128], strides = [1, 1]} : vector<8x512xf32> to vector<8x128xf32>
    %202 = arith.negf %201 : vector<8x128xf32>
    %203 = math.exp %202 : vector<8x128xf32>
    %cst_72 = arith.constant 1.000000e+00 : f32
    %204 = vector.broadcast %cst_72 : f32 to vector<8x128xf32>
    %205 = arith.addf %204, %203 : vector<8x128xf32>
    %206 = arith.divf %204, %205 : vector<8x128xf32>
    %207 = arith.mulf %198, %166 : vector<8x128xf32>
    %208 = arith.mulf %192, %200 : vector<8x128xf32>
    %209 = arith.addf %207, %208 : vector<8x128xf32>
    %210 = math.tanh %209 : vector<8x128xf32>
    %211 = arith.mulf %206, %210 : vector<8x128xf32>
    %212 = vector.broadcast %177 : i32 to vector<8x128xi32>
    %213 = arith.cmpi slt, %212, %14 : vector<8x128xi32>
    %214 = arith.select %213, %211, %165 : vector<8x128xi1>, vector<8x128xf32>
    %215 = arith.select %213, %209, %166 : vector<8x128xi1>, vector<8x128xf32>
    %cst_73 = arith.constant 0.000000e+00 : f32
    %216 = vector.broadcast %cst_73 : f32 to vector<8x128xf32>
    %217 = arith.select %213, %211, %216 : vector<8x128xi1>, vector<8x128xf32>
    %218 = arith.index_cast %179 : i32 to index
    %c0_74 = arith.constant 0 : index
    %219 = vector.load %arg7[%218, %c0_74] : memref<64x128xf32, #tpu.memory_space<vmem>>, vector<8x128xf32>
    tpu.vector_store %arg7[%218, %c0_74], %217 {strides = array<i32>} : memref<64x128xf32, #tpu.memory_space<vmem>>, vector<8x128xf32>,
    %c4_i32 = arith.constant 4 : i32
    %c1_i32_75 = arith.constant 1 : i32
    %220 = arith.subi %c1_i32_75, %arg0 : i32
    %221 = arith.muli %220, %c4_i32 : i32
    %c7_i32_76 = arith.constant 7 : i32
    %222 = arith.subi %c7_i32_76, %c4_i32 : i32
    %223 = arith.muli %arg0, %222 : i32
    %224 = arith.addi %221, %223 : i32
    %c8_i32_77 = arith.constant 8 : i32
    %225 = arith.muli %19, %c8_i32_77 : i32
    %226 = arith.addi %225, %224 : i32
    %c8_i32_78 = arith.constant 8 : i32
    %227 = arith.muli %224, %c8_i32_78 : i32
    %228 = tpu.assume_multiple %227, 8 : i32
    %229 = arith.index_cast %228 : i32 to index
    %c0_79 = arith.constant 0 : index
    %230 = vector.load %arg10[%229, %c0_79] : memref<64x512xf32, #tpu.memory_space<vmem>>, vector<8x512xf32>
    %231 = arith.truncf %214 : vector<8x128xf32> to vector<8x128xbf16>
    %c0_80 = arith.constant 0 : index
    %c0_81 = arith.constant 0 : index
    %c0_82 = arith.constant 0 : index
    %232 = vector.load %arg5[%c0_80, %c0_81, %c0_82] : memref<1x128x512xbf16, #tpu.memory_space<vmem>>, vector<1x128x512xbf16>
    %233 = vector.shape_cast %232 : vector<1x128x512xbf16> to vector<128x512xbf16>
    %cst_83 = arith.constant dense<0.000000e+00> : vector<8x512xf32>
    %234 = tpu.matmul %231, %233, %cst_83 {dimension_numbers = #tpu.dot_dimension_numbers<[1], [0], [0], [1], [0, 0, 1, 1], [], []>} : vector<8x128xbf16>, vector<128x512xbf16>, vector<8x512xf32> -> vector<8x512xf32>
    %235 = arith.addf %230, %234 : vector<8x512xf32>
    %236 = vector.extract_strided_slice %235 {offsets = [0, 0], sizes = [8, 128], strides = [1, 1]} : vector<8x512xf32> to vector<8x128xf32>
    %237 = arith.negf %236 : vector<8x128xf32>
    %238 = math.exp %237 : vector<8x128xf32>
    %cst_84 = arith.constant 1.000000e+00 : f32
    %239 = vector.broadcast %cst_84 : f32 to vector<8x128xf32>
    %240 = arith.addf %239, %238 : vector<8x128xf32>
    %241 = arith.divf %239, %240 : vector<8x128xf32>
    %242 = vector.extract_strided_slice %235 {offsets = [0, 128], sizes = [8, 128], strides = [1, 1]} : vector<8x512xf32> to vector<8x128xf32>
    %243 = arith.negf %242 : vector<8x128xf32>
    %244 = math.exp %243 : vector<8x128xf32>
    %cst_85 = arith.constant 1.000000e+00 : f32
    %245 = vector.broadcast %cst_85 : f32 to vector<8x128xf32>
    %246 = arith.addf %245, %244 : vector<8x128xf32>
    %247 = arith.divf %245, %246 : vector<8x128xf32>
    %248 = vector.extract_strided_slice %235 {offsets = [0, 256], sizes = [8, 128], strides = [1, 1]} : vector<8x512xf32> to vector<8x128xf32>
    %249 = math.tanh %248 : vector<8x128xf32>
    %250 = vector.extract_strided_slice %235 {offsets = [0, 384], sizes = [8, 128], strides = [1, 1]} : vector<8x512xf32> to vector<8x128xf32>
    %251 = arith.negf %250 : vector<8x128xf32>
    %252 = math.exp %251 : vector<8x128xf32>
    %cst_86 = arith.constant 1.000000e+00 : f32
    %253 = vector.broadcast %cst_86 : f32 to vector<8x128xf32>
    %254 = arith.addf %253, %252 : vector<8x128xf32>
    %255 = arith.divf %253, %254 : vector<8x128xf32>
    %256 = arith.mulf %247, %215 : vector<8x128xf32>
    %257 = arith.mulf %241, %249 : vector<8x128xf32>
    %258 = arith.addf %256, %257 : vector<8x128xf32>
    %259 = math.tanh %258 : vector<8x128xf32>
    %260 = arith.mulf %255, %259 : vector<8x128xf32>
    %261 = vector.broadcast %226 : i32 to vector<8x128xi32>
    %262 = arith.cmpi slt, %261, %14 : vector<8x128xi32>
    %263 = arith.select %262, %260, %214 : vector<8x128xi1>, vector<8x128xf32>
    %264 = arith.select %262, %258, %215 : vector<8x128xi1>, vector<8x128xf32>
    %cst_87 = arith.constant 0.000000e+00 : f32
    %265 = vector.broadcast %cst_87 : f32 to vector<8x128xf32>
    %266 = arith.select %262, %260, %265 : vector<8x128xi1>, vector<8x128xf32>
    %267 = arith.index_cast %228 : i32 to index
    %c0_88 = arith.constant 0 : index
    %268 = vector.load %arg7[%267, %c0_88] : memref<64x128xf32, #tpu.memory_space<vmem>>, vector<8x128xf32>
    tpu.vector_store %arg7[%267, %c0_88], %266 {strides = array<i32>} : memref<64x128xf32, #tpu.memory_space<vmem>>, vector<8x128xf32>,
    %c5_i32 = arith.constant 5 : i32
    %c1_i32_89 = arith.constant 1 : i32
    %269 = arith.subi %c1_i32_89, %arg0 : i32
    %270 = arith.muli %269, %c5_i32 : i32
    %c7_i32_90 = arith.constant 7 : i32
    %271 = arith.subi %c7_i32_90, %c5_i32 : i32
    %272 = arith.muli %arg0, %271 : i32
    %273 = arith.addi %270, %272 : i32
    %c8_i32_91 = arith.constant 8 : i32
    %274 = arith.muli %19, %c8_i32_91 : i32
    %275 = arith.addi %274, %273 : i32
    %c8_i32_92 = arith.constant 8 : i32
    %276 = arith.muli %273, %c8_i32_92 : i32
    %277 = tpu.assume_multiple %276, 8 : i32
    %278 = arith.index_cast %277 : i32 to index
    %c0_93 = arith.constant 0 : index
    %279 = vector.load %arg10[%278, %c0_93] : memref<64x512xf32, #tpu.memory_space<vmem>>, vector<8x512xf32>
    %280 = arith.truncf %263 : vector<8x128xf32> to vector<8x128xbf16>
    %c0_94 = arith.constant 0 : index
    %c0_95 = arith.constant 0 : index
    %c0_96 = arith.constant 0 : index
    %281 = vector.load %arg5[%c0_94, %c0_95, %c0_96] : memref<1x128x512xbf16, #tpu.memory_space<vmem>>, vector<1x128x512xbf16>
    %282 = vector.shape_cast %281 : vector<1x128x512xbf16> to vector<128x512xbf16>
    %cst_97 = arith.constant dense<0.000000e+00> : vector<8x512xf32>
    %283 = tpu.matmul %280, %282, %cst_97 {dimension_numbers = #tpu.dot_dimension_numbers<[1], [0], [0], [1], [0, 0, 1, 1], [], []>} : vector<8x128xbf16>, vector<128x512xbf16>, vector<8x512xf32> -> vector<8x512xf32>
    %284 = arith.addf %279, %283 : vector<8x512xf32>
    %285 = vector.extract_strided_slice %284 {offsets = [0, 0], sizes = [8, 128], strides = [1, 1]} : vector<8x512xf32> to vector<8x128xf32>
    %286 = arith.negf %285 : vector<8x128xf32>
    %287 = math.exp %286 : vector<8x128xf32>
    %cst_98 = arith.constant 1.000000e+00 : f32
    %288 = vector.broadcast %cst_98 : f32 to vector<8x128xf32>
    %289 = arith.addf %288, %287 : vector<8x128xf32>
    %290 = arith.divf %288, %289 : vector<8x128xf32>
    %291 = vector.extract_strided_slice %284 {offsets = [0, 128], sizes = [8, 128], strides = [1, 1]} : vector<8x512xf32> to vector<8x128xf32>
    %292 = arith.negf %291 : vector<8x128xf32>
    %293 = math.exp %292 : vector<8x128xf32>
    %cst_99 = arith.constant 1.000000e+00 : f32
    %294 = vector.broadcast %cst_99 : f32 to vector<8x128xf32>
    %295 = arith.addf %294, %293 : vector<8x128xf32>
    %296 = arith.divf %294, %295 : vector<8x128xf32>
    %297 = vector.extract_strided_slice %284 {offsets = [0, 256], sizes = [8, 128], strides = [1, 1]} : vector<8x512xf32> to vector<8x128xf32>
    %298 = math.tanh %297 : vector<8x128xf32>
    %299 = vector.extract_strided_slice %284 {offsets = [0, 384], sizes = [8, 128], strides = [1, 1]} : vector<8x512xf32> to vector<8x128xf32>
    %300 = arith.negf %299 : vector<8x128xf32>
    %301 = math.exp %300 : vector<8x128xf32>
    %cst_100 = arith.constant 1.000000e+00 : f32
    %302 = vector.broadcast %cst_100 : f32 to vector<8x128xf32>
    %303 = arith.addf %302, %301 : vector<8x128xf32>
    %304 = arith.divf %302, %303 : vector<8x128xf32>
    %305 = arith.mulf %296, %264 : vector<8x128xf32>
    %306 = arith.mulf %290, %298 : vector<8x128xf32>
    %307 = arith.addf %305, %306 : vector<8x128xf32>
    %308 = math.tanh %307 : vector<8x128xf32>
    %309 = arith.mulf %304, %308 : vector<8x128xf32>
    %310 = vector.broadcast %275 : i32 to vector<8x128xi32>
    %311 = arith.cmpi slt, %310, %14 : vector<8x128xi32>
    %312 = arith.select %311, %309, %263 : vector<8x128xi1>, vector<8x128xf32>
    %313 = arith.select %311, %307, %264 : vector<8x128xi1>, vector<8x128xf32>
    %cst_101 = arith.constant 0.000000e+00 : f32
    %314 = vector.broadcast %cst_101 : f32 to vector<8x128xf32>
    %315 = arith.select %311, %309, %314 : vector<8x128xi1>, vector<8x128xf32>
    %316 = arith.index_cast %277 : i32 to index
    %c0_102 = arith.constant 0 : index
    %317 = vector.load %arg7[%316, %c0_102] : memref<64x128xf32, #tpu.memory_space<vmem>>, vector<8x128xf32>
    tpu.vector_store %arg7[%316, %c0_102], %315 {strides = array<i32>} : memref<64x128xf32, #tpu.memory_space<vmem>>, vector<8x128xf32>,
    %c6_i32 = arith.constant 6 : i32
    %c1_i32_103 = arith.constant 1 : i32
    %318 = arith.subi %c1_i32_103, %arg0 : i32
    %319 = arith.muli %318, %c6_i32 : i32
    %c7_i32_104 = arith.constant 7 : i32
    %320 = arith.subi %c7_i32_104, %c6_i32 : i32
    %321 = arith.muli %arg0, %320 : i32
    %322 = arith.addi %319, %321 : i32
    %c8_i32_105 = arith.constant 8 : i32
    %323 = arith.muli %19, %c8_i32_105 : i32
    %324 = arith.addi %323, %322 : i32
    %c8_i32_106 = arith.constant 8 : i32
    %325 = arith.muli %322, %c8_i32_106 : i32
    %326 = tpu.assume_multiple %325, 8 : i32
    %327 = arith.index_cast %326 : i32 to index
    %c0_107 = arith.constant 0 : index
    %328 = vector.load %arg10[%327, %c0_107] : memref<64x512xf32, #tpu.memory_space<vmem>>, vector<8x512xf32>
    %329 = arith.truncf %312 : vector<8x128xf32> to vector<8x128xbf16>
    %c0_108 = arith.constant 0 : index
    %c0_109 = arith.constant 0 : index
    %c0_110 = arith.constant 0 : index
    %330 = vector.load %arg5[%c0_108, %c0_109, %c0_110] : memref<1x128x512xbf16, #tpu.memory_space<vmem>>, vector<1x128x512xbf16>
    %331 = vector.shape_cast %330 : vector<1x128x512xbf16> to vector<128x512xbf16>
    %cst_111 = arith.constant dense<0.000000e+00> : vector<8x512xf32>
    %332 = tpu.matmul %329, %331, %cst_111 {dimension_numbers = #tpu.dot_dimension_numbers<[1], [0], [0], [1], [0, 0, 1, 1], [], []>} : vector<8x128xbf16>, vector<128x512xbf16>, vector<8x512xf32> -> vector<8x512xf32>
    %333 = arith.addf %328, %332 : vector<8x512xf32>
    %334 = vector.extract_strided_slice %333 {offsets = [0, 0], sizes = [8, 128], strides = [1, 1]} : vector<8x512xf32> to vector<8x128xf32>
    %335 = arith.negf %334 : vector<8x128xf32>
    %336 = math.exp %335 : vector<8x128xf32>
    %cst_112 = arith.constant 1.000000e+00 : f32
    %337 = vector.broadcast %cst_112 : f32 to vector<8x128xf32>
    %338 = arith.addf %337, %336 : vector<8x128xf32>
    %339 = arith.divf %337, %338 : vector<8x128xf32>
    %340 = vector.extract_strided_slice %333 {offsets = [0, 128], sizes = [8, 128], strides = [1, 1]} : vector<8x512xf32> to vector<8x128xf32>
    %341 = arith.negf %340 : vector<8x128xf32>
    %342 = math.exp %341 : vector<8x128xf32>
    %cst_113 = arith.constant 1.000000e+00 : f32
    %343 = vector.broadcast %cst_113 : f32 to vector<8x128xf32>
    %344 = arith.addf %343, %342 : vector<8x128xf32>
    %345 = arith.divf %343, %344 : vector<8x128xf32>
    %346 = vector.extract_strided_slice %333 {offsets = [0, 256], sizes = [8, 128], strides = [1, 1]} : vector<8x512xf32> to vector<8x128xf32>
    %347 = math.tanh %346 : vector<8x128xf32>
    %348 = vector.extract_strided_slice %333 {offsets = [0, 384], sizes = [8, 128], strides = [1, 1]} : vector<8x512xf32> to vector<8x128xf32>
    %349 = arith.negf %348 : vector<8x128xf32>
    %350 = math.exp %349 : vector<8x128xf32>
    %cst_114 = arith.constant 1.000000e+00 : f32
    %351 = vector.broadcast %cst_114 : f32 to vector<8x128xf32>
    %352 = arith.addf %351, %350 : vector<8x128xf32>
    %353 = arith.divf %351, %352 : vector<8x128xf32>
    %354 = arith.mulf %345, %313 : vector<8x128xf32>
    %355 = arith.mulf %339, %347 : vector<8x128xf32>
    %356 = arith.addf %354, %355 : vector<8x128xf32>
    %357 = math.tanh %356 : vector<8x128xf32>
    %358 = arith.mulf %353, %357 : vector<8x128xf32>
    %359 = vector.broadcast %324 : i32 to vector<8x128xi32>
    %360 = arith.cmpi slt, %359, %14 : vector<8x128xi32>
    %361 = arith.select %360, %358, %312 : vector<8x128xi1>, vector<8x128xf32>
    %362 = arith.select %360, %356, %313 : vector<8x128xi1>, vector<8x128xf32>
    %cst_115 = arith.constant 0.000000e+00 : f32
    %363 = vector.broadcast %cst_115 : f32 to vector<8x128xf32>
    %364 = arith.select %360, %358, %363 : vector<8x128xi1>, vector<8x128xf32>
    %365 = arith.index_cast %326 : i32 to index
    %c0_116 = arith.constant 0 : index
    %366 = vector.load %arg7[%365, %c0_116] : memref<64x128xf32, #tpu.memory_space<vmem>>, vector<8x128xf32>
    tpu.vector_store %arg7[%365, %c0_116], %364 {strides = array<i32>} : memref<64x128xf32, #tpu.memory_space<vmem>>, vector<8x128xf32>,
    %c7_i32_117 = arith.constant 7 : i32
    %c1_i32_118 = arith.constant 1 : i32
    %367 = arith.subi %c1_i32_118, %arg0 : i32
    %368 = arith.muli %367, %c7_i32_117 : i32
    %c7_i32_119 = arith.constant 7 : i32
    %369 = arith.subi %c7_i32_119, %c7_i32_117 : i32
    %370 = arith.muli %arg0, %369 : i32
    %371 = arith.addi %368, %370 : i32
    %c8_i32_120 = arith.constant 8 : i32
    %372 = arith.muli %19, %c8_i32_120 : i32
    %373 = arith.addi %372, %371 : i32
    %c8_i32_121 = arith.constant 8 : i32
    %374 = arith.muli %371, %c8_i32_121 : i32
    %375 = tpu.assume_multiple %374, 8 : i32
    %376 = arith.index_cast %375 : i32 to index
    %c0_122 = arith.constant 0 : index
    %377 = vector.load %arg10[%376, %c0_122] : memref<64x512xf32, #tpu.memory_space<vmem>>, vector<8x512xf32>
    %378 = arith.truncf %361 : vector<8x128xf32> to vector<8x128xbf16>
    %c0_123 = arith.constant 0 : index
    %c0_124 = arith.constant 0 : index
    %c0_125 = arith.constant 0 : index
    %379 = vector.load %arg5[%c0_123, %c0_124, %c0_125] : memref<1x128x512xbf16, #tpu.memory_space<vmem>>, vector<1x128x512xbf16>
    %380 = vector.shape_cast %379 : vector<1x128x512xbf16> to vector<128x512xbf16>
    %cst_126 = arith.constant dense<0.000000e+00> : vector<8x512xf32>
    %381 = tpu.matmul %378, %380, %cst_126 {dimension_numbers = #tpu.dot_dimension_numbers<[1], [0], [0], [1], [0, 0, 1, 1], [], []>} : vector<8x128xbf16>, vector<128x512xbf16>, vector<8x512xf32> -> vector<8x512xf32>
    %382 = arith.addf %377, %381 : vector<8x512xf32>
    %383 = vector.extract_strided_slice %382 {offsets = [0, 0], sizes = [8, 128], strides = [1, 1]} : vector<8x512xf32> to vector<8x128xf32>
    %384 = arith.negf %383 : vector<8x128xf32>
    %385 = math.exp %384 : vector<8x128xf32>
    %cst_127 = arith.constant 1.000000e+00 : f32
    %386 = vector.broadcast %cst_127 : f32 to vector<8x128xf32>
    %387 = arith.addf %386, %385 : vector<8x128xf32>
    %388 = arith.divf %386, %387 : vector<8x128xf32>
    %389 = vector.extract_strided_slice %382 {offsets = [0, 128], sizes = [8, 128], strides = [1, 1]} : vector<8x512xf32> to vector<8x128xf32>
    %390 = arith.negf %389 : vector<8x128xf32>
    %391 = math.exp %390 : vector<8x128xf32>
    %cst_128 = arith.constant 1.000000e+00 : f32
    %392 = vector.broadcast %cst_128 : f32 to vector<8x128xf32>
    %393 = arith.addf %392, %391 : vector<8x128xf32>
    %394 = arith.divf %392, %393 : vector<8x128xf32>
    %395 = vector.extract_strided_slice %382 {offsets = [0, 256], sizes = [8, 128], strides = [1, 1]} : vector<8x512xf32> to vector<8x128xf32>
    %396 = math.tanh %395 : vector<8x128xf32>
    %397 = vector.extract_strided_slice %382 {offsets = [0, 384], sizes = [8, 128], strides = [1, 1]} : vector<8x512xf32> to vector<8x128xf32>
    %398 = arith.negf %397 : vector<8x128xf32>
    %399 = math.exp %398 : vector<8x128xf32>
    %cst_129 = arith.constant 1.000000e+00 : f32
    %400 = vector.broadcast %cst_129 : f32 to vector<8x128xf32>
    %401 = arith.addf %400, %399 : vector<8x128xf32>
    %402 = arith.divf %400, %401 : vector<8x128xf32>
    %403 = arith.mulf %394, %362 : vector<8x128xf32>
    %404 = arith.mulf %388, %396 : vector<8x128xf32>
    %405 = arith.addf %403, %404 : vector<8x128xf32>
    %406 = math.tanh %405 : vector<8x128xf32>
    %407 = arith.mulf %402, %406 : vector<8x128xf32>
    %408 = vector.broadcast %373 : i32 to vector<8x128xi32>
    %409 = arith.cmpi slt, %408, %14 : vector<8x128xi32>
    %410 = arith.select %409, %407, %361 : vector<8x128xi1>, vector<8x128xf32>
    %411 = arith.select %409, %405, %362 : vector<8x128xi1>, vector<8x128xf32>
    %cst_130 = arith.constant 0.000000e+00 : f32
    %412 = vector.broadcast %cst_130 : f32 to vector<8x128xf32>
    %413 = arith.select %409, %407, %412 : vector<8x128xi1>, vector<8x128xf32>
    %414 = arith.index_cast %375 : i32 to index
    %c0_131 = arith.constant 0 : index
    %415 = vector.load %arg7[%414, %c0_131] : memref<64x128xf32, #tpu.memory_space<vmem>>, vector<8x128xf32>
    tpu.vector_store %arg7[%414, %c0_131], %413 {strides = array<i32>} : memref<64x128xf32, #tpu.memory_space<vmem>>, vector<8x128xf32>,
    %c8_i32_132 = arith.constant 8 : i32
    %c0_133 = arith.constant 0 : index
    %c0_134 = arith.constant 0 : index
    %c0_135 = arith.constant 0 : index
    %416 = vector.load %arg8[%c0_133, %c0_134, %c0_135] : memref<1x8x128xf32, #tpu.memory_space<vmem>>, vector<1x8x128xf32>
    %417 = vector.shape_cast %416 : vector<1x8x128xf32> to vector<8x128xf32>
    %418 = vector.shape_cast %410 : vector<8x128xf32> to vector<1x8x128xf32>
    tpu.vector_store %arg8[%c0_133, %c0_134, %c0_135], %418 {strides = array<i32>} : memref<1x8x128xf32, #tpu.memory_space<vmem>>, vector<1x8x128xf32>,
    %c0_136 = arith.constant 0 : index
    %c0_137 = arith.constant 0 : index
    %c0_138 = arith.constant 0 : index
    %419 = vector.load %arg9[%c0_136, %c0_137, %c0_138] : memref<1x8x128xf32, #tpu.memory_space<vmem>>, vector<1x8x128xf32>
    %420 = vector.shape_cast %419 : vector<1x8x128xf32> to vector<8x128xf32>
    %421 = vector.shape_cast %411 : vector<8x128xf32> to vector<1x8x128xf32>
    tpu.vector_store %arg9[%c0_136, %c0_137, %c0_138], %421 {strides = array<i32>} : memref<1x8x128xf32, #tpu.memory_space<vmem>>, vector<1x8x128xf32>,
    return
  }
  func.func @transform_0(%arg0: i32, %arg1: i32) -> (i32, i32) {
    %c0_i32 = arith.constant 0 : i32
    %c0_i32_0 = arith.constant 0 : i32
    %c0_i32_1 = arith.constant 0 : i32
    return %c0_i32, %c0_i32_0 : i32, i32
  }
  func.func @transform_1(%arg0: i32, %arg1: i32) -> (i32, i32) {
    %c1_i32 = arith.constant 1 : i32
    %0 = arith.subi %c1_i32, %arg0 : i32
    %1 = arith.muli %0, %arg1 : i32
    %c0_i32 = arith.constant 0 : i32
    %2 = arith.subi %c0_i32, %arg1 : i32
    %3 = arith.muli %arg0, %2 : i32
    %4 = arith.addi %1, %3 : i32
    %c0_i32_0 = arith.constant 0 : i32
    %c0_i32_1 = arith.constant 0 : i32
    return %4, %c0_i32_0 : i32, i32
  }
  func.func @transform_2(%arg0: i32, %arg1: i32) -> (i32, i32, i32) {
    %c0_i32 = arith.constant 0 : i32
    %c0_i32_0 = arith.constant 0 : i32
    %c0_i32_1 = arith.constant 0 : i32
    return %arg0, %c0_i32, %c0_i32_0 : i32, i32, i32
  }
  func.func @transform_3(%arg0: i32, %arg1: i32) -> (i32, i32, i32) {
    %c0_i32 = arith.constant 0 : i32
    %c0_i32_0 = arith.constant 0 : i32
    %c0_i32_1 = arith.constant 0 : i32
    return %arg0, %c0_i32, %c0_i32_0 : i32, i32, i32
  }
  func.func @transform_4(%arg0: i32, %arg1: i32) -> (i32, i32, i32) {
    %c0_i32 = arith.constant 0 : i32
    %c0_i32_0 = arith.constant 0 : i32
    %c0_i32_1 = arith.constant 0 : i32
    return %arg0, %c0_i32, %c0_i32_0 : i32, i32, i32
  }
  func.func @transform_5(%arg0: i32, %arg1: i32) -> (i32, i32) {
    %c1_i32 = arith.constant 1 : i32
    %0 = arith.subi %c1_i32, %arg0 : i32
    %1 = arith.muli %0, %arg1 : i32
    %c0_i32 = arith.constant 0 : i32
    %2 = arith.subi %c0_i32, %arg1 : i32
    %3 = arith.muli %arg0, %2 : i32
    %4 = arith.addi %1, %3 : i32
    %c0_i32_0 = arith.constant 0 : i32
    return %4, %arg0 : i32, i32
  }
  func.func @transform_6(%arg0: i32, %arg1: i32) -> (i32, i32, i32) {
    %c0_i32 = arith.constant 0 : i32
    %c0_i32_0 = arith.constant 0 : i32
    %c0_i32_1 = arith.constant 0 : i32
    return %arg0, %c0_i32, %c0_i32_0 : i32, i32, i32
  }
  func.func @transform_7(%arg0: i32, %arg1: i32) -> (i32, i32, i32) {
    %c0_i32 = arith.constant 0 : i32
    %c0_i32_0 = arith.constant 0 : i32
    %c0_i32_1 = arith.constant 0 : i32
    return %arg0, %c0_i32, %c0_i32_0 : i32, i32, i32
  }
}

</mosaic_0001>

<llo_original>
// kernel: tpu_custom_call.1
$region0: #{tpu_custom_call.1}
  #allocation0 [shape = 'u32[]', space=smem, size = 0x4, offset = 0x4, fixed_abs, tag = 'smem constant byte address 0x4 - core index']
  #allocation1 [shape = 'u32[144,128]{1,0:T(1,128)}', space=vmem, size = 0x12000, scoped, tag = 'internal scratch']
  #allocation2 [shape = 'f32[64,512]{1,0:T(8,128)}', space=vmem, size = 0x20000, scoped, tag = 'scratch operand']
  %s0 = inlined_call_operand.vmem [shape: s32[8,1], index: 0, kind: input, shape index: {}]
  %s1 = inlined_call_operand.vmem [shape: bf16[64,32], index: 1, kind: input, shape index: {}]
  %s2 = inlined_call_operand.hbm [shape: bf16[2,32,512], index: 2, kind: input, shape index: {}]
  %s3 = inlined_call_operand.hbm [shape: bf16[2,128,512], index: 3, kind: input, shape index: {}]
  %s4 = inlined_call_operand.vmem [shape: f32[2,1,512], index: 4, kind: input, shape index: {}]
  %s5 = inlined_call_operand.hbm [shape: f32[64,256], index: 5, kind: output, shape index: {0}]
  %s6 = inlined_call_operand.hbm [shape: f32[2,8,128], index: 6, kind: output, shape index: {1}]
  %s7 = inlined_call_operand.hbm [shape: f32[2,8,128], index: 7, kind: output, shape index: {2}]
  %8 = xla_tuple %s5, %s6, %s7
  %s9 = sld [smem:[#allocation0]]
  $region81: #{tpu_custom_call.1} parent=0
    _
  %s11 = ssub.s32 1, %s9
  %s12 = scalar_select 0, %s11, %s9
  $region1: #{tpu_custom_call.1} parent=0
    #allocation3 [shape = 'u8[65536]{0}', space=vmem, size = 0x10000, scoped, tag = 'input window, operand 2']
    #allocation4 [shape = 's32[2]{0}', space=sflag, size = 0x8, scoped, tag = 'scoped memory for tpu_custom_call.1']
    #allocation5 [shape = 's32[2]{0}', space=sflag, size = 0x8, scoped, tag = 'scoped memory for tpu_custom_call.1']
    #allocation6 [shape = 'u8[262144]{0}', space=vmem, size = 0x40000, scoped, tag = 'input window, operand 3']
    #allocation7 [shape = 's32[2]{0}', space=sflag, size = 0x8, scoped, tag = 'scoped memory for tpu_custom_call.1']
    #allocation8 [shape = 'u8[65536]{0}', space=vmem, size = 0x10000, scoped, tag = 'output window, operand 0']
    #allocation9 [shape = 'u8[8192]{0}', space=vmem, size = 0x2000, scoped, tag = 'output window, operand 1']
    #allocation10 [shape = 's32[2]{0}', space=sflag, size = 0x8, scoped, tag = 'scoped memory for tpu_custom_call.1']
    #allocation11 [shape = 'u8[8192]{0}', space=vmem, size = 0x2000, scoped, tag = 'output window, operand 2']
    %13 = vsyncpa [#allocation4], 0
    %s14 = scalar_lea.sflag [#allocation4], 1
    %15 = vsyncpa %s14, 0
    %16 = vsyncpa [#allocation7], 0
    %s17 = scalar_lea.sflag [#allocation7], 1
    %18 = vsyncpa %s17, 0
    %19 = vsyncpa [#allocation5], 0
    %s20 = scalar_lea.sflag [#allocation5], 1
    %21 = vsyncpa %s20, 0
    %22 = vsyncpa [#allocation10], 0
    %s23 = scalar_lea.sflag [#allocation10], 1
    %24 = vsyncpa %s23, 0
    loop: start=0, step=1, limit=4
    $region2: #{tpu_custom_call.1} parent=1 // loop_pre_header
      _
    $region3: #{tpu_custom_call.1} parent=1 // loop_header
      %s26 = sphi 0, %s30
      %p27 = scmp.ge.s32.totalorder %s26, 4
      %s33 = sphi 0, %s45
      %s34 = sphi 0, %s41
      %s35 = sphi 0, %s33
      %s36 = sphi 0, %s34
      %s37 = sphi 0, %s35
      %s38 = sphi 0, %s36
      %s46 = sphi 0, %s46
      %s48 = sphi 0, %s46
      %s49 = sphi 0, %s48
      %s63 = sphi 0, %s49
      %s79 = sphi 0, %s81
      %s82 = sphi 0, %s79
      %s83 = sphi 0, %s82
      %s99 = sphi 0, %s83
      %s105 = sphi 0, %s107
      %s108 = sphi 0, %s105
      %s109 = sphi 0, %s108
      %s125 = sphi 0, %s109
      %s131 = sphi 0, %s133
      %s134 = sphi 0, %s131
      %s135 = sphi 0, %s134
      %s151 = sphi 0, %s135
      %s157 = sphi 0, %s159
      %s160 = sphi 0, %s157
      %s161 = sphi 0, %s160
      %s177 = sphi 0, %s161
      %s195 = sphi 0, %s197
      %s198 = sphi 0, %s195
      %s199 = sphi 0, %s198
      %s215 = sphi 0, %s199
      %s221 = sphi 0, %s223
      %s224 = sphi 0, %s221
      %s225 = sphi 0, %s224
      %s241 = sphi 0, %s225
      %s247 = sphi 0, %s249
      %s250 = sphi 0, %s247
      %s251 = sphi 0, %s250
      %s267 = sphi 0, %s251
    $region4: #{tpu_custom_call.1} parent=1 // loop_header_branch
      %29 = sbr.rel (%p27) target = $region8
    $region5: #{tpu_custom_call.1} parent=1 // loop_body
      %s31 = ssub.s32 %s26, 1
      %s32 = ssub.s32 %s26, 2
      %s39 = sadd.s32 1, %s34
      %p40 = scmp.ge.s32.totalorder %s39, 1
      %s41 = scalar_select %p40, 0, %s39
      %s42 = sadd.s32 1, %s33
      %s43 = scalar_select %p40, %s42, %s33
      %p44 = scmp.ge.s32.totalorder %s43, 2
      %s45 = scalar_select %p44, 0, %s43
      %s47 = sadd.s32 %s46, 1
      %p50 = scmp.eq.s32.totalorder %s26, 1
      %p51 = scmp.ne.s32.totalorder %s46, %s48
      %p52 = scmp.eq.s32.totalorder %s26, 0
      %p53 = por %p51, %p52
      %p54 = scmp.ne.s32.totalorder %s46, %s48
      %p55 = scmp.eq.s32.totalorder %s31, 1
      %p56 = por %p54, %p55
      %p57 = scmp.ne.s32.totalorder %s48, %s49
      %p58 = scmp.eq.s32.totalorder %s31, 0
      %p59 = por %p57, %p58
      %p60 = scmp.ne.s32.totalorder %s48, %s49
      %p61 = scmp.eq.s32.totalorder %s32, 1
      %p62 = por %p60, %p61
      %p64 = scmp.ne.s32.totalorder %s49, %s63
      %p65 = scmp.eq.s32.totalorder %s32, 0
      %p66 = por %p64, %p65
      %s67 = ssub.s32 1, %s33
      %s68 = smul.u32 %s67, %s34
      %s69 = ssub.s32 0, %s34
      %s70 = smul.u32 %s33, %s69
      %s71 = sadd.s32 %s68, %s70
      %s72 = ssub.s32 1, %s45
      %s73 = smul.u32 %s72, %s41
      %s74 = ssub.s32 0, %s41
      %s75 = smul.u32 %s45, %s74
      %s76 = sadd.s32 %s73, %s75
      %s77 = ssub.s32 %s71, %s76
      %p78 = scmp.eq.s32.totalorder %s77, 0
      %s80 = sadd.s32 %s79, 1
      %s81 = scalar_select %p78, %s79, %s80
      %p84 = pneg %p78
      %p85 = scmp.eq.s32.totalorder %s26, 1
      %p86 = por %p84, %p85
      %p87 = scmp.ne.s32.totalorder %s79, %s82
      %p88 = scmp.eq.s32.totalorder %s26, 0
      %p89 = por %p87, %p88
      %p90 = scmp.ne.s32.totalorder %s79, %s82
      %p91 = scmp.eq.s32.totalorder %s31, 1
      %p92 = por %p90, %p91
      %p93 = scmp.ne.s32.totalorder %s82, %s83
      %p94 = scmp.eq.s32.totalorder %s31, 0
      %p95 = por %p93, %p94
      %p96 = scmp.ne.s32.totalorder %s82, %s83
      %p97 = scmp.eq.s32.totalorder %s32, 1
      %p98 = por %p96, %p97
      %p100 = scmp.ne.s32.totalorder %s83, %s99
      %p101 = scmp.eq.s32.totalorder %s32, 0
      %p102 = por %p100, %p101
      %s103 = ssub.s32 %s33, %s45
      %p104 = scmp.eq.s32.totalorder %s103, 0
      %s106 = sadd.s32 %s105, 1
      %s107 = scalar_select %p104, %s105, %s106
      %p110 = pneg %p104
      %p111 = scmp.eq.s32.totalorder %s26, 1
      %p112 = por %p110, %p111
      %p113 = scmp.ne.s32.totalorder %s105, %s108
      %p114 = scmp.eq.s32.totalorder %s26, 0
      %p115 = por %p113, %p114
      %p116 = scmp.ne.s32.totalorder %s105, %s108
      %p117 = scmp.eq.s32.totalorder %s31, 1
      %p118 = por %p116, %p117
      %p119 = scmp.ne.s32.totalorder %s108, %s109
      %p120 = scmp.eq.s32.totalorder %s31, 0
      %p121 = por %p119, %p120
      %p122 = scmp.ne.s32.totalorder %s108, %s109
      %p123 = scmp.eq.s32.totalorder %s32, 1
      %p124 = por %p122, %p123
      %p126 = scmp.ne.s32.totalorder %s109, %s125
      %p127 = scmp.eq.s32.totalorder %s32, 0
      %p128 = por %p126, %p127
      %s129 = ssub.s32 %s33, %s45
      %p130 = scmp.eq.s32.totalorder %s129, 0
      %s132 = sadd.s32 %s131, 1
      %s133 = scalar_select %p130, %s131, %s132
      %p136 = pneg %p130
      %p137 = scmp.eq.s32.totalorder %s26, 1
      %p138 = por %p136, %p137
      %p139 = scmp.ne.s32.totalorder %s131, %s134
      %p140 = scmp.eq.s32.totalorder %s26, 0
      %p141 = por %p139, %p140
      %p142 = scmp.ne.s32.totalorder %s131, %s134
      %p143 = scmp.eq.s32.totalorder %s31, 1
      %p144 = por %p142, %p143
      %p145 = scmp.ne.s32.totalorder %s134, %s135
      %p146 = scmp.eq.s32.totalorder %s31, 0
      %p147 = por %p145, %p146
      %p148 = scmp.ne.s32.totalorder %s134, %s135
      %p149 = scmp.eq.s32.totalorder %s32, 1
      %p150 = por %p148, %p149
      %p152 = scmp.ne.s32.totalorder %s135, %s151
      %p153 = scmp.eq.s32.totalorder %s32, 0
      %p154 = por %p152, %p153
      %s155 = ssub.s32 %s33, %s45
      %p156 = scmp.eq.s32.totalorder %s155, 0
      %s158 = sadd.s32 %s157, 1
      %s159 = scalar_select %p156, %s157, %s158
      %p162 = pneg %p156
      %p163 = scmp.eq.s32.totalorder %s26, 1
      %p164 = por %p162, %p163
      %p165 = scmp.ne.s32.totalorder %s157, %s160
      %p166 = scmp.eq.s32.totalorder %s26, 0
      %p167 = por %p165, %p166
      %p168 = scmp.ne.s32.totalorder %s157, %s160
      %p169 = scmp.eq.s32.totalorder %s31, 1
      %p170 = por %p168, %p169
      %p171 = scmp.ne.s32.totalorder %s160, %s161
      %p172 = scmp.eq.s32.totalorder %s31, 0
      %p173 = por %p171, %p172
      %p174 = scmp.ne.s32.totalorder %s160, %s161
      %p175 = scmp.eq.s32.totalorder %s32, 1
      %p176 = por %p174, %p175
      %p178 = scmp.ne.s32.totalorder %s161, %s177
      %p179 = scmp.eq.s32.totalorder %s32, 0
      %p180 = por %p178, %p179
      %s181 = ssub.s32 1, %s33
      %s182 = smul.u32 %s181, %s34
      %s183 = ssub.s32 0, %s34
      %s184 = smul.u32 %s33, %s183
      %s185 = sadd.s32 %s182, %s184
      %s186 = ssub.s32 1, %s45
      %s187 = smul.u32 %s186, %s41
      %s188 = ssub.s32 0, %s41
      %s189 = smul.u32 %s45, %s188
      %s190 = sadd.s32 %s187, %s189
      %s191 = ssub.s32 %s185, %s190
      %s192 = ssub.s32 %s33, %s45
      %s193 = sor.u32 %s191, %s192
      %p194 = scmp.eq.s32.totalorder %s193, 0
      %s196 = sadd.s32 %s195, 1
      %s197 = scalar_select %p194, %s195, %s196
      %p200 = pneg %p194
      %p201 = scmp.eq.s32.totalorder %s26, 1
      %p202 = por %p200, %p201
      %p203 = scmp.ne.s32.totalorder %s195, %s198
      %p204 = scmp.eq.s32.totalorder %s26, 0
      %p205 = por %p203, %p204
      %p206 = scmp.ne.s32.totalorder %s195, %s198
      %p207 = scmp.eq.s32.totalorder %s31, 1
      %p208 = por %p206, %p207
      %p209 = scmp.ne.s32.totalorder %s198, %s199
      %p210 = scmp.eq.s32.totalorder %s31, 0
      %p211 = por %p209, %p210
      %p212 = scmp.ne.s32.totalorder %s198, %s199
      %p213 = scmp.eq.s32.totalorder %s32, 1
      %p214 = por %p212, %p213
      %p216 = scmp.ne.s32.totalorder %s199, %s215
      %p217 = scmp.eq.s32.totalorder %s32, 0
      %p218 = por %p216, %p217
      %s219 = ssub.s32 %s33, %s45
      %p220 = scmp.eq.s32.totalorder %s219, 0
      %s222 = sadd.s32 %s221, 1
      %s223 = scalar_select %p220, %s221, %s222
      %p226 = pneg %p220
      %p227 = scmp.eq.s32.totalorder %s26, 1
      %p228 = por %p226, %p227
      %p229 = scmp.ne.s32.totalorder %s221, %s224
      %p230 = scmp.eq.s32.totalorder %s26, 0
      %p231 = por %p229, %p230
      %p232 = scmp.ne.s32.totalorder %s221, %s224
      %p233 = scmp.eq.s32.totalorder %s31, 1
      %p234 = por %p232, %p233
      %p235 = scmp.ne.s32.totalorder %s224, %s225
      %p236 = scmp.eq.s32.totalorder %s31, 0
      %p237 = por %p235, %p236
      %p238 = scmp.ne.s32.totalorder %s224, %s225
      %p239 = scmp.eq.s32.totalorder %s32, 1
      %p240 = por %p238, %p239
      %p242 = scmp.ne.s32.totalorder %s225, %s241
      %p243 = scmp.eq.s32.totalorder %s32, 0
      %p244 = por %p242, %p243
      %s245 = ssub.s32 %s33, %s45
      %p246 = scmp.eq.s32.totalorder %s245, 0
      %s248 = sadd.s32 %s247, 1
      %s249 = scalar_select %p246, %s247, %s248
      %p252 = pneg %p246
      %p253 = scmp.eq.s32.totalorder %s26, 1
      %p254 = por %p252, %p253
      %p255 = scmp.ne.s32.totalorder %s247, %s250
      %p256 = scmp.eq.s32.totalorder %s26, 0
      %p257 = por %p255, %p256
      %p258 = scmp.ne.s32.totalorder %s247, %s250
      %p259 = scmp.eq.s32.totalorder %s31, 1
      %p260 = por %p258, %p259
      %p261 = scmp.ne.s32.totalorder %s250, %s251
      %p262 = scmp.eq.s32.totalorder %s31, 0
      %p263 = por %p261, %p262
      %p264 = scmp.ne.s32.totalorder %s250, %s251
      %p265 = scmp.eq.s32.totalorder %s32, 1
      %p266 = por %p264, %p265
      %p268 = scmp.ne.s32.totalorder %s251, %s267
      %p269 = scmp.eq.s32.totalorder %s32, 0
      %p270 = por %p268, %p269
      %p271 = scmp.le.s32.totalorder 1, %s26
      %p272 = scmp.lt.s32.totalorder %s26, 3
      %p273 = pnand %p271, %p272
      %p274 = pneg %p273
      // Predicated region
      $region9: #{tpu_custom_call.1} parent=5 // pred_check
        _
      $region10: #{tpu_custom_call.1} parent=5 // pred_check_branch
        %276 = sbr.rel (%p273) target = $region12
      $region11: #{tpu_custom_call.1} parent=5 // pred_region
        %s277 = ssub.s32 %s26, 1
        // Predicated region
        $region13: #{tpu_custom_call.1} parent=11 // pred_check
          %p278 = pneg %p59
        $region14: #{tpu_custom_call.1} parent=11 // pred_check_branch
          %280 = sbr.rel (%p278) target = $region16
        $region15: #{tpu_custom_call.1} parent=11 // pred_region
          _
        $region16: #{tpu_custom_call.1} parent=11 // pred_fallthru
          _
      $region12: #{tpu_custom_call.1} parent=5 // pred_fallthru
        _
      %p281 = scmp.lt.s32.totalorder %s26, 2
      // Predicated region
      $region17: #{tpu_custom_call.1} parent=5 // pred_check
        %p282 = pneg %p281
      $region18: #{tpu_custom_call.1} parent=5 // pred_check_branch
        %284 = sbr.rel (%p282) target = $region20
      $region19: #{tpu_custom_call.1} parent=5 // pred_region
        // Predicated region
        $region21: #{tpu_custom_call.1} parent=19 // pred_check
          %p285 = pneg %p89
        $region22: #{tpu_custom_call.1} parent=19 // pred_check_branch
          %287 = sbr.rel (%p285) target = $region24
        $region23: #{tpu_custom_call.1} parent=19 // pred_region
          %s288 = ssub.s32 1, %s33
          %s289 = smul.u32 %s288, %s34
          %s290 = ssub.s32 0, %s34
          %s291 = smul.u32 %s33, %s290
          %s292 = sadd.s32 %s289, %s291
          %s293 = smul.u32 8, %s292
          %p294 = scmp.lt.s32.totalorder %s293, 7
          %s295 = scalar_select %p294, %s293, 7
          %s296 = smul.addr %s295, 4
          %s297 = scalar_lea.vmem %s1, %s296
          %s298 = ssub.s32 1, %s33
          %s299 = smul.u32 %s298, %s34
          %s300 = ssub.s32 0, %s34
          %s301 = smul.u32 %s33, %s300
          %s302 = sadd.s32 %s299, %s301
          %s303 = smul.u32 8, %s302
        $region24: #{tpu_custom_call.1} parent=19 // pred_fallthru
          _
        // Predicated region
        $region25: #{tpu_custom_call.1} parent=19 // pred_check
          %p304 = pneg %p115
        $region26: #{tpu_custom_call.1} parent=19 // pred_check_branch
          %306 = sbr.rel (%p304) target = $region28
        $region27: #{tpu_custom_call.1} parent=19 // pred_region
          %s307 = sand.u32 %s105, 1
          %s308 = scalar_lea.sflag [#allocation4], %s307
          %s309 = sand.u32 %s105, 1
          %s310 = smul.addr %s309, 64
          %s311 = scalar_lea.vmem [#allocation3], %s310
          %s313 = ssub.s32 1024, 1024
          %314 = vsyncadd %s308, %s313
          %s315 = smul.addr %s33, 16
          %s316 = smul.addr %s315, 64
          %s317 = scalar_lea.hbm %s2, %s316
          %s318 = sshll.u32 %s311, 4
          %s319 = int_to_ptr.vmem [resolvable:$true] %s318
          %324 = dma.hbm_to_vmem [thread:$0]  %s317, 1024, %s319, %s308, 256, 256, 16
        $region28: #{tpu_custom_call.1} parent=19 // pred_fallthru
          _
        // Predicated region
        $region29: #{tpu_custom_call.1} parent=19 // pred_check
          %p325 = pneg %p141
        $region30: #{tpu_custom_call.1} parent=19 // pred_check_branch
          %327 = sbr.rel (%p325) target = $region32
        $region31: #{tpu_custom_call.1} parent=19 // pred_region
          %s328 = sand.u32 %s131, 1
          %s329 = scalar_lea.sflag [#allocation7], %s328
          %s330 = sand.u32 %s131, 1
          %s331 = smul.addr %s330, 256
          %s332 = scalar_lea.vmem [#allocation6], %s331
          %s334 = ssub.s32 4096, 4096
          %335 = vsyncadd %s329, %s334
          %s336 = smul.addr %s33, 64
          %s337 = smul.addr %s336, 64
          %s338 = scalar_lea.hbm %s3, %s337
          %s339 = sshll.u32 %s332, 4
          %s340 = int_to_ptr.vmem [resolvable:$true] %s339
          %345 = dma.hbm_to_vmem [thread:$0]  %s338, 4096, %s340, %s329, 256, 256, 16
        $region32: #{tpu_custom_call.1} parent=19 // pred_fallthru
          _
        // Predicated region
        $region33: #{tpu_custom_call.1} parent=19 // pred_check
          %p346 = pneg %p167
        $region34: #{tpu_custom_call.1} parent=19 // pred_check_branch
          %348 = sbr.rel (%p346) target = $region36
        $region35: #{tpu_custom_call.1} parent=19 // pred_region
          %p349 = scmp.lt.s32.totalorder %s33, 1
          %s350 = scalar_select %p349, %s33, 1
          %s351 = smul.addr %s350, 4
          %s352 = scalar_lea.vmem %s4, %s351
        $region36: #{tpu_custom_call.1} parent=19 // pred_fallthru
          _
      $region20: #{tpu_custom_call.1} parent=5 // pred_fallthru
        _
      %p353 = scmp.le.s32.totalorder 1, %s26
      %p354 = scmp.lt.s32.totalorder %s26, 3
      %p355 = pnand %p353, %p354
      %p356 = pneg %p355
      // Predicated region
      $region37: #{tpu_custom_call.1} parent=5 // pred_check
        _
      $region38: #{tpu_custom_call.1} parent=5 // pred_check_branch
        %358 = sbr.rel (%p355) target = $region40
      $region39: #{tpu_custom_call.1} parent=5 // pred_region
        %s359 = ssub.s32 %s26, 1
        %s360 = sand.u32 %s108, 1
        %s361 = scalar_lea.sflag [#allocation4], %s360
        %s362 = sand.u32 %s108, 1
        %s363 = smul.addr %s362, 64
        %s364 = scalar_lea.vmem [#allocation3], %s363
        // Predicated region
        $region41: #{tpu_custom_call.1} parent=39 // pred_check
          %p365 = pneg %p121
        $region42: #{tpu_custom_call.1} parent=39 // pred_check_branch
          %367 = sbr.rel (%p365) target = $region44
        $region43: #{tpu_custom_call.1} parent=39 // pred_region
          %368 = dma.done %s361, 1024
        $region44: #{tpu_custom_call.1} parent=39 // pred_fallthru
          _
        %s369 = sand.u32 %s134, 1
        %s370 = scalar_lea.sflag [#allocation7], %s369
        %s371 = sand.u32 %s134, 1
        %s372 = smul.addr %s371, 256
        %s373 = scalar_lea.vmem [#allocation6], %s372
        // Predicated region
        $region45: #{tpu_custom_call.1} parent=39 // pred_check
          %p374 = pneg %p147
        $region46: #{tpu_custom_call.1} parent=39 // pred_check_branch
          %376 = sbr.rel (%p374) target = $region48
        $region47: #{tpu_custom_call.1} parent=39 // pred_region
          %377 = dma.done %s370, 4096
        $region48: #{tpu_custom_call.1} parent=39 // pred_fallthru
          _
        %p378 = pneg %p59
        %p379 = pneg %p56
        %s380 = ssub.s32 1, %s35
        %s381 = smul.u32 %s380, %s36
        %s382 = ssub.s32 0, %s36
        %s383 = smul.u32 %s35, %s382
        %s384 = sadd.s32 %s381, %s383
        %s385 = smul.u32 8, %s384
        %p386 = scmp.lt.s32.totalorder %s385, 7
        %s387 = scalar_select %p386, %s385, 7
        %s388 = smul.addr %s387, 4
        %s389 = scalar_lea.vmem %s1, %s388
        %p390 = pneg %p95
        %p391 = pneg %p92
        %s392 = sand.u32 %s108, 1
        %s393 = scalar_lea.sflag [#allocation4], %s392
        %s394 = sand.u32 %s108, 1
        %s395 = smul.addr %s394, 64
        %s396 = scalar_lea.vmem [#allocation3], %s395
        %p397 = pneg %p121
        %p398 = pneg %p118
        %s399 = sand.u32 %s134, 1
        %s400 = scalar_lea.sflag [#allocation7], %s399
        %s401 = sand.u32 %s134, 1
        %s402 = smul.addr %s401, 256
        %s403 = scalar_lea.vmem [#allocation6], %s402
        %p404 = pneg %p147
        %p405 = pneg %p144
        %p406 = scmp.lt.s32.totalorder %s35, 1
        %s407 = scalar_select %p406, %s35, 1
        %s408 = smul.addr %s407, 4
        %s409 = scalar_lea.vmem %s4, %s408
        %p410 = pneg %p173
        %p411 = pneg %p170
        %p412 = pneg %p211
        %p413 = pneg %p208
        %s414 = sand.u32 %s198, 1
        %s415 = scalar_lea.sflag [#allocation5], %s414
        %s416 = sand.u32 %s198, 1
        %s417 = smul.addr %s416, 64
        %s418 = scalar_lea.vmem [#allocation8], %s417
        %p419 = pneg %p237
        %p420 = pneg %p234
        %s421 = sand.u32 %s31, 1
        %s422 = scalar_lea.sflag [#allocation10], %s421
        %s423 = sand.u32 %s224, 1
        %s424 = smul.addr %s423, 8
        %s425 = scalar_lea.vmem [#allocation9], %s424
        %p426 = pneg %p263
        %p427 = pneg %p260
        %s428 = sand.u32 %s31, 1
        %s429 = scalar_lea.sflag [#allocation10], %s428
        %s430 = sand.u32 %s250, 1
        %s431 = smul.addr %s430, 8
        %s432 = scalar_lea.vmem [#allocation11], %s431
        %s433 = ssub.s32 1, %s35
        %s434 = smul.u32 %s433, %s36
        %s435 = ssub.s32 0, %s36
        %s436 = smul.u32 %s35, %s435
        %s437 = sadd.s32 %s434, %s436
        %s438 = smul.u32 8, %s437
        %p439 = scmp.lt.s32.totalorder %s438, 7
        %s440 = scalar_select %p439, %s438, 7
        %s441 = smul.addr %s440, 4
        %s442 = scalar_lea.vmem %s1, %s441
        %s443 = ssub.s32 1, %s35
        %s444 = smul.u32 %s443, %s36
        %s445 = ssub.s32 0, %s36
        %s446 = smul.u32 %s35, %s445
        %s447 = sadd.s32 %s444, %s446
        %s448 = smul.u32 8, %s447
        %p449 = scmp.lt.s32.totalorder %s35, 1
        %s450 = scalar_select %p449, %s35, 1
        %s451 = smul.addr %s450, 4
        %s452 = scalar_lea.vmem %s4, %s451
        %s453 = ssub.s32 1, %s35
        %s454 = smul.u32 %s453, %s36
        %s455 = ssub.s32 0, %s36
        %s456 = smul.u32 %s35, %s455
        %s457 = sadd.s32 %s454, %s456
        %s458 = smul.u32 8, %s457
        %p460 = scmp.eq.s32.totalorder %s36, 0
        // Predicated region
        $region49: #{tpu_custom_call.1} parent=39 // pred_check
          %p461 = pneg %p460
        $region50: #{tpu_custom_call.1} parent=39 // pred_check_branch
          %463 = sbr.rel (%p461) target = $region52
        $region51: #{tpu_custom_call.1} parent=39 // pred_region
          %464 = vst [vmem:[%s425] sm:$0xff] 0.0
          %465 = vst [vmem:[%s432] sm:$0xff] 0.0
        $region52: #{tpu_custom_call.1} parent=39 // pred_fallthru
          _
        %v466 = vld [vmem:[%s442] sm:$0xf]
        %v467 = vld [vmem:[%s442 + $0x4] sm:$0xf]
        %v468 = vld [vmem:[%s442 + $0x8] sm:$0xf]
        %v469 = vld [vmem:[%s442 + $0xc] sm:$0xf]
        %v470 = vld [vmem:[%s442 + $0x10] sm:$0xf]
        %v471 = vld [vmem:[%s442 + $0x14] sm:$0xf]
        %v472 = vld [vmem:[%s442 + $0x18] sm:$0xf]
        %v473 = vld [vmem:[%s442 + $0x1c] sm:$0xf]
        %v474 = vld [vmem:[%s364] sm:$0xff]
        %v475 = vld [vmem:[%s364 + $0x8] sm:$0xff]
        %v476 = vld [vmem:[%s364 + $0x10] sm:$0xff]
        %v477 = vld [vmem:[%s364 + $0x18] sm:$0xff]
        %v478 = vld [vmem:[%s364 + $0x20] sm:$0xff]
        %v479 = vld [vmem:[%s364 + $0x28] sm:$0xff]
        %v480 = vld [vmem:[%s364 + $0x30] sm:$0xff]
        %v481 = vld [vmem:[%s364 + $0x38] sm:$0xff]
        %v482 = vld [vmem:[%s452] sm:$0xf]
        %v484 = vlaneseq
        %v485 = vshrl.u32 %v484, 7
        %v486 = vsub.s32 0, %v485
        %v487 = vrot.slane %v482, %v486
        %v488 = vlaneseq
        %v489 = vshrl.u32 %v488, 7
        %v490 = vsub.s32 1, %v489
        %v491 = vrot.slane %v482, %v490
        %v492 = vlaneseq
        %v493 = vshrl.u32 %v492, 7
        %v494 = vsub.s32 2, %v493
        %v495 = vrot.slane %v482, %v494
        %v496 = vlaneseq
        %v497 = vshrl.u32 %v496, 7
        %v498 = vsub.s32 3, %v497
        %v499 = vrot.slane %v482, %v498
        %v512 = vunpack.c.l.b16 %v466
        %v513 = vunpack.c.l.b16 %v467
        %v514 = vunpack.c.l.b16 %v468
        %v515 = vunpack.c.l.b16 %v469
        %v516 = vunpack.c.l.b16 %v470
        %v517 = vunpack.c.l.b16 %v471
        %v518 = vunpack.c.l.b16 %v472
        %v519 = vunpack.c.l.b16 %v473
        %v520 = vpack.c.b16 %v513, %v512
        %v521 = vpack.c.b16 %v515, %v514
        %v522 = vpack.c.b16 %v517, %v516
        %v523 = vpack.c.b16 %v519, %v518
        %v532 = vunpack.c.l.b16 %v474
        %v533 = vunpack.c.h.b16 %v474
        %v534 = vunpack.c.l.b16 %v475
        %v535 = vunpack.c.h.b16 %v475
        %v536 = vunpack.c.l.b16 %v476
        %v537 = vunpack.c.h.b16 %v476
        %v538 = vunpack.c.l.b16 %v477
        %v539 = vunpack.c.h.b16 %v477
        %v540 = vunpack.c.l.b16 %v478
        %v541 = vunpack.c.h.b16 %v478
        %v542 = vunpack.c.l.b16 %v479
        %v543 = vunpack.c.h.b16 %v479
        %v544 = vunpack.c.l.b16 %v480
        %v545 = vunpack.c.h.b16 %v480
        %v546 = vunpack.c.l.b16 %v481
        %v547 = vunpack.c.h.b16 %v481
        %v548 = vpack.c.b16 %v536, %v532
        %v549 = vpack.c.b16 %v537, %v533
        %v550 = vpack.c.b16 %v538, %v534
        %v551 = vpack.c.b16 %v539, %v535
        %v552 = vpack.c.b16 %v544, %v540
        %v553 = vpack.c.b16 %v545, %v541
        %v554 = vpack.c.b16 %v546, %v542
        %v555 = vpack.c.b16 %v547, %v543
        %vm564 = vcmask 261120
        %v566 = vsel %vm564, %v520, 0
        %v569 = vsel %vm564, %v521, 0
        %v572 = vsel %vm564, %v522, 0
        %v575 = vsel %vm564, %v523, 0
        %577 = vmatprep.subr.bf16.mxu0 0
        %578 = vmatpush1.bf16.msra.mxu0 0
        %579 = vmatprep.subr.bf16.mxu0 0
        %580 = vmatpush1.bf16.msra.mxu0 0
        %581 = vmatprep.subr.bf16.mxu0 0
        %582 = vmatpush1.bf16.msra.mxu0 0
        %583 = vmatprep.subr.bf16.mxu0 0
        %584 = vmatpush1.bf16.msra.mxu0 0
        %585 = vmatprep.subr.bf16.mxu0 0
        %586 = vmatpush1.bf16.msra.mxu0 0
        %587 = vmatprep.subr.bf16.mxu0 0
        %588 = vmatpush1.bf16.msra.mxu0 0
        %589 = vmatprep.subr.bf16.mxu0 %v553
        %590 = vmatpush1.bf16.msra.mxu0 %v552
        %591 = vmatprep.subr.bf16.mxu0 %v549
        %592 = vmatpush1.bf16.msra.mxu0 %v548
        %593 = vmatprep.subr.bf16.mxu0 0
        %594 = vmatpush2.bf16.msra.mxu0 0
        %595 = vmatprep.subr.bf16.mxu0 0
        %596 = vmatpush2.bf16.msra.mxu0 0
        %597 = vmatprep.subr.bf16.mxu0 0
        %598 = vmatpush2.bf16.msra.mxu0 0
        %599 = vmatprep.subr.bf16.mxu0 0
        %600 = vmatpush2.bf16.msra.mxu0 0
        %601 = vmatprep.subr.bf16.mxu0 0
        %602 = vmatpush2.bf16.msra.mxu0 0
        %603 = vmatprep.subr.bf16.mxu0 0
        %604 = vmatpush2.bf16.msra.mxu0 0
        %605 = vmatprep.subr.bf16.mxu0 0
        %606 = vmatpush2.bf16.msra.mxu0 0
        %607 = vmatprep.subr.bf16.mxu0 0
        %608 = vmatpush2.bf16.msra.mxu0 0
        %609 = vmatprep.mubr.bf16.mxu0 0
        %610 = vmatmul.mubr.bf16.gmra.mxu0 %v566
        %v611 = vpop.f32.mrf.mxu0
        %v612 = vadd.f32 %v487, %v611
        %v613 = vpop.f32.mrf.mxu0
        %v614 = vadd.f32 %v491, %v613
        %v615 = vpop.f32.mrf.mxu0
        %v616 = vadd.f32 %v487, %v615
        %v617 = vpop.f32.mrf.mxu0
        %v618 = vadd.f32 %v491, %v617
        %619 = vmatprep.mubr.bf16.mxu0 0
        %620 = vmatmul.mubr.bf16.gmra.mxu0 %v569
        %v621 = vpop.f32.mrf.mxu0
        %v622 = vadd.f32 %v487, %v621
        %v623 = vpop.f32.mrf.mxu0
        %v624 = vadd.f32 %v491, %v623
        %v625 = vpop.f32.mrf.mxu0
        %v626 = vadd.f32 %v487, %v625
        %v627 = vpop.f32.mrf.mxu0
        %v628 = vadd.f32 %v491, %v627
        %629 = vmatprep.mubr.bf16.mxu0 0
        %630 = vmatmul.mubr.bf16.gmra.mxu0 %v572
        %v631 = vpop.f32.mrf.mxu0
        %v632 = vadd.f32 %v487, %v631
        %v633 = vpop.f32.mrf.mxu0
        %v634 = vadd.f32 %v491, %v633
        %v635 = vpop.f32.mrf.mxu0
        %v636 = vadd.f32 %v487, %v635
        %v637 = vpop.f32.mrf.mxu0
        %v638 = vadd.f32 %v491, %v637
        %639 = vmatprep.mubr.bf16.mxu0 0
        %640 = vmatmul.mubr.bf16.gmra.mxu0 %v575
        %v641 = vpop.f32.mrf.mxu0
        %v642 = vadd.f32 %v487, %v641
        %v643 = vpop.f32.mrf.mxu0
        %v644 = vadd.f32 %v491, %v643
        %v645 = vpop.f32.mrf.mxu0
        %v646 = vadd.f32 %v487, %v645
        %v647 = vpop.f32.mrf.mxu0
        %v648 = vadd.f32 %v491, %v647
        %649 = vdwg.mxu0
        %650 = vmatprep.subr.bf16.mxu0 0
        %651 = vmatpush1.bf16.msra.mxu0 0
        %652 = vmatprep.subr.bf16.mxu0 0
        %653 = vmatpush1.bf16.msra.mxu0 0
        %654 = vmatprep.subr.bf16.mxu0 0
        %655 = vmatpush1.bf16.msra.mxu0 0
        %656 = vmatprep.subr.bf16.mxu0 0
        %657 = vmatpush1.bf16.msra.mxu0 0
        %658 = vmatprep.subr.bf16.mxu0 0
        %659 = vmatpush1.bf16.msra.mxu0 0
        %660 = vmatprep.subr.bf16.mxu0 0
        %661 = vmatpush1.bf16.msra.mxu0 0
        %662 = vmatprep.subr.bf16.mxu0 %v555
        %663 = vmatpush1.bf16.msra.mxu0 %v554
        %664 = vmatprep.subr.bf16.mxu0 %v551
        %665 = vmatpush1.bf16.msra.mxu0 %v550
        %666 = vmatprep.subr.bf16.mxu0 0
        %667 = vmatpush2.bf16.msra.mxu0 0
        %668 = vmatprep.subr.bf16.mxu0 0
        %669 = vmatpush2.bf16.msra.mxu0 0
        %670 = vmatprep.subr.bf16.mxu0 0
        %671 = vmatpush2.bf16.msra.mxu0 0
        %672 = vmatprep.subr.bf16.mxu0 0
        %673 = vmatpush2.bf16.msra.mxu0 0
        %674 = vmatprep.subr.bf16.mxu0 0
        %675 = vmatpush2.bf16.msra.mxu0 0
        %676 = vmatprep.subr.bf16.mxu0 0
        %677 = vmatpush2.bf16.msra.mxu0 0
        %678 = vmatprep.subr.bf16.mxu0 0
        %679 = vmatpush2.bf16.msra.mxu0 0
        %680 = vmatprep.subr.bf16.mxu0 0
        %681 = vmatpush2.bf16.msra.mxu0 0
        %682 = vmatprep.mubr.bf16.mxu0 0
        %683 = vmatmul.mubr.bf16.gmra.mxu0 %v566
        %v684 = vpop.f32.mrf.mxu0
        %v685 = vadd.f32 %v495, %v684
        %v686 = vpop.f32.mrf.mxu0
        %v687 = vadd.f32 %v499, %v686
        %v688 = vpop.f32.mrf.mxu0
        %v689 = vadd.f32 %v495, %v688
        %v690 = vpop.f32.mrf.mxu0
        %v691 = vadd.f32 %v499, %v690
        %692 = vmatprep.mubr.bf16.mxu0 0
        %693 = vmatmul.mubr.bf16.gmra.mxu0 %v569
        %v694 = vpop.f32.mrf.mxu0
        %v695 = vadd.f32 %v495, %v694
        %v696 = vpop.f32.mrf.mxu0
        %v697 = vadd.f32 %v499, %v696
        %v698 = vpop.f32.mrf.mxu0
        %v699 = vadd.f32 %v495, %v698
        %v700 = vpop.f32.mrf.mxu0
        %v701 = vadd.f32 %v499, %v700
        %702 = vmatprep.mubr.bf16.mxu0 0
        %703 = vmatmul.mubr.bf16.gmra.mxu0 %v572
        %v704 = vpop.f32.mrf.mxu0
        %v705 = vadd.f32 %v495, %v704
        %v706 = vpop.f32.mrf.mxu0
        %v707 = vadd.f32 %v499, %v706
        %v708 = vpop.f32.mrf.mxu0
        %v709 = vadd.f32 %v495, %v708
        %v710 = vpop.f32.mrf.mxu0
        %v711 = vadd.f32 %v499, %v710
        %712 = vmatprep.mubr.bf16.mxu0 0
        %713 = vmatmul.mubr.bf16.gmra.mxu0 %v575
        %v714 = vpop.f32.mrf.mxu0
        %v715 = vadd.f32 %v495, %v714
        %v716 = vpop.f32.mrf.mxu0
        %v717 = vadd.f32 %v499, %v716
        %v718 = vpop.f32.mrf.mxu0
        %v719 = vadd.f32 %v495, %v718
        %v720 = vpop.f32.mrf.mxu0
        %v721 = vadd.f32 %v499, %v720
        %722 = vdwg.mxu0
        %723 = vst [vmem:[#allocation2] sm:$0xff] %v612
        %724 = vst [vmem:[#allocation2 + $0x8] sm:$0xff] %v614
        %725 = vst [vmem:[#allocation2 + $0x10] sm:$0xff] %v685
        %726 = vst [vmem:[#allocation2 + $0x18] sm:$0xff] %v687
        %727 = vst [vmem:[#allocation2 + $0x20] sm:$0xff] %v616
        %728 = vst [vmem:[#allocation2 + $0x28] sm:$0xff] %v618
        %729 = vst [vmem:[#allocation2 + $0x30] sm:$0xff] %v689
        %730 = vst [vmem:[#allocation2 + $0x38] sm:$0xff] %v691
        %731 = vst [vmem:[#allocation2 + $0x40] sm:$0xff] %v622
        %732 = vst [vmem:[#allocation2 + $0x48] sm:$0xff] %v624
        %733 = vst [vmem:[#allocation2 + $0x50] sm:$0xff] %v695
        %734 = vst [vmem:[#allocation2 + $0x58] sm:$0xff] %v697
        %735 = vst [vmem:[#allocation2 + $0x60] sm:$0xff] %v626
        %736 = vst [vmem:[#allocation2 + $0x68] sm:$0xff] %v628
        %737 = vst [vmem:[#allocation2 + $0x70] sm:$0xff] %v699
        %738 = vst [vmem:[#allocation2 + $0x78] sm:$0xff] %v701
        %739 = vst [vmem:[#allocation2 + $0x80] sm:$0xff] %v632
        %740 = vst [vmem:[#allocation2 + $0x88] sm:$0xff] %v634
        %741 = vst [vmem:[#allocation2 + $0x90] sm:$0xff] %v705
        %742 = vst [vmem:[#allocation2 + $0x98] sm:$0xff] %v707
        %743 = vst [vmem:[#allocation2 + $0xa0] sm:$0xff] %v636
        %744 = vst [vmem:[#allocation2 + $0xa8] sm:$0xff] %v638
        %745 = vst [vmem:[#allocation2 + $0xb0] sm:$0xff] %v709
        %746 = vst [vmem:[#allocation2 + $0xb8] sm:$0xff] %v711
        %747 = vst [vmem:[#allocation2 + $0xc0] sm:$0xff] %v642
        %748 = vst [vmem:[#allocation2 + $0xc8] sm:$0xff] %v644
        %749 = vst [vmem:[#allocation2 + $0xd0] sm:$0xff] %v715
        %750 = vst [vmem:[#allocation2 + $0xd8] sm:$0xff] %v717
        %751 = vst [vmem:[#allocation2 + $0xe0] sm:$0xff] %v646
        %752 = vst [vmem:[#allocation2 + $0xe8] sm:$0xff] %v648
        %753 = vst [vmem:[#allocation2 + $0xf0] sm:$0xff] %v719
        %754 = vst [vmem:[#allocation2 + $0xf8] sm:$0xff] %v721
        %v755 = vld [vmem:[%s0] sm:$0xff]
        %756 = vset.pattern.permute.xlu0 0
        %757 = vperm.xlu0 %756, %v755
        %v758 = vpop.permute.xlu0 %757
        %s759 = ssub.s32 1, %s35
        %s760 = smul.u32 %s759, %s36
        %s761 = ssub.s32 0, %s36
        %s762 = smul.u32 %s35, %s761
        %s763 = sadd.s32 %s760, %s762
        %v764 = vld [vmem:[%s425] sm:$0xff]
        %v765 = vld [vmem:[%s432] sm:$0xff]
        %s766 = smul.u32 %s35, 7
        %s767 = smul.u32 %s763, 8
        %s768 = sadd.s32 %s767, %s766
        %s769 = smul.u32 %s35, 56
        %s770 = sshra.s32 %s769, 3
        %s771 = sand.u32 %s769, 7
        %s772 = smul.u32 %s770, 4
        %s773 = smul.addr %s772, 8
        %s774 = scalar_lea.vmem [#allocation2], %s773
        %v775 = vld [vmem:[%s774] sm:$0xff]
        %v776 = vld [vmem:[%s774 + $0x8] sm:$0xff]
        %v777 = vld [vmem:[%s774 + $0x10] sm:$0xff]
        %v778 = vld [vmem:[%s774 + $0x18] sm:$0xff]
        %v779 = vpack.c.bf16 %v764, %v764
        %v780 = vld [vmem:[%s373] sm:$0xff]
        %v781 = vld [vmem:[%s373 + $0x8] sm:$0xff]
        %v782 = vld [vmem:[%s373 + $0x10] sm:$0xff]
        %v783 = vld [vmem:[%s373 + $0x18] sm:$0xff]
        %v784 = vld [vmem:[%s373 + $0x20] sm:$0xff]
        %v785 = vld [vmem:[%s373 + $0x28] sm:$0xff]
        %v786 = vld [vmem:[%s373 + $0x30] sm:$0xff]
        %v787 = vld [vmem:[%s373 + $0x38] sm:$0xff]
        %v788 = vld [vmem:[%s373 + $0x40] sm:$0xff]
        %v789 = vld [vmem:[%s373 + $0x48] sm:$0xff]
        %v790 = vld [vmem:[%s373 + $0x50] sm:$0xff]
        %v791 = vld [vmem:[%s373 + $0x58] sm:$0xff]
        %v792 = vld [vmem:[%s373 + $0x60] sm:$0xff]
        %v793 = vld [vmem:[%s373 + $0x68] sm:$0xff]
        %v794 = vld [vmem:[%s373 + $0x70] sm:$0xff]
        %v795 = vld [vmem:[%s373 + $0x78] sm:$0xff]
        %v796 = vld [vmem:[%s373 + $0x80] sm:$0xff]
        %v797 = vld [vmem:[%s373 + $0x88] sm:$0xff]
        %v798 = vld [vmem:[%s373 + $0x90] sm:$0xff]
        %v799 = vld [vmem:[%s373 + $0x98] sm:$0xff]
        %v800 = vld [vmem:[%s373 + $0xa0] sm:$0xff]
        %v801 = vld [vmem:[%s373 + $0xa8] sm:$0xff]
        %v802 = vld [vmem:[%s373 + $0xb0] sm:$0xff]
        %v803 = vld [vmem:[%s373 + $0xb8] sm:$0xff]
        %v804 = vld [vmem:[%s373 + $0xc0] sm:$0xff]
        %v805 = vld [vmem:[%s373 + $0xc8] sm:$0xff]
        %v806 = vld [vmem:[%s373 + $0xd0] sm:$0xff]
        %v807 = vld [vmem:[%s373 + $0xd8] sm:$0xff]
        %v808 = vld [vmem:[%s373 + $0xe0] sm:$0xff]
        %v809 = vld [vmem:[%s373 + $0xe8] sm:$0xff]
        %v810 = vld [vmem:[%s373 + $0xf0] sm:$0xff]
        %v811 = vld [vmem:[%s373 + $0xf8] sm:$0xff]
        %v844 = vunpack.c.l.b16 %v780
        %v845 = vunpack.c.h.b16 %v780
        %v846 = vunpack.c.l.b16 %v781
        %v847 = vunpack.c.h.b16 %v781
        %v848 = vunpack.c.l.b16 %v782
        %v849 = vunpack.c.h.b16 %v782
        %v850 = vunpack.c.l.b16 %v783
        %v851 = vunpack.c.h.b16 %v783
        %v852 = vunpack.c.l.b16 %v784
        %v853 = vunpack.c.h.b16 %v784
        %v854 = vunpack.c.l.b16 %v785
        %v855 = vunpack.c.h.b16 %v785
        %v856 = vunpack.c.l.b16 %v786
        %v857 = vunpack.c.h.b16 %v786
        %v858 = vunpack.c.l.b16 %v787
        %v859 = vunpack.c.h.b16 %v787
        %v860 = vunpack.c.l.b16 %v788
        %v861 = vunpack.c.h.b16 %v788
        %v862 = vunpack.c.l.b16 %v789
        %v863 = vunpack.c.h.b16 %v789
        %v864 = vunpack.c.l.b16 %v790
        %v865 = vunpack.c.h.b16 %v790
        %v866 = vunpack.c.l.b16 %v791
        %v867 = vunpack.c.h.b16 %v791
        %v868 = vunpack.c.l.b16 %v792
        %v869 = vunpack.c.h.b16 %v792
        %v870 = vunpack.c.l.b16 %v793
        %v871 = vunpack.c.h.b16 %v793
        %v872 = vunpack.c.l.b16 %v794
        %v873 = vunpack.c.h.b16 %v794
        %v874 = vunpack.c.l.b16 %v795
        %v875 = vunpack.c.h.b16 %v795
        %v876 = vunpack.c.l.b16 %v796
        %v877 = vunpack.c.h.b16 %v796
        %v878 = vunpack.c.l.b16 %v797
        %v879 = vunpack.c.h.b16 %v797
        %v880 = vunpack.c.l.b16 %v798
        %v881 = vunpack.c.h.b16 %v798
        %v882 = vunpack.c.l.b16 %v799
        %v883 = vunpack.c.h.b16 %v799
        %v884 = vunpack.c.l.b16 %v800
        %v885 = vunpack.c.h.b16 %v800
        %v886 = vunpack.c.l.b16 %v801
        %v887 = vunpack.c.h.b16 %v801
        %v888 = vunpack.c.l.b16 %v802
        %v889 = vunpack.c.h.b16 %v802
        %v890 = vunpack.c.l.b16 %v803
        %v891 = vunpack.c.h.b16 %v803
        %v892 = vunpack.c.l.b16 %v804
        %v893 = vunpack.c.h.b16 %v804
        %v894 = vunpack.c.l.b16 %v805
        %v895 = vunpack.c.h.b16 %v805
        %v896 = vunpack.c.l.b16 %v806
        %v897 = vunpack.c.h.b16 %v806
        %v898 = vunpack.c.l.b16 %v807
        %v899 = vunpack.c.h.b16 %v807
        %v900 = vunpack.c.l.b16 %v808
        %v901 = vunpack.c.h.b16 %v808
        %v902 = vunpack.c.l.b16 %v809
        %v903 = vunpack.c.h.b16 %v809
        %v904 = vunpack.c.l.b16 %v810
        %v905 = vunpack.c.h.b16 %v810
        %v906 = vunpack.c.l.b16 %v811
        %v907 = vunpack.c.h.b16 %v811
        %v908 = vpack.c.b16 %v848, %v844
        %v909 = vpack.c.b16 %v849, %v845
        %v910 = vpack.c.b16 %v850, %v846
        %v911 = vpack.c.b16 %v851, %v847
        %v912 = vpack.c.b16 %v856, %v852
        %v913 = vpack.c.b16 %v857, %v853
        %v914 = vpack.c.b16 %v858, %v854
        %v915 = vpack.c.b16 %v859, %v855
        %v916 = vpack.c.b16 %v864, %v860
        %v917 = vpack.c.b16 %v865, %v861
        %v918 = vpack.c.b16 %v866, %v862
        %v919 = vpack.c.b16 %v867, %v863
        %v920 = vpack.c.b16 %v872, %v868
        %v921 = vpack.c.b16 %v873, %v869
        %v922 = vpack.c.b16 %v874, %v870
        %v923 = vpack.c.b16 %v875, %v871
        %v924 = vpack.c.b16 %v880, %v876
        %v925 = vpack.c.b16 %v881, %v877
        %v926 = vpack.c.b16 %v882, %v878
        %v927 = vpack.c.b16 %v883, %v879
        %v928 = vpack.c.b16 %v888, %v884
        %v929 = vpack.c.b16 %v889, %v885
        %v930 = vpack.c.b16 %v890, %v886
        %v931 = vpack.c.b16 %v891, %v887
        %v932 = vpack.c.b16 %v896, %v892
        %v933 = vpack.c.b16 %v897, %v893
        %v934 = vpack.c.b16 %v898, %v894
        %v935 = vpack.c.b16 %v899, %v895
        %v936 = vpack.c.b16 %v904, %v900
        %v937 = vpack.c.b16 %v905, %v901
        %v938 = vpack.c.b16 %v906, %v902
        %v939 = vpack.c.b16 %v907, %v903
        %972 = vmatprep.subr.bf16.mxu0 %v937
        %973 = vmatpush1.bf16.msra.mxu0 %v936
        %974 = vmatprep.subr.bf16.mxu0 %v933
        %975 = vmatpush1.bf16.msra.mxu0 %v932
        %976 = vmatprep.subr.bf16.mxu0 %v929
        %977 = vmatpush1.bf16.msra.mxu0 %v928
        %978 = vmatprep.subr.bf16.mxu0 %v925
        %979 = vmatpush1.bf16.msra.mxu0 %v924
        %980 = vmatprep.subr.bf16.mxu0 %v921
        %981 = vmatpush1.bf16.msra.mxu0 %v920
        %982 = vmatprep.subr.bf16.mxu0 %v917
        %983 = vmatpush1.bf16.msra.mxu0 %v916
        %984 = vmatprep.subr.bf16.mxu0 %v913
        %985 = vmatpush1.bf16.msra.mxu0 %v912
        %986 = vmatprep.subr.bf16.mxu0 %v909
        %987 = vmatpush1.bf16.msra.mxu0 %v908
        %988 = vmatprep.subr.bf16.mxu0 0
        %989 = vmatpush2.bf16.msra.mxu0 0
        %990 = vmatprep.subr.bf16.mxu0 0
        %991 = vmatpush2.bf16.msra.mxu0 0
        %992 = vmatprep.subr.bf16.mxu0 0
        %993 = vmatpush2.bf16.msra.mxu0 0
        %994 = vmatprep.subr.bf16.mxu0 0
        %995 = vmatpush2.bf16.msra.mxu0 0
        %996 = vmatprep.subr.bf16.mxu0 0
        %997 = vmatpush2.bf16.msra.mxu0 0
        %998 = vmatprep.subr.bf16.mxu0 0
        %999 = vmatpush2.bf16.msra.mxu0 0
        %1000 = vmatprep.subr.bf16.mxu0 0
        %1001 = vmatpush2.bf16.msra.mxu0 0
        %1002 = vmatprep.subr.bf16.mxu0 0
        %1003 = vmatpush2.bf16.msra.mxu0 0
        %1004 = vmatprep.mubr.bf16.mxu0 0
        %1005 = vmatmul.mubr.bf16.gmra.mxu0 %v779
        %v1006 = vpop.f32.mrf.mxu0
        %v1007 = vadd.f32 0.0, %v1006
        %v1008 = vpop.f32.mrf.mxu0
        %v1009 = vadd.f32 0.0, %v1008
        %v1010 = vpop.f32.mrf.mxu0
        %v1011 = vpop.f32.mrf.mxu0
        %1012 = vdwg.mxu0
        %1013 = vmatprep.subr.bf16.mxu0 %v939
        %1014 = vmatpush1.bf16.msra.mxu0 %v938
        %1015 = vmatprep.subr.bf16.mxu0 %v935
        %1016 = vmatpush1.bf16.msra.mxu0 %v934
        %1017 = vmatprep.subr.bf16.mxu0 %v931
        %1018 = vmatpush1.bf16.msra.mxu0 %v930
        %1019 = vmatprep.subr.bf16.mxu0 %v927
        %1020 = vmatpush1.bf16.msra.mxu0 %v926
        %1021 = vmatprep.subr.bf16.mxu0 %v923
        %1022 = vmatpush1.bf16.msra.mxu0 %v922
        %1023 = vmatprep.subr.bf16.mxu0 %v919
        %1024 = vmatpush1.bf16.msra.mxu0 %v918
        %1025 = vmatprep.subr.bf16.mxu0 %v915
        %1026 = vmatpush1.bf16.msra.mxu0 %v914
        %1027 = vmatprep.subr.bf16.mxu0 %v911
        %1028 = vmatpush1.bf16.msra.mxu0 %v910
        %1029 = vmatprep.subr.bf16.mxu0 0
        %1030 = vmatpush2.bf16.msra.mxu0 0
        %1031 = vmatprep.subr.bf16.mxu0 0
        %1032 = vmatpush2.bf16.msra.mxu0 0
        %1033 = vmatprep.subr.bf16.mxu0 0
        %1034 = vmatpush2.bf16.msra.mxu0 0
        %1035 = vmatprep.subr.bf16.mxu0 0
        %1036 = vmatpush2.bf16.msra.mxu0 0
        %1037 = vmatprep.subr.bf16.mxu0 0
        %1038 = vmatpush2.bf16.msra.mxu0 0
        %1039 = vmatprep.subr.bf16.mxu0 0
        %1040 = vmatpush2.bf16.msra.mxu0 0
        %1041 = vmatprep.subr.bf16.mxu0 0
        %1042 = vmatpush2.bf16.msra.mxu0 0
        %1043 = vmatprep.subr.bf16.mxu0 0
        %1044 = vmatpush2.bf16.msra.mxu0 0
        %1045 = vmatprep.mubr.bf16.mxu0 0
        %1046 = vmatmul.mubr.bf16.gmra.mxu0 %v779
        %v1047 = vpop.f32.mrf.mxu0
        %v1048 = vadd.f32 0.0, %v1047
        %v1049 = vpop.f32.mrf.mxu0
        %v1050 = vadd.f32 0.0, %v1049
        %v1051 = vpop.f32.mrf.mxu0
        %v1052 = vpop.f32.mrf.mxu0
        %1053 = vdwg.mxu0
        %v1054 = vadd.f32 %v775, %v1007
        %v1055 = vadd.f32 %v776, %v1009
        %v1056 = vadd.f32 %v777, %v1048
        %v1057 = vadd.f32 %v778, %v1050
        %v1058 = vxor.u32 %v1054, 2147483648
        %v1059 = vmul.f32 %v1058, 1.442695
        %v1060 = vpow.pop %v1059
        %v1061 = vadd.f32 %v1060, 1.0
        %v1062 = vrcp.pop %v1061
        %v1063 = vmul.f32 1.0, %v1062
        %v1064 = vxor.u32 %v1055, 2147483648
        %v1065 = vmul.f32 %v1064, 1.442695
        %v1066 = vpow.pop %v1065
        %v1067 = vadd.f32 %v1066, 1.0
        %v1068 = vrcp.pop %v1067
        %v1069 = vmul.f32 1.0, %v1068
        %v1070 = vtanh.pop %v1056
        %v1071 = vxor.u32 %v1057, 2147483648
        %v1072 = vmul.f32 %v1071, 1.442695
        %v1073 = vpow.pop %v1072
        %v1074 = vadd.f32 %v1073, 1.0
        %v1075 = vrcp.pop %v1074
        %v1076 = vmul.f32 1.0, %v1075
        %v1077 = vmul.f32 %v1069, %v765
        %v1078 = vmul.f32 %v1063, %v1070
        %v1079 = vadd.f32 %v1077, %v1078
        %v1080 = vtanh.pop %v1079
        %v1081 = vmul.f32 %v1076, %v1080
        %v1082 = vstv %s768
        %vm1083 = vcmp.lt.s32.totalorder %v1082, %v758
        %v1084 = vsel %vm1083, %v1081, %v764
        %v1085 = vsel %vm1083, %v1079, %v765
        %v1086 = vsel %vm1083, %v1081, 0.0
        %s1087 = scalar_lea.vmem %s418, %s769 [#allocation8]
        %1088 = vst [vmem:[%s1087] sm:$0xff] %v1086
        %s1089 = smul.u32 %s35, 6
        %s1090 = sadd.s32 %s759, %s1089
        %s1091 = sadd.s32 %s767, %s1090
        %s1092 = smul.u32 %s1090, 8
        %s1093 = sshra.s32 %s1092, 3
        %s1094 = sand.u32 %s1092, 7
        %s1095 = smul.u32 %s1093, 4
        %s1096 = smul.addr %s1095, 8
        %s1097 = scalar_lea.vmem [#allocation2], %s1096
        %v1098 = vld [vmem:[%s1097] sm:$0xff]
        %v1099 = vld [vmem:[%s1097 + $0x8] sm:$0xff]
        %v1100 = vld [vmem:[%s1097 + $0x10] sm:$0xff]
        %v1101 = vld [vmem:[%s1097 + $0x18] sm:$0xff]
        %v1102 = vpack.c.bf16 %v1084, %v1084
        %v1103 = vld [vmem:[%s373] sm:$0xff]
        %v1104 = vld [vmem:[%s373 + $0x8] sm:$0xff]
        %v1105 = vld [vmem:[%s373 + $0x10] sm:$0xff]
        %v1106 = vld [vmem:[%s373 + $0x18] sm:$0xff]
        %v1107 = vld [vmem:[%s373 + $0x20] sm:$0xff]
        %v1108 = vld [vmem:[%s373 + $0x28] sm:$0xff]
        %v1109 = vld [vmem:[%s373 + $0x30] sm:$0xff]
        %v1110 = vld [vmem:[%s373 + $0x38] sm:$0xff]
        %v1111 = vld [vmem:[%s373 + $0x40] sm:$0xff]
        %v1112 = vld [vmem:[%s373 + $0x48] sm:$0xff]
        %v1113 = vld [vmem:[%s373 + $0x50] sm:$0xff]
        %v1114 = vld [vmem:[%s373 + $0x58] sm:$0xff]
        %v1115 = vld [vmem:[%s373 + $0x60] sm:$0xff]
        %v1116 = vld [vmem:[%s373 + $0x68] sm:$0xff]
        %v1117 = vld [vmem:[%s373 + $0x70] sm:$0xff]
        %v1118 = vld [vmem:[%s373 + $0x78] sm:$0xff]
        %v1119 = vld [vmem:[%s373 + $0x80] sm:$0xff]
        %v1120 = vld [vmem:[%s373 + $0x88] sm:$0xff]
        %v1121 = vld [vmem:[%s373 + $0x90] sm:$0xff]
        %v1122 = vld [vmem:[%s373 + $0x98] sm:$0xff]
        %v1123 = vld [vmem:[%s373 + $0xa0] sm:$0xff]
        %v1124 = vld [vmem:[%s373 + $0xa8] sm:$0xff]
        %v1125 = vld [vmem:[%s373 + $0xb0] sm:$0xff]
        %v1126 = vld [vmem:[%s373 + $0xb8] sm:$0xff]
        %v1127 = vld [vmem:[%s373 + $0xc0] sm:$0xff]
        %v1128 = vld [vmem:[%s373 + $0xc8] sm:$0xff]
        %v1129 = vld [vmem:[%s373 + $0xd0] sm:$0xff]
        %v1130 = vld [vmem:[%s373 + $0xd8] sm:$0xff]
        %v1131 = vld [vmem:[%s373 + $0xe0] sm:$0xff]
        %v1132 = vld [vmem:[%s373 + $0xe8] sm:$0xff]
        %v1133 = vld [vmem:[%s373 + $0xf0] sm:$0xff]
        %v1134 = vld [vmem:[%s373 + $0xf8] sm:$0xff]
        %v1167 = vunpack.c.l.b16 %v1103
        %v1168 = vunpack.c.h.b16 %v1103
        %v1169 = vunpack.c.l.b16 %v1104
        %v1170 = vunpack.c.h.b16 %v1104
        %v1171 = vunpack.c.l.b16 %v1105
        %v1172 = vunpack.c.h.b16 %v1105
        %v1173 = vunpack.c.l.b16 %v1106
        %v1174 = vunpack.c.h.b16 %v1106
        %v1175 = vunpack.c.l.b16 %v1107
        %v1176 = vunpack.c.h.b16 %v1107
        %v1177 = vunpack.c.l.b16 %v1108
        %v1178 = vunpack.c.h.b16 %v1108
        %v1179 = vunpack.c.l.b16 %v1109
        %v1180 = vunpack.c.h.b16 %v1109
        %v1181 = vunpack.c.l.b16 %v1110
        %v1182 = vunpack.c.h.b16 %v1110
        %v1183 = vunpack.c.l.b16 %v1111
        %v1184 = vunpack.c.h.b16 %v1111
        %v1185 = vunpack.c.l.b16 %v1112
        %v1186 = vunpack.c.h.b16 %v1112
        %v1187 = vunpack.c.l.b16 %v1113
        %v1188 = vunpack.c.h.b16 %v1113
        %v1189 = vunpack.c.l.b16 %v1114
        %v1190 = vunpack.c.h.b16 %v1114
        %v1191 = vunpack.c.l.b16 %v1115
        %v1192 = vunpack.c.h.b16 %v1115
        %v1193 = vunpack.c.l.b16 %v1116
        %v1194 = vunpack.c.h.b16 %v1116
        %v1195 = vunpack.c.l.b16 %v1117
        %v1196 = vunpack.c.h.b16 %v1117
        %v1197 = vunpack.c.l.b16 %v1118
        %v1198 = vunpack.c.h.b16 %v1118
        %v1199 = vunpack.c.l.b16 %v1119
        %v1200 = vunpack.c.h.b16 %v1119
        %v1201 = vunpack.c.l.b16 %v1120
        %v1202 = vunpack.c.h.b16 %v1120
        %v1203 = vunpack.c.l.b16 %v1121
        %v1204 = vunpack.c.h.b16 %v1121
        %v1205 = vunpack.c.l.b16 %v1122
        %v1206 = vunpack.c.h.b16 %v1122
        %v1207 = vunpack.c.l.b16 %v1123
        %v1208 = vunpack.c.h.b16 %v1123
        %v1209 = vunpack.c.l.b16 %v1124
        %v1210 = vunpack.c.h.b16 %v1124
        %v1211 = vunpack.c.l.b16 %v1125
        %v1212 = vunpack.c.h.b16 %v1125
        %v1213 = vunpack.c.l.b16 %v1126
        %v1214 = vunpack.c.h.b16 %v1126
        %v1215 = vunpack.c.l.b16 %v1127
        %v1216 = vunpack.c.h.b16 %v1127
        %v1217 = vunpack.c.l.b16 %v1128
        %v1218 = vunpack.c.h.b16 %v1128
        %v1219 = vunpack.c.l.b16 %v1129
        %v1220 = vunpack.c.h.b16 %v1129
        %v1221 = vunpack.c.l.b16 %v1130
        %v1222 = vunpack.c.h.b16 %v1130
        %v1223 = vunpack.c.l.b16 %v1131
        %v1224 = vunpack.c.h.b16 %v1131
        %v1225 = vunpack.c.l.b16 %v1132
        %v1226 = vunpack.c.h.b16 %v1132
        %v1227 = vunpack.c.l.b16 %v1133
        %v1228 = vunpack.c.h.b16 %v1133
        %v1229 = vunpack.c.l.b16 %v1134
        %v1230 = vunpack.c.h.b16 %v1134
        %v1231 = vpack.c.b16 %v1171, %v1167
        %v1232 = vpack.c.b16 %v1172, %v1168
        %v1233 = vpack.c.b16 %v1173, %v1169
        %v1234 = vpack.c.b16 %v1174, %v1170
        %v1235 = vpack.c.b16 %v1179, %v1175
        %v1236 = vpack.c.b16 %v1180, %v1176
        %v1237 = vpack.c.b16 %v1181, %v1177
        %v1238 = vpack.c.b16 %v1182, %v1178
        %v1239 = vpack.c.b16 %v1187, %v1183
        %v1240 = vpack.c.b16 %v1188, %v1184
        %v1241 = vpack.c.b16 %v1189, %v1185
        %v1242 = vpack.c.b16 %v1190, %v1186
        %v1243 = vpack.c.b16 %v1195, %v1191
        %v1244 = vpack.c.b16 %v1196, %v1192
        %v1245 = vpack.c.b16 %v1197, %v1193
        %v1246 = vpack.c.b16 %v1198, %v1194
        %v1247 = vpack.c.b16 %v1203, %v1199
        %v1248 = vpack.c.b16 %v1204, %v1200
        %v1249 = vpack.c.b16 %v1205, %v1201
        %v1250 = vpack.c.b16 %v1206, %v1202
        %v1251 = vpack.c.b16 %v1211, %v1207
        %v1252 = vpack.c.b16 %v1212, %v1208
        %v1253 = vpack.c.b16 %v1213, %v1209
        %v1254 = vpack.c.b16 %v1214, %v1210
        %v1255 = vpack.c.b16 %v1219, %v1215
        %v1256 = vpack.c.b16 %v1220, %v1216
        %v1257 = vpack.c.b16 %v1221, %v1217
        %v1258 = vpack.c.b16 %v1222, %v1218
        %v1259 = vpack.c.b16 %v1227, %v1223
        %v1260 = vpack.c.b16 %v1228, %v1224
        %v1261 = vpack.c.b16 %v1229, %v1225
        %v1262 = vpack.c.b16 %v1230, %v1226
        %1295 = vmatprep.subr.bf16.mxu0 %v1260
        %1296 = vmatpush1.bf16.msra.mxu0 %v1259
        %1297 = vmatprep.subr.bf16.mxu0 %v1256
        %1298 = vmatpush1.bf16.msra.mxu0 %v1255
        %1299 = vmatprep.subr.bf16.mxu0 %v1252
        %1300 = vmatpush1.bf16.msra.mxu0 %v1251
        %1301 = vmatprep.subr.bf16.mxu0 %v1248
        %1302 = vmatpush1.bf16.msra.mxu0 %v1247
        %1303 = vmatprep.subr.bf16.mxu0 %v1244
        %1304 = vmatpush1.bf16.msra.mxu0 %v1243
        %1305 = vmatprep.subr.bf16.mxu0 %v1240
        %1306 = vmatpush1.bf16.msra.mxu0 %v1239
        %1307 = vmatprep.subr.bf16.mxu0 %v1236
        %1308 = vmatpush1.bf16.msra.mxu0 %v1235
        %1309 = vmatprep.subr.bf16.mxu0 %v1232
        %1310 = vmatpush1.bf16.msra.mxu0 %v1231
        %1311 = vmatprep.subr.bf16.mxu0 0
        %1312 = vmatpush2.bf16.msra.mxu0 0
        %1313 = vmatprep.subr.bf16.mxu0 0
        %1314 = vmatpush2.bf16.msra.mxu0 0
        %1315 = vmatprep.subr.bf16.mxu0 0
        %1316 = vmatpush2.bf16.msra.mxu0 0
        %1317 = vmatprep.subr.bf16.mxu0 0
        %1318 = vmatpush2.bf16.msra.mxu0 0
        %1319 = vmatprep.subr.bf16.mxu0 0
        %1320 = vmatpush2.bf16.msra.mxu0 0
        %1321 = vmatprep.subr.bf16.mxu0 0
        %1322 = vmatpush2.bf16.msra.mxu0 0
        %1323 = vmatprep.subr.bf16.mxu0 0
        %1324 = vmatpush2.bf16.msra.mxu0 0
        %1325 = vmatprep.subr.bf16.mxu0 0
        %1326 = vmatpush2.bf16.msra.mxu0 0
        %1327 = vmatprep.mubr.bf16.mxu0 0
        %1328 = vmatmul.mubr.bf16.gmra.mxu0 %v1102
        %v1329 = vpop.f32.mrf.mxu0
        %v1330 = vadd.f32 0.0, %v1329
        %v1331 = vpop.f32.mrf.mxu0
        %v1332 = vadd.f32 0.0, %v1331
        %v1333 = vpop.f32.mrf.mxu0
        %v1334 = vpop.f32.mrf.mxu0
        %1335 = vdwg.mxu0
        %1336 = vmatprep.subr.bf16.mxu0 %v1262
        %1337 = vmatpush1.bf16.msra.mxu0 %v1261
        %1338 = vmatprep.subr.bf16.mxu0 %v1258
        %1339 = vmatpush1.bf16.msra.mxu0 %v1257
        %1340 = vmatprep.subr.bf16.mxu0 %v1254
        %1341 = vmatpush1.bf16.msra.mxu0 %v1253
        %1342 = vmatprep.subr.bf16.mxu0 %v1250
        %1343 = vmatpush1.bf16.msra.mxu0 %v1249
        %1344 = vmatprep.subr.bf16.mxu0 %v1246
        %1345 = vmatpush1.bf16.msra.mxu0 %v1245
        %1346 = vmatprep.subr.bf16.mxu0 %v1242
        %1347 = vmatpush1.bf16.msra.mxu0 %v1241
        %1348 = vmatprep.subr.bf16.mxu0 %v1238
        %1349 = vmatpush1.bf16.msra.mxu0 %v1237
        %1350 = vmatprep.subr.bf16.mxu0 %v1234
        %1351 = vmatpush1.bf16.msra.mxu0 %v1233
        %1352 = vmatprep.subr.bf16.mxu0 0
        %1353 = vmatpush2.bf16.msra.mxu0 0
        %1354 = vmatprep.subr.bf16.mxu0 0
        %1355 = vmatpush2.bf16.msra.mxu0 0
        %1356 = vmatprep.subr.bf16.mxu0 0
        %1357 = vmatpush2.bf16.msra.mxu0 0
        %1358 = vmatprep.subr.bf16.mxu0 0
        %1359 = vmatpush2.bf16.msra.mxu0 0
        %1360 = vmatprep.subr.bf16.mxu0 0
        %1361 = vmatpush2.bf16.msra.mxu0 0
        %1362 = vmatprep.subr.bf16.mxu0 0
        %1363 = vmatpush2.bf16.msra.mxu0 0
        %1364 = vmatprep.subr.bf16.mxu0 0
        %1365 = vmatpush2.bf16.msra.mxu0 0
        %1366 = vmatprep.subr.bf16.mxu0 0
        %1367 = vmatpush2.bf16.msra.mxu0 0
        %1368 = vmatprep.mubr.bf16.mxu0 0
        %1369 = vmatmul.mubr.bf16.gmra.mxu0 %v1102
        %v1370 = vpop.f32.mrf.mxu0
        %v1371 = vadd.f32 0.0, %v1370
        %v1372 = vpop.f32.mrf.mxu0
        %v1373 = vadd.f32 0.0, %v1372
        %v1374 = vpop.f32.mrf.mxu0
        %v1375 = vpop.f32.mrf.mxu0
        %1376 = vdwg.mxu0
        %v1377 = vadd.f32 %v1098, %v1330
        %v1378 = vadd.f32 %v1099, %v1332
        %v1379 = vadd.f32 %v1100, %v1371
        %v1380 = vadd.f32 %v1101, %v1373
        %v1381 = vxor.u32 %v1377, 2147483648
        %v1382 = vmul.f32 %v1381, 1.442695
        %v1383 = vpow.pop %v1382
        %v1384 = vadd.f32 %v1383, 1.0
        %v1385 = vrcp.pop %v1384
        %v1386 = vmul.f32 1.0, %v1385
        %v1387 = vxor.u32 %v1378, 2147483648
        %v1388 = vmul.f32 %v1387, 1.442695
        %v1389 = vpow.pop %v1388
        %v1390 = vadd.f32 %v1389, 1.0
        %v1391 = vrcp.pop %v1390
        %v1392 = vmul.f32 1.0, %v1391
        %v1393 = vtanh.pop %v1379
        %v1394 = vxor.u32 %v1380, 2147483648
        %v1395 = vmul.f32 %v1394, 1.442695
        %v1396 = vpow.pop %v1395
        %v1397 = vadd.f32 %v1396, 1.0
        %v1398 = vrcp.pop %v1397
        %v1399 = vmul.f32 1.0, %v1398
        %v1400 = vmul.f32 %v1392, %v1085
        %v1401 = vmul.f32 %v1386, %v1393
        %v1402 = vadd.f32 %v1400, %v1401
        %v1403 = vtanh.pop %v1402
        %v1404 = vmul.f32 %v1399, %v1403
        %v1405 = vstv %s1091
        %vm1406 = vcmp.lt.s32.totalorder %v1405, %v758
        %v1407 = vsel %vm1406, %v1404, %v1084
        %v1408 = vsel %vm1406, %v1402, %v1085
        %v1409 = vsel %vm1406, %v1404, 0.0
        %s1410 = scalar_lea.vmem %s418, %s1092 [#allocation8]
        %1411 = vst [vmem:[%s1410] sm:$0xff] %v1409
        %s1412 = smul.u32 %s759, 2
        %s1413 = smul.u32 %s35, 5
        %s1414 = sadd.s32 %s1412, %s1413
        %s1415 = sadd.s32 %s767, %s1414
        %s1416 = smul.u32 %s1414, 8
        %s1417 = sshra.s32 %s1416, 3
        %s1418 = sand.u32 %s1416, 7
        %s1419 = smul.u32 %s1417, 4
        %s1420 = smul.addr %s1419, 8
        %s1421 = scalar_lea.vmem [#allocation2], %s1420
        %v1422 = vld [vmem:[%s1421] sm:$0xff]
        %v1423 = vld [vmem:[%s1421 + $0x8] sm:$0xff]
        %v1424 = vld [vmem:[%s1421 + $0x10] sm:$0xff]
        %v1425 = vld [vmem:[%s1421 + $0x18] sm:$0xff]
        %v1426 = vpack.c.bf16 %v1407, %v1407
        %v1427 = vld [vmem:[%s373] sm:$0xff]
        %v1428 = vld [vmem:[%s373 + $0x8] sm:$0xff]
        %v1429 = vld [vmem:[%s373 + $0x10] sm:$0xff]
        %v1430 = vld [vmem:[%s373 + $0x18] sm:$0xff]
        %v1431 = vld [vmem:[%s373 + $0x20] sm:$0xff]
        %v1432 = vld [vmem:[%s373 + $0x28] sm:$0xff]
        %v1433 = vld [vmem:[%s373 + $0x30] sm:$0xff]
        %v1434 = vld [vmem:[%s373 + $0x38] sm:$0xff]
        %v1435 = vld [vmem:[%s373 + $0x40] sm:$0xff]
        %v1436 = vld [vmem:[%s373 + $0x48] sm:$0xff]
        %v1437 = vld [vmem:[%s373 + $0x50] sm:$0xff]
        %v1438 = vld [vmem:[%s373 + $0x58] sm:$0xff]
        %v1439 = vld [vmem:[%s373 + $0x60] sm:$0xff]
        %v1440 = vld [vmem:[%s373 + $0x68] sm:$0xff]
        %v1441 = vld [vmem:[%s373 + $0x70] sm:$0xff]
        %v1442 = vld [vmem:[%s373 + $0x78] sm:$0xff]
        %v1443 = vld [vmem:[%s373 + $0x80] sm:$0xff]
        %v1444 = vld [vmem:[%s373 + $0x88] sm:$0xff]
        %v1445 = vld [vmem:[%s373 + $0x90] sm:$0xff]
        %v1446 = vld [vmem:[%s373 + $0x98] sm:$0xff]
        %v1447 = vld [vmem:[%s373 + $0xa0] sm:$0xff]
        %v1448 = vld [vmem:[%s373 + $0xa8] sm:$0xff]
        %v1449 = vld [vmem:[%s373 + $0xb0] sm:$0xff]
        %v1450 = vld [vmem:[%s373 + $0xb8] sm:$0xff]
        %v1451 = vld [vmem:[%s373 + $0xc0] sm:$0xff]
        %v1452 = vld [vmem:[%s373 + $0xc8] sm:$0xff]
        %v1453 = vld [vmem:[%s373 + $0xd0] sm:$0xff]
        %v1454 = vld [vmem:[%s373 + $0xd8] sm:$0xff]
        %v1455 = vld [vmem:[%s373 + $0xe0] sm:$0xff]
        %v1456 = vld [vmem:[%s373 + $0xe8] sm:$0xff]
        %v1457 = vld [vmem:[%s373 + $0xf0] sm:$0xff]
        %v1458 = vld [vmem:[%s373 + $0xf8] sm:$0xff]
        %v1491 = vunpack.c.l.b16 %v1427
        %v1492 = vunpack.c.h.b16 %v1427
        %v1493 = vunpack.c.l.b16 %v1428
        %v1494 = vunpack.c.h.b16 %v1428
        %v1495 = vunpack.c.l.b16 %v1429
        %v1496 = vunpack.c.h.b16 %v1429
        %v1497 = vunpack.c.l.b16 %v1430
        %v1498 = vunpack.c.h.b16 %v1430
        %v1499 = vunpack.c.l.b16 %v1431
        %v1500 = vunpack.c.h.b16 %v1431
        %v1501 = vunpack.c.l.b16 %v1432
        %v1502 = vunpack.c.h.b16 %v1432
        %v1503 = vunpack.c.l.b16 %v1433
        %v1504 = vunpack.c.h.b16 %v1433
        %v1505 = vunpack.c.l.b16 %v1434
        %v1506 = vunpack.c.h.b16 %v1434
        %v1507 = vunpack.c.l.b16 %v1435
        %v1508 = vunpack.c.h.b16 %v1435
        %v1509 = vunpack.c.l.b16 %v1436
        %v1510 = vunpack.c.h.b16 %v1436
        %v1511 = vunpack.c.l.b16 %v1437
        %v1512 = vunpack.c.h.b16 %v1437
        %v1513 = vunpack.c.l.b16 %v1438
        %v1514 = vunpack.c.h.b16 %v1438
        %v1515 = vunpack.c.l.b16 %v1439
        %v1516 = vunpack.c.h.b16 %v1439
        %v1517 = vunpack.c.l.b16 %v1440
        %v1518 = vunpack.c.h.b16 %v1440
        %v1519 = vunpack.c.l.b16 %v1441
        %v1520 = vunpack.c.h.b16 %v1441
        %v1521 = vunpack.c.l.b16 %v1442
        %v1522 = vunpack.c.h.b16 %v1442
        %v1523 = vunpack.c.l.b16 %v1443
        %v1524 = vunpack.c.h.b16 %v1443
        %v1525 = vunpack.c.l.b16 %v1444
        %v1526 = vunpack.c.h.b16 %v1444
        %v1527 = vunpack.c.l.b16 %v1445
        %v1528 = vunpack.c.h.b16 %v1445
        %v1529 = vunpack.c.l.b16 %v1446
        %v1530 = vunpack.c.h.b16 %v1446
        %v1531 = vunpack.c.l.b16 %v1447
        %v1532 = vunpack.c.h.b16 %v1447
        %v1533 = vunpack.c.l.b16 %v1448
        %v1534 = vunpack.c.h.b16 %v1448
        %v1535 = vunpack.c.l.b16 %v1449
        %v1536 = vunpack.c.h.b16 %v1449
        %v1537 = vunpack.c.l.b16 %v1450
        %v1538 = vunpack.c.h.b16 %v1450
        %v1539 = vunpack.c.l.b16 %v1451
        %v1540 = vunpack.c.h.b16 %v1451
        %v1541 = vunpack.c.l.b16 %v1452
        %v1542 = vunpack.c.h.b16 %v1452
        %v1543 = vunpack.c.l.b16 %v1453
        %v1544 = vunpack.c.h.b16 %v1453
        %v1545 = vunpack.c.l.b16 %v1454
        %v1546 = vunpack.c.h.b16 %v1454
        %v1547 = vunpack.c.l.b16 %v1455
        %v1548 = vunpack.c.h.b16 %v1455
        %v1549 = vunpack.c.l.b16 %v1456
        %v1550 = vunpack.c.h.b16 %v1456
        %v1551 = vunpack.c.l.b16 %v1457
        %v1552 = vunpack.c.h.b16 %v1457
        %v1553 = vunpack.c.l.b16 %v1458
        %v1554 = vunpack.c.h.b16 %v1458
        %v1555 = vpack.c.b16 %v1495, %v1491
        %v1556 = vpack.c.b16 %v1496, %v1492
        %v1557 = vpack.c.b16 %v1497, %v1493
        %v1558 = vpack.c.b16 %v1498, %v1494
        %v1559 = vpack.c.b16 %v1503, %v1499
        %v1560 = vpack.c.b16 %v1504, %v1500
        %v1561 = vpack.c.b16 %v1505, %v1501
        %v1562 = vpack.c.b16 %v1506, %v1502
        %v1563 = vpack.c.b16 %v1511, %v1507
        %v1564 = vpack.c.b16 %v1512, %v1508
        %v1565 = vpack.c.b16 %v1513, %v1509
        %v1566 = vpack.c.b16 %v1514, %v1510
        %v1567 = vpack.c.b16 %v1519, %v1515
        %v1568 = vpack.c.b16 %v1520, %v1516
        %v1569 = vpack.c.b16 %v1521, %v1517
        %v1570 = vpack.c.b16 %v1522, %v1518
        %v1571 = vpack.c.b16 %v1527, %v1523
        %v1572 = vpack.c.b16 %v1528, %v1524
        %v1573 = vpack.c.b16 %v1529, %v1525
        %v1574 = vpack.c.b16 %v1530, %v1526
        %v1575 = vpack.c.b16 %v1535, %v1531
        %v1576 = vpack.c.b16 %v1536, %v1532
        %v1577 = vpack.c.b16 %v1537, %v1533
        %v1578 = vpack.c.b16 %v1538, %v1534
        %v1579 = vpack.c.b16 %v1543, %v1539
        %v1580 = vpack.c.b16 %v1544, %v1540
        %v1581 = vpack.c.b16 %v1545, %v1541
        %v1582 = vpack.c.b16 %v1546, %v1542
        %v1583 = vpack.c.b16 %v1551, %v1547
        %v1584 = vpack.c.b16 %v1552, %v1548
        %v1585 = vpack.c.b16 %v1553, %v1549
        %v1586 = vpack.c.b16 %v1554, %v1550
        %1619 = vmatprep.subr.bf16.mxu0 %v1584
        %1620 = vmatpush1.bf16.msra.mxu0 %v1583
        %1621 = vmatprep.subr.bf16.mxu0 %v1580
        %1622 = vmatpush1.bf16.msra.mxu0 %v1579
        %1623 = vmatprep.subr.bf16.mxu0 %v1576
        %1624 = vmatpush1.bf16.msra.mxu0 %v1575
        %1625 = vmatprep.subr.bf16.mxu0 %v1572
        %1626 = vmatpush1.bf16.msra.mxu0 %v1571
        %1627 = vmatprep.subr.bf16.mxu0 %v1568
        %1628 = vmatpush1.bf16.msra.mxu0 %v1567
        %1629 = vmatprep.subr.bf16.mxu0 %v1564
        %1630 = vmatpush1.bf16.msra.mxu0 %v1563
        %1631 = vmatprep.subr.bf16.mxu0 %v1560
        %1632 = vmatpush1.bf16.msra.mxu0 %v1559
        %1633 = vmatprep.subr.bf16.mxu0 %v1556
        %1634 = vmatpush1.bf16.msra.mxu0 %v1555
        %1635 = vmatprep.subr.bf16.mxu0 0
        %1636 = vmatpush2.bf16.msra.mxu0 0
        %1637 = vmatprep.subr.bf16.mxu0 0
        %1638 = vmatpush2.bf16.msra.mxu0 0
        %1639 = vmatprep.subr.bf16.mxu0 0
        %1640 = vmatpush2.bf16.msra.mxu0 0
        %1641 = vmatprep.subr.bf16.mxu0 0
        %1642 = vmatpush2.bf16.msra.mxu0 0
        %1643 = vmatprep.subr.bf16.mxu0 0
        %1644 = vmatpush2.bf16.msra.mxu0 0
        %1645 = vmatprep.subr.bf16.mxu0 0
        %1646 = vmatpush2.bf16.msra.mxu0 0
        %1647 = vmatprep.subr.bf16.mxu0 0
        %1648 = vmatpush2.bf16.msra.mxu0 0
        %1649 = vmatprep.subr.bf16.mxu0 0
        %1650 = vmatpush2.bf16.msra.mxu0 0
        %1651 = vmatprep.mubr.bf16.mxu0 0
        %1652 = vmatmul.mubr.bf16.gmra.mxu0 %v1426
        %v1653 = vpop.f32.mrf.mxu0
        %v1654 = vadd.f32 0.0, %v1653
        %v1655 = vpop.f32.mrf.mxu0
        %v1656 = vadd.f32 0.0, %v1655
        %v1657 = vpop.f32.mrf.mxu0
        %v1658 = vpop.f32.mrf.mxu0
        %1659 = vdwg.mxu0
        %1660 = vmatprep.subr.bf16.mxu0 %v1586
        %1661 = vmatpush1.bf16.msra.mxu0 %v1585
        %1662 = vmatprep.subr.bf16.mxu0 %v1582
        %1663 = vmatpush1.bf16.msra.mxu0 %v1581
        %1664 = vmatprep.subr.bf16.mxu0 %v1578
        %1665 = vmatpush1.bf16.msra.mxu0 %v1577
        %1666 = vmatprep.subr.bf16.mxu0 %v1574
        %1667 = vmatpush1.bf16.msra.mxu0 %v1573
        %1668 = vmatprep.subr.bf16.mxu0 %v1570
        %1669 = vmatpush1.bf16.msra.mxu0 %v1569
        %1670 = vmatprep.subr.bf16.mxu0 %v1566
        %1671 = vmatpush1.bf16.msra.mxu0 %v1565
        %1672 = vmatprep.subr.bf16.mxu0 %v1562
        %1673 = vmatpush1.bf16.msra.mxu0 %v1561
        %1674 = vmatprep.subr.bf16.mxu0 %v1558
        %1675 = vmatpush1.bf16.msra.mxu0 %v1557
        %1676 = vmatprep.subr.bf16.mxu0 0
        %1677 = vmatpush2.bf16.msra.mxu0 0
        %1678 = vmatprep.subr.bf16.mxu0 0
        %1679 = vmatpush2.bf16.msra.mxu0 0
        %1680 = vmatprep.subr.bf16.mxu0 0
        %1681 = vmatpush2.bf16.msra.mxu0 0
        %1682 = vmatprep.subr.bf16.mxu0 0
        %1683 = vmatpush2.bf16.msra.mxu0 0
        %1684 = vmatprep.subr.bf16.mxu0 0
        %1685 = vmatpush2.bf16.msra.mxu0 0
        %1686 = vmatprep.subr.bf16.mxu0 0
        %1687 = vmatpush2.bf16.msra.mxu0 0
        %1688 = vmatprep.subr.bf16.mxu0 0
        %1689 = vmatpush2.bf16.msra.mxu0 0
        %1690 = vmatprep.subr.bf16.mxu0 0
        %1691 = vmatpush2.bf16.msra.mxu0 0
        %1692 = vmatprep.mubr.bf16.mxu0 0
        %1693 = vmatmul.mubr.bf16.gmra.mxu0 %v1426
        %v1694 = vpop.f32.mrf.mxu0
        %v1695 = vadd.f32 0.0, %v1694
        %v1696 = vpop.f32.mrf.mxu0
        %v1697 = vadd.f32 0.0, %v1696
        %v1698 = vpop.f32.mrf.mxu0
        %v1699 = vpop.f32.mrf.mxu0
        %1700 = vdwg.mxu0
        %v1701 = vadd.f32 %v1422, %v1654
        %v1702 = vadd.f32 %v1423, %v1656
        %v1703 = vadd.f32 %v1424, %v1695
        %v1704 = vadd.f32 %v1425, %v1697
        %v1705 = vxor.u32 %v1701, 2147483648
        %v1706 = vmul.f32 %v1705, 1.442695
        %v1707 = vpow.pop %v1706
        %v1708 = vadd.f32 %v1707, 1.0
        %v1709 = vrcp.pop %v1708
        %v1710 = vmul.f32 1.0, %v1709
        %v1711 = vxor.u32 %v1702, 2147483648
        %v1712 = vmul.f32 %v1711, 1.442695
        %v1713 = vpow.pop %v1712
        %v1714 = vadd.f32 %v1713, 1.0
        %v1715 = vrcp.pop %v1714
        %v1716 = vmul.f32 1.0, %v1715
        %v1717 = vtanh.pop %v1703
        %v1718 = vxor.u32 %v1704, 2147483648
        %v1719 = vmul.f32 %v1718, 1.442695
        %v1720 = vpow.pop %v1719
        %v1721 = vadd.f32 %v1720, 1.0
        %v1722 = vrcp.pop %v1721
        %v1723 = vmul.f32 1.0, %v1722
        %v1724 = vmul.f32 %v1716, %v1408
        %v1725 = vmul.f32 %v1710, %v1717
        %v1726 = vadd.f32 %v1724, %v1725
        %v1727 = vtanh.pop %v1726
        %v1728 = vmul.f32 %v1723, %v1727
        %v1729 = vstv %s1415
        %vm1730 = vcmp.lt.s32.totalorder %v1729, %v758
        %v1731 = vsel %vm1730, %v1728, %v1407
        %v1732 = vsel %vm1730, %v1726, %v1408
        %v1733 = vsel %vm1730, %v1728, 0.0
        %s1734 = scalar_lea.vmem %s418, %s1416 [#allocation8]
        %1735 = vst [vmem:[%s1734] sm:$0xff] %v1733
        %s1736 = smul.u32 %s759, 3
        %s1737 = smul.u32 %s35, 4
        %s1738 = sadd.s32 %s1736, %s1737
        %s1739 = sadd.s32 %s767, %s1738
        %s1740 = smul.u32 %s1738, 8
        %s1741 = sshra.s32 %s1740, 3
        %s1742 = sand.u32 %s1740, 7
        %s1743 = smul.u32 %s1741, 4
        %s1744 = smul.addr %s1743, 8
        %s1745 = scalar_lea.vmem [#allocation2], %s1744
        %v1746 = vld [vmem:[%s1745] sm:$0xff]
        %v1747 = vld [vmem:[%s1745 + $0x8] sm:$0xff]
        %v1748 = vld [vmem:[%s1745 + $0x10] sm:$0xff]
        %v1749 = vld [vmem:[%s1745 + $0x18] sm:$0xff]
        %v1750 = vpack.c.bf16 %v1731, %v1731
        %v1751 = vld [vmem:[%s373] sm:$0xff]
        %v1752 = vld [vmem:[%s373 + $0x8] sm:$0xff]
        %v1753 = vld [vmem:[%s373 + $0x10] sm:$0xff]
        %v1754 = vld [vmem:[%s373 + $0x18] sm:$0xff]
        %v1755 = vld [vmem:[%s373 + $0x20] sm:$0xff]
        %v1756 = vld [vmem:[%s373 + $0x28] sm:$0xff]
        %v1757 = vld [vmem:[%s373 + $0x30] sm:$0xff]
        %v1758 = vld [vmem:[%s373 + $0x38] sm:$0xff]
        %v1759 = vld [vmem:[%s373 + $0x40] sm:$0xff]
        %v1760 = vld [vmem:[%s373 + $0x48] sm:$0xff]
        %v1761 = vld [vmem:[%s373 + $0x50] sm:$0xff]
        %v1762 = vld [vmem:[%s373 + $0x58] sm:$0xff]
        %v1763 = vld [vmem:[%s373 + $0x60] sm:$0xff]
        %v1764 = vld [vmem:[%s373 + $0x68] sm:$0xff]
        %v1765 = vld [vmem:[%s373 + $0x70] sm:$0xff]
        %v1766 = vld [vmem:[%s373 + $0x78] sm:$0xff]
        %v1767 = vld [vmem:[%s373 + $0x80] sm:$0xff]
        %v1768 = vld [vmem:[%s373 + $0x88] sm:$0xff]
        %v1769 = vld [vmem:[%s373 + $0x90] sm:$0xff]
        %v1770 = vld [vmem:[%s373 + $0x98] sm:$0xff]
        %v1771 = vld [vmem:[%s373 + $0xa0] sm:$0xff]
        %v1772 = vld [vmem:[%s373 + $0xa8] sm:$0xff]
        %v1773 = vld [vmem:[%s373 + $0xb0] sm:$0xff]
        %v1774 = vld [vmem:[%s373 + $0xb8] sm:$0xff]
        %v1775 = vld [vmem:[%s373 + $0xc0] sm:$0xff]
        %v1776 = vld [vmem:[%s373 + $0xc8] sm:$0xff]
        %v1777 = vld [vmem:[%s373 + $0xd0] sm:$0xff]
        %v1778 = vld [vmem:[%s373 + $0xd8] sm:$0xff]
        %v1779 = vld [vmem:[%s373 + $0xe0] sm:$0xff]
        %v1780 = vld [vmem:[%s373 + $0xe8] sm:$0xff]
        %v1781 = vld [vmem:[%s373 + $0xf0] sm:$0xff]
        %v1782 = vld [vmem:[%s373 + $0xf8] sm:$0xff]
        %v1815 = vunpack.c.l.b16 %v1751
        %v1816 = vunpack.c.h.b16 %v1751
        %v1817 = vunpack.c.l.b16 %v1752
        %v1818 = vunpack.c.h.b16 %v1752
        %v1819 = vunpack.c.l.b16 %v1753
        %v1820 = vunpack.c.h.b16 %v1753
        %v1821 = vunpack.c.l.b16 %v1754
        %v1822 = vunpack.c.h.b16 %v1754
        %v1823 = vunpack.c.l.b16 %v1755
        %v1824 = vunpack.c.h.b16 %v1755
        %v1825 = vunpack.c.l.b16 %v1756
        %v1826 = vunpack.c.h.b16 %v1756
        %v1827 = vunpack.c.l.b16 %v1757
        %v1828 = vunpack.c.h.b16 %v1757
        %v1829 = vunpack.c.l.b16 %v1758
        %v1830 = vunpack.c.h.b16 %v1758
        %v1831 = vunpack.c.l.b16 %v1759
        %v1832 = vunpack.c.h.b16 %v1759
        %v1833 = vunpack.c.l.b16 %v1760
        %v1834 = vunpack.c.h.b16 %v1760
        %v1835 = vunpack.c.l.b16 %v1761
        %v1836 = vunpack.c.h.b16 %v1761
        %v1837 = vunpack.c.l.b16 %v1762
        %v1838 = vunpack.c.h.b16 %v1762
        %v1839 = vunpack.c.l.b16 %v1763
        %v1840 = vunpack.c.h.b16 %v1763
        %v1841 = vunpack.c.l.b16 %v1764
        %v1842 = vunpack.c.h.b16 %v1764
        %v1843 = vunpack.c.l.b16 %v1765
        %v1844 = vunpack.c.h.b16 %v1765
        %v1845 = vunpack.c.l.b16 %v1766
        %v1846 = vunpack.c.h.b16 %v1766
        %v1847 = vunpack.c.l.b16 %v1767
        %v1848 = vunpack.c.h.b16 %v1767
        %v1849 = vunpack.c.l.b16 %v1768
        %v1850 = vunpack.c.h.b16 %v1768
        %v1851 = vunpack.c.l.b16 %v1769
        %v1852 = vunpack.c.h.b16 %v1769
        %v1853 = vunpack.c.l.b16 %v1770
        %v1854 = vunpack.c.h.b16 %v1770
        %v1855 = vunpack.c.l.b16 %v1771
        %v1856 = vunpack.c.h.b16 %v1771
        %v1857 = vunpack.c.l.b16 %v1772
        %v1858 = vunpack.c.h.b16 %v1772
        %v1859 = vunpack.c.l.b16 %v1773
        %v1860 = vunpack.c.h.b16 %v1773
        %v1861 = vunpack.c.l.b16 %v1774
        %v1862 = vunpack.c.h.b16 %v1774
        %v1863 = vunpack.c.l.b16 %v1775
        %v1864 = vunpack.c.h.b16 %v1775
        %v1865 = vunpack.c.l.b16 %v1776
        %v1866 = vunpack.c.h.b16 %v1776
        %v1867 = vunpack.c.l.b16 %v1777
        %v1868 = vunpack.c.h.b16 %v1777
        %v1869 = vunpack.c.l.b16 %v1778
        %v1870 = vunpack.c.h.b16 %v1778
        %v1871 = vunpack.c.l.b16 %v1779
        %v1872 = vunpack.c.h.b16 %v1779
        %v1873 = vunpack.c.l.b16 %v1780
        %v1874 = vunpack.c.h.b16 %v1780
        %v1875 = vunpack.c.l.b16 %v1781
        %v1876 = vunpack.c.h.b16 %v1781
        %v1877 = vunpack.c.l.b16 %v1782
        %v1878 = vunpack.c.h.b16 %v1782
        %v1879 = vpack.c.b16 %v1819, %v1815
        %v1880 = vpack.c.b16 %v1820, %v1816
        %v1881 = vpack.c.b16 %v1821, %v1817
        %v1882 = vpack.c.b16 %v1822, %v1818
        %v1883 = vpack.c.b16 %v1827, %v1823
        %v1884 = vpack.c.b16 %v1828, %v1824
        %v1885 = vpack.c.b16 %v1829, %v1825
        %v1886 = vpack.c.b16 %v1830, %v1826
        %v1887 = vpack.c.b16 %v1835, %v1831
        %v1888 = vpack.c.b16 %v1836, %v1832
        %v1889 = vpack.c.b16 %v1837, %v1833
        %v1890 = vpack.c.b16 %v1838, %v1834
        %v1891 = vpack.c.b16 %v1843, %v1839
        %v1892 = vpack.c.b16 %v1844, %v1840
        %v1893 = vpack.c.b16 %v1845, %v1841
        %v1894 = vpack.c.b16 %v1846, %v1842
        %v1895 = vpack.c.b16 %v1851, %v1847
        %v1896 = vpack.c.b16 %v1852, %v1848
        %v1897 = vpack.c.b16 %v1853, %v1849
        %v1898 = vpack.c.b16 %v1854, %v1850
        %v1899 = vpack.c.b16 %v1859, %v1855
        %v1900 = vpack.c.b16 %v1860, %v1856
        %v1901 = vpack.c.b16 %v1861, %v1857
        %v1902 = vpack.c.b16 %v1862, %v1858
        %v1903 = vpack.c.b16 %v1867, %v1863
        %v1904 = vpack.c.b16 %v1868, %v1864
        %v1905 = vpack.c.b16 %v1869, %v1865
        %v1906 = vpack.c.b16 %v1870, %v1866
        %v1907 = vpack.c.b16 %v1875, %v1871
        %v1908 = vpack.c.b16 %v1876, %v1872
        %v1909 = vpack.c.b16 %v1877, %v1873
        %v1910 = vpack.c.b16 %v1878, %v1874
        %1943 = vmatprep.subr.bf16.mxu0 %v1908
        %1944 = vmatpush1.bf16.msra.mxu0 %v1907
        %1945 = vmatprep.subr.bf16.mxu0 %v1904
        %1946 = vmatpush1.bf16.msra.mxu0 %v1903
        %1947 = vmatprep.subr.bf16.mxu0 %v1900
        %1948 = vmatpush1.bf16.msra.mxu0 %v1899
        %1949 = vmatprep.subr.bf16.mxu0 %v1896
        %1950 = vmatpush1.bf16.msra.mxu0 %v1895
        %1951 = vmatprep.subr.bf16.mxu0 %v1892
        %1952 = vmatpush1.bf16.msra.mxu0 %v1891
        %1953 = vmatprep.subr.bf16.mxu0 %v1888
        %1954 = vmatpush1.bf16.msra.mxu0 %v1887
        %1955 = vmatprep.subr.bf16.mxu0 %v1884
        %1956 = vmatpush1.bf16.msra.mxu0 %v1883
        %1957 = vmatprep.subr.bf16.mxu0 %v1880
        %1958 = vmatpush1.bf16.msra.mxu0 %v1879
        %1959 = vmatprep.subr.bf16.mxu0 0
        %1960 = vmatpush2.bf16.msra.mxu0 0
        %1961 = vmatprep.subr.bf16.mxu0 0
        %1962 = vmatpush2.bf16.msra.mxu0 0
        %1963 = vmatprep.subr.bf16.mxu0 0
        %1964 = vmatpush2.bf16.msra.mxu0 0
        %1965 = vmatprep.subr.bf16.mxu0 0
        %1966 = vmatpush2.bf16.msra.mxu0 0
        %1967 = vmatprep.subr.bf16.mxu0 0
        %1968 = vmatpush2.bf16.msra.mxu0 0
        %1969 = vmatprep.subr.bf16.mxu0 0
        %1970 = vmatpush2.bf16.msra.mxu0 0
        %1971 = vmatprep.subr.bf16.mxu0 0
        %1972 = vmatpush2.bf16.msra.mxu0 0
        %1973 = vmatprep.subr.bf16.mxu0 0
        %1974 = vmatpush2.bf16.msra.mxu0 0
        %1975 = vmatprep.mubr.bf16.mxu0 0
        %1976 = vmatmul.mubr.bf16.gmra.mxu0 %v1750
        %v1977 = vpop.f32.mrf.mxu0
        %v1978 = vadd.f32 0.0, %v1977
        %v1979 = vpop.f32.mrf.mxu0
        %v1980 = vadd.f32 0.0, %v1979
        %v1981 = vpop.f32.mrf.mxu0
        %v1982 = vpop.f32.mrf.mxu0
        %1983 = vdwg.mxu0
        %1984 = vmatprep.subr.bf16.mxu0 %v1910
        %1985 = vmatpush1.bf16.msra.mxu0 %v1909
        %1986 = vmatprep.subr.bf16.mxu0 %v1906
        %1987 = vmatpush1.bf16.msra.mxu0 %v1905
        %1988 = vmatprep.subr.bf16.mxu0 %v1902
        %1989 = vmatpush1.bf16.msra.mxu0 %v1901
        %1990 = vmatprep.subr.bf16.mxu0 %v1898
        %1991 = vmatpush1.bf16.msra.mxu0 %v1897
        %1992 = vmatprep.subr.bf16.mxu0 %v1894
        %1993 = vmatpush1.bf16.msra.mxu0 %v1893
        %1994 = vmatprep.subr.bf16.mxu0 %v1890
        %1995 = vmatpush1.bf16.msra.mxu0 %v1889
        %1996 = vmatprep.subr.bf16.mxu0 %v1886
        %1997 = vmatpush1.bf16.msra.mxu0 %v1885
        %1998 = vmatprep.subr.bf16.mxu0 %v1882
        %1999 = vmatpush1.bf16.msra.mxu0 %v1881
        %2000 = vmatprep.subr.bf16.mxu0 0
        %2001 = vmatpush2.bf16.msra.mxu0 0
        %2002 = vmatprep.subr.bf16.mxu0 0
        %2003 = vmatpush2.bf16.msra.mxu0 0
        %2004 = vmatprep.subr.bf16.mxu0 0
        %2005 = vmatpush2.bf16.msra.mxu0 0
        %2006 = vmatprep.subr.bf16.mxu0 0
        %2007 = vmatpush2.bf16.msra.mxu0 0
        %2008 = vmatprep.subr.bf16.mxu0 0
        %2009 = vmatpush2.bf16.msra.mxu0 0
        %2010 = vmatprep.subr.bf16.mxu0 0
        %2011 = vmatpush2.bf16.msra.mxu0 0
        %2012 = vmatprep.subr.bf16.mxu0 0
        %2013 = vmatpush2.bf16.msra.mxu0 0
        %2014 = vmatprep.subr.bf16.mxu0 0
        %2015 = vmatpush2.bf16.msra.mxu0 0
        %2016 = vmatprep.mubr.bf16.mxu0 0
        %2017 = vmatmul.mubr.bf16.gmra.mxu0 %v1750
        %v2018 = vpop.f32.mrf.mxu0
        %v2019 = vadd.f32 0.0, %v2018
        %v2020 = vpop.f32.mrf.mxu0
        %v2021 = vadd.f32 0.0, %v2020
        %v2022 = vpop.f32.mrf.mxu0
        %v2023 = vpop.f32.mrf.mxu0
        %2024 = vdwg.mxu0
        %v2025 = vadd.f32 %v1746, %v1978
        %v2026 = vadd.f32 %v1747, %v1980
        %v2027 = vadd.f32 %v1748, %v2019
        %v2028 = vadd.f32 %v1749, %v2021
        %v2029 = vxor.u32 %v2025, 2147483648
        %v2030 = vmul.f32 %v2029, 1.442695
        %v2031 = vpow.pop %v2030
        %v2032 = vadd.f32 %v2031, 1.0
        %v2033 = vrcp.pop %v2032
        %v2034 = vmul.f32 1.0, %v2033
        %v2035 = vxor.u32 %v2026, 2147483648
        %v2036 = vmul.f32 %v2035, 1.442695
        %v2037 = vpow.pop %v2036
        %v2038 = vadd.f32 %v2037, 1.0
        %v2039 = vrcp.pop %v2038
        %v2040 = vmul.f32 1.0, %v2039
        %v2041 = vtanh.pop %v2027
        %v2042 = vxor.u32 %v2028, 2147483648
        %v2043 = vmul.f32 %v2042, 1.442695
        %v2044 = vpow.pop %v2043
        %v2045 = vadd.f32 %v2044, 1.0
        %v2046 = vrcp.pop %v2045
        %v2047 = vmul.f32 1.0, %v2046
        %v2048 = vmul.f32 %v2040, %v1732
        %v2049 = vmul.f32 %v2034, %v2041
        %v2050 = vadd.f32 %v2048, %v2049
        %v2051 = vtanh.pop %v2050
        %v2052 = vmul.f32 %v2047, %v2051
        %v2053 = vstv %s1739
        %vm2054 = vcmp.lt.s32.totalorder %v2053, %v758
        %v2055 = vsel %vm2054, %v2052, %v1731
        %v2056 = vsel %vm2054, %v2050, %v1732
        %v2057 = vsel %vm2054, %v2052, 0.0
        %s2058 = scalar_lea.vmem %s418, %s1740 [#allocation8]
        %2059 = vst [vmem:[%s2058] sm:$0xff] %v2057
        %s2060 = smul.u32 %s759, 4
        %s2061 = smul.u32 %s35, 3
        %s2062 = sadd.s32 %s2060, %s2061
        %s2063 = sadd.s32 %s767, %s2062
        %s2064 = smul.u32 %s2062, 8
        %s2065 = sshra.s32 %s2064, 3
        %s2066 = sand.u32 %s2064, 7
        %s2067 = smul.u32 %s2065, 4
        %s2068 = smul.addr %s2067, 8
        %s2069 = scalar_lea.vmem [#allocation2], %s2068
        %v2070 = vld [vmem:[%s2069] sm:$0xff]
        %v2071 = vld [vmem:[%s2069 + $0x8] sm:$0xff]
        %v2072 = vld [vmem:[%s2069 + $0x10] sm:$0xff]
        %v2073 = vld [vmem:[%s2069 + $0x18] sm:$0xff]
        %v2074 = vpack.c.bf16 %v2055, %v2055
        %v2075 = vld [vmem:[%s373] sm:$0xff]
        %v2076 = vld [vmem:[%s373 + $0x8] sm:$0xff]
        %v2077 = vld [vmem:[%s373 + $0x10] sm:$0xff]
        %v2078 = vld [vmem:[%s373 + $0x18] sm:$0xff]
        %v2079 = vld [vmem:[%s373 + $0x20] sm:$0xff]
        %v2080 = vld [vmem:[%s373 + $0x28] sm:$0xff]
        %v2081 = vld [vmem:[%s373 + $0x30] sm:$0xff]
        %v2082 = vld [vmem:[%s373 + $0x38] sm:$0xff]
        %v2083 = vld [vmem:[%s373 + $0x40] sm:$0xff]
        %v2084 = vld [vmem:[%s373 + $0x48] sm:$0xff]
        %v2085 = vld [vmem:[%s373 + $0x50] sm:$0xff]
        %v2086 = vld [vmem:[%s373 + $0x58] sm:$0xff]
        %v2087 = vld [vmem:[%s373 + $0x60] sm:$0xff]
        %v2088 = vld [vmem:[%s373 + $0x68] sm:$0xff]
        %v2089 = vld [vmem:[%s373 + $0x70] sm:$0xff]
        %v2090 = vld [vmem:[%s373 + $0x78] sm:$0xff]
        %v2091 = vld [vmem:[%s373 + $0x80] sm:$0xff]
        %v2092 = vld [vmem:[%s373 + $0x88] sm:$0xff]
        %v2093 = vld [vmem:[%s373 + $0x90] sm:$0xff]
        %v2094 = vld [vmem:[%s373 + $0x98] sm:$0xff]
        %v2095 = vld [vmem:[%s373 + $0xa0] sm:$0xff]
        %v2096 = vld [vmem:[%s373 + $0xa8] sm:$0xff]
        %v2097 = vld [vmem:[%s373 + $0xb0] sm:$0xff]
        %v2098 = vld [vmem:[%s373 + $0xb8] sm:$0xff]
        %v2099 = vld [vmem:[%s373 + $0xc0] sm:$0xff]
        %v2100 = vld [vmem:[%s373 + $0xc8] sm:$0xff]
        %v2101 = vld [vmem:[%s373 + $0xd0] sm:$0xff]
        %v2102 = vld [vmem:[%s373 + $0xd8] sm:$0xff]
        %v2103 = vld [vmem:[%s373 + $0xe0] sm:$0xff]
        %v2104 = vld [vmem:[%s373 + $0xe8] sm:$0xff]
        %v2105 = vld [vmem:[%s373 + $0xf0] sm:$0xff]
        %v2106 = vld [vmem:[%s373 + $0xf8] sm:$0xff]
        %v2139 = vunpack.c.l.b16 %v2075
        %v2140 = vunpack.c.h.b16 %v2075
        %v2141 = vunpack.c.l.b16 %v2076
        %v2142 = vunpack.c.h.b16 %v2076
        %v2143 = vunpack.c.l.b16 %v2077
        %v2144 = vunpack.c.h.b16 %v2077
        %v2145 = vunpack.c.l.b16 %v2078
        %v2146 = vunpack.c.h.b16 %v2078
        %v2147 = vunpack.c.l.b16 %v2079
        %v2148 = vunpack.c.h.b16 %v2079
        %v2149 = vunpack.c.l.b16 %v2080
        %v2150 = vunpack.c.h.b16 %v2080
        %v2151 = vunpack.c.l.b16 %v2081
        %v2152 = vunpack.c.h.b16 %v2081
        %v2153 = vunpack.c.l.b16 %v2082
        %v2154 = vunpack.c.h.b16 %v2082
        %v2155 = vunpack.c.l.b16 %v2083
        %v2156 = vunpack.c.h.b16 %v2083
        %v2157 = vunpack.c.l.b16 %v2084
        %v2158 = vunpack.c.h.b16 %v2084
        %v2159 = vunpack.c.l.b16 %v2085
        %v2160 = vunpack.c.h.b16 %v2085
        %v2161 = vunpack.c.l.b16 %v2086
        %v2162 = vunpack.c.h.b16 %v2086
        %v2163 = vunpack.c.l.b16 %v2087
        %v2164 = vunpack.c.h.b16 %v2087
        %v2165 = vunpack.c.l.b16 %v2088
        %v2166 = vunpack.c.h.b16 %v2088
        %v2167 = vunpack.c.l.b16 %v2089
        %v2168 = vunpack.c.h.b16 %v2089
        %v2169 = vunpack.c.l.b16 %v2090
        %v2170 = vunpack.c.h.b16 %v2090
        %v2171 = vunpack.c.l.b16 %v2091
        %v2172 = vunpack.c.h.b16 %v2091
        %v2173 = vunpack.c.l.b16 %v2092
        %v2174 = vunpack.c.h.b16 %v2092
        %v2175 = vunpack.c.l.b16 %v2093
        %v2176 = vunpack.c.h.b16 %v2093
        %v2177 = vunpack.c.l.b16 %v2094
        %v2178 = vunpack.c.h.b16 %v2094
        %v2179 = vunpack.c.l.b16 %v2095
        %v2180 = vunpack.c.h.b16 %v2095
        %v2181 = vunpack.c.l.b16 %v2096
        %v2182 = vunpack.c.h.b16 %v2096
        %v2183 = vunpack.c.l.b16 %v2097
        %v2184 = vunpack.c.h.b16 %v2097
        %v2185 = vunpack.c.l.b16 %v2098
        %v2186 = vunpack.c.h.b16 %v2098
        %v2187 = vunpack.c.l.b16 %v2099
        %v2188 = vunpack.c.h.b16 %v2099
        %v2189 = vunpack.c.l.b16 %v2100
        %v2190 = vunpack.c.h.b16 %v2100
        %v2191 = vunpack.c.l.b16 %v2101
        %v2192 = vunpack.c.h.b16 %v2101
        %v2193 = vunpack.c.l.b16 %v2102
        %v2194 = vunpack.c.h.b16 %v2102
        %v2195 = vunpack.c.l.b16 %v2103
        %v2196 = vunpack.c.h.b16 %v2103
        %v2197 = vunpack.c.l.b16 %v2104
        %v2198 = vunpack.c.h.b16 %v2104
        %v2199 = vunpack.c.l.b16 %v2105
        %v2200 = vunpack.c.h.b16 %v2105
        %v2201 = vunpack.c.l.b16 %v2106
        %v2202 = vunpack.c.h.b16 %v2106
        %v2203 = vpack.c.b16 %v2143, %v2139
        %v2204 = vpack.c.b16 %v2144, %v2140
        %v2205 = vpack.c.b16 %v2145, %v2141
        %v2206 = vpack.c.b16 %v2146, %v2142
        %v2207 = vpack.c.b16 %v2151, %v2147
        %v2208 = vpack.c.b16 %v2152, %v2148
        %v2209 = vpack.c.b16 %v2153, %v2149
        %v2210 = vpack.c.b16 %v2154, %v2150
        %v2211 = vpack.c.b16 %v2159, %v2155
        %v2212 = vpack.c.b16 %v2160, %v2156
        %v2213 = vpack.c.b16 %v2161, %v2157
        %v2214 = vpack.c.b16 %v2162, %v2158
        %v2215 = vpack.c.b16 %v2167, %v2163
        %v2216 = vpack.c.b16 %v2168, %v2164
        %v2217 = vpack.c.b16 %v2169, %v2165
        %v2218 = vpack.c.b16 %v2170, %v2166
        %v2219 = vpack.c.b16 %v2175, %v2171
        %v2220 = vpack.c.b16 %v2176, %v2172
        %v2221 = vpack.c.b16 %v2177, %v2173
        %v2222 = vpack.c.b16 %v2178, %v2174
        %v2223 = vpack.c.b16 %v2183, %v2179
        %v2224 = vpack.c.b16 %v2184, %v2180
        %v2225 = vpack.c.b16 %v2185, %v2181
        %v2226 = vpack.c.b16 %v2186, %v2182
        %v2227 = vpack.c.b16 %v2191, %v2187
        %v2228 = vpack.c.b16 %v2192, %v2188
        %v2229 = vpack.c.b16 %v2193, %v2189
        %v2230 = vpack.c.b16 %v2194, %v2190
        %v2231 = vpack.c.b16 %v2199, %v2195
        %v2232 = vpack.c.b16 %v2200, %v2196
        %v2233 = vpack.c.b16 %v2201, %v2197
        %v2234 = vpack.c.b16 %v2202, %v2198
        %2267 = vmatprep.subr.bf16.mxu0 %v2232
        %2268 = vmatpush1.bf16.msra.mxu0 %v2231
        %2269 = vmatprep.subr.bf16.mxu0 %v2228
        %2270 = vmatpush1.bf16.msra.mxu0 %v2227
        %2271 = vmatprep.subr.bf16.mxu0 %v2224
        %2272 = vmatpush1.bf16.msra.mxu0 %v2223
        %2273 = vmatprep.subr.bf16.mxu0 %v2220
        %2274 = vmatpush1.bf16.msra.mxu0 %v2219
        %2275 = vmatprep.subr.bf16.mxu0 %v2216
        %2276 = vmatpush1.bf16.msra.mxu0 %v2215
        %2277 = vmatprep.subr.bf16.mxu0 %v2212
        %2278 = vmatpush1.bf16.msra.mxu0 %v2211
        %2279 = vmatprep.subr.bf16.mxu0 %v2208
        %2280 = vmatpush1.bf16.msra.mxu0 %v2207
        %2281 = vmatprep.subr.bf16.mxu0 %v2204
        %2282 = vmatpush1.bf16.msra.mxu0 %v2203
        %2283 = vmatprep.subr.bf16.mxu0 0
        %2284 = vmatpush2.bf16.msra.mxu0 0
        %2285 = vmatprep.subr.bf16.mxu0 0
        %2286 = vmatpush2.bf16.msra.mxu0 0
        %2287 = vmatprep.subr.bf16.mxu0 0
        %2288 = vmatpush2.bf16.msra.mxu0 0
        %2289 = vmatprep.subr.bf16.mxu0 0
        %2290 = vmatpush2.bf16.msra.mxu0 0
        %2291 = vmatprep.subr.bf16.mxu0 0
        %2292 = vmatpush2.bf16.msra.mxu0 0
        %2293 = vmatprep.subr.bf16.mxu0 0
        %2294 = vmatpush2.bf16.msra.mxu0 0
        %2295 = vmatprep.subr.bf16.mxu0 0
        %2296 = vmatpush2.bf16.msra.mxu0 0
        %2297 = vmatprep.subr.bf16.mxu0 0
        %2298 = vmatpush2.bf16.msra.mxu0 0
        %2299 = vmatprep.mubr.bf16.mxu0 0
        %2300 = vmatmul.mubr.bf16.gmra.mxu0 %v2074
        %v2301 = vpop.f32.mrf.mxu0
        %v2302 = vadd.f32 0.0, %v2301
        %v2303 = vpop.f32.mrf.mxu0
        %v2304 = vadd.f32 0.0, %v2303
        %v2305 = vpop.f32.mrf.mxu0
        %v2306 = vpop.f32.mrf.mxu0
        %2307 = vdwg.mxu0
        %2308 = vmatprep.subr.bf16.mxu0 %v2234
        %2309 = vmatpush1.bf16.msra.mxu0 %v2233
        %2310 = vmatprep.subr.bf16.mxu0 %v2230
        %2311 = vmatpush1.bf16.msra.mxu0 %v2229
        %2312 = vmatprep.subr.bf16.mxu0 %v2226
        %2313 = vmatpush1.bf16.msra.mxu0 %v2225
        %2314 = vmatprep.subr.bf16.mxu0 %v2222
        %2315 = vmatpush1.bf16.msra.mxu0 %v2221
        %2316 = vmatprep.subr.bf16.mxu0 %v2218
        %2317 = vmatpush1.bf16.msra.mxu0 %v2217
        %2318 = vmatprep.subr.bf16.mxu0 %v2214
        %2319 = vmatpush1.bf16.msra.mxu0 %v2213
        %2320 = vmatprep.subr.bf16.mxu0 %v2210
        %2321 = vmatpush1.bf16.msra.mxu0 %v2209
        %2322 = vmatprep.subr.bf16.mxu0 %v2206
        %2323 = vmatpush1.bf16.msra.mxu0 %v2205
        %2324 = vmatprep.subr.bf16.mxu0 0
        %2325 = vmatpush2.bf16.msra.mxu0 0
        %2326 = vmatprep.subr.bf16.mxu0 0
        %2327 = vmatpush2.bf16.msra.mxu0 0
        %2328 = vmatprep.subr.bf16.mxu0 0
        %2329 = vmatpush2.bf16.msra.mxu0 0
        %2330 = vmatprep.subr.bf16.mxu0 0
        %2331 = vmatpush2.bf16.msra.mxu0 0
        %2332 = vmatprep.subr.bf16.mxu0 0
        %2333 = vmatpush2.bf16.msra.mxu0 0
        %2334 = vmatprep.subr.bf16.mxu0 0
        %2335 = vmatpush2.bf16.msra.mxu0 0
        %2336 = vmatprep.subr.bf16.mxu0 0
        %2337 = vmatpush2.bf16.msra.mxu0 0
        %2338 = vmatprep.subr.bf16.mxu0 0
        %2339 = vmatpush2.bf16.msra.mxu0 0
        %2340 = vmatprep.mubr.bf16.mxu0 0
        %2341 = vmatmul.mubr.bf16.gmra.mxu0 %v2074
        %v2342 = vpop.f32.mrf.mxu0
        %v2343 = vadd.f32 0.0, %v2342
        %v2344 = vpop.f32.mrf.mxu0
        %v2345 = vadd.f32 0.0, %v2344
        %v2346 = vpop.f32.mrf.mxu0
        %v2347 = vpop.f32.mrf.mxu0
        %2348 = vdwg.mxu0
        %v2349 = vadd.f32 %v2070, %v2302
        %v2350 = vadd.f32 %v2071, %v2304
        %v2351 = vadd.f32 %v2072, %v2343
        %v2352 = vadd.f32 %v2073, %v2345
        %v2353 = vxor.u32 %v2349, 2147483648
        %v2354 = vmul.f32 %v2353, 1.442695
        %v2355 = vpow.pop %v2354
        %v2356 = vadd.f32 %v2355, 1.0
        %v2357 = vrcp.pop %v2356
        %v2358 = vmul.f32 1.0, %v2357
        %v2359 = vxor.u32 %v2350, 2147483648
        %v2360 = vmul.f32 %v2359, 1.442695
        %v2361 = vpow.pop %v2360
        %v2362 = vadd.f32 %v2361, 1.0
        %v2363 = vrcp.pop %v2362
        %v2364 = vmul.f32 1.0, %v2363
        %v2365 = vtanh.pop %v2351
        %v2366 = vxor.u32 %v2352, 2147483648
        %v2367 = vmul.f32 %v2366, 1.442695
        %v2368 = vpow.pop %v2367
        %v2369 = vadd.f32 %v2368, 1.0
        %v2370 = vrcp.pop %v2369
        %v2371 = vmul.f32 1.0, %v2370
        %v2372 = vmul.f32 %v2364, %v2056
        %v2373 = vmul.f32 %v2358, %v2365
        %v2374 = vadd.f32 %v2372, %v2373
        %v2375 = vtanh.pop %v2374
        %v2376 = vmul.f32 %v2371, %v2375
        %v2377 = vstv %s2063
        %vm2378 = vcmp.lt.s32.totalorder %v2377, %v758
        %v2379 = vsel %vm2378, %v2376, %v2055
        %v2380 = vsel %vm2378, %v2374, %v2056
        %v2381 = vsel %vm2378, %v2376, 0.0
        %s2382 = scalar_lea.vmem %s418, %s2064 [#allocation8]
        %2383 = vst [vmem:[%s2382] sm:$0xff] %v2381
        %s2384 = smul.u32 %s759, 5
        %s2385 = smul.u32 %s35, 2
        %s2386 = sadd.s32 %s2384, %s2385
        %s2387 = sadd.s32 %s767, %s2386
        %s2388 = smul.u32 %s2386, 8
        %s2389 = sshra.s32 %s2388, 3
        %s2390 = sand.u32 %s2388, 7
        %s2391 = smul.u32 %s2389, 4
        %s2392 = smul.addr %s2391, 8
        %s2393 = scalar_lea.vmem [#allocation2], %s2392
        %v2394 = vld [vmem:[%s2393] sm:$0xff]
        %v2395 = vld [vmem:[%s2393 + $0x8] sm:$0xff]
        %v2396 = vld [vmem:[%s2393 + $0x10] sm:$0xff]
        %v2397 = vld [vmem:[%s2393 + $0x18] sm:$0xff]
        %v2398 = vpack.c.bf16 %v2379, %v2379
        %v2399 = vld [vmem:[%s373] sm:$0xff]
        %v2400 = vld [vmem:[%s373 + $0x8] sm:$0xff]
        %v2401 = vld [vmem:[%s373 + $0x10] sm:$0xff]
        %v2402 = vld [vmem:[%s373 + $0x18] sm:$0xff]
        %v2403 = vld [vmem:[%s373 + $0x20] sm:$0xff]
        %v2404 = vld [vmem:[%s373 + $0x28] sm:$0xff]
        %v2405 = vld [vmem:[%s373 + $0x30] sm:$0xff]
        %v2406 = vld [vmem:[%s373 + $0x38] sm:$0xff]
        %v2407 = vld [vmem:[%s373 + $0x40] sm:$0xff]
        %v2408 = vld [vmem:[%s373 + $0x48] sm:$0xff]
        %v2409 = vld [vmem:[%s373 + $0x50] sm:$0xff]
        %v2410 = vld [vmem:[%s373 + $0x58] sm:$0xff]
        %v2411 = vld [vmem:[%s373 + $0x60] sm:$0xff]
        %v2412 = vld [vmem:[%s373 + $0x68] sm:$0xff]
        %v2413 = vld [vmem:[%s373 + $0x70] sm:$0xff]
        %v2414 = vld [vmem:[%s373 + $0x78] sm:$0xff]
        %v2415 = vld [vmem:[%s373 + $0x80] sm:$0xff]
        %v2416 = vld [vmem:[%s373 + $0x88] sm:$0xff]
        %v2417 = vld [vmem:[%s373 + $0x90] sm:$0xff]
        %v2418 = vld [vmem:[%s373 + $0x98] sm:$0xff]
        %v2419 = vld [vmem:[%s373 + $0xa0] sm:$0xff]
        %v2420 = vld [vmem:[%s373 + $0xa8] sm:$0xff]
        %v2421 = vld [vmem:[%s373 + $0xb0] sm:$0xff]
        %v2422 = vld [vmem:[%s373 + $0xb8] sm:$0xff]
        %v2423 = vld [vmem:[%s373 + $0xc0] sm:$0xff]
        %v2424 = vld [vmem:[%s373 + $0xc8] sm:$0xff]
        %v2425 = vld [vmem:[%s373 + $0xd0] sm:$0xff]
        %v2426 = vld [vmem:[%s373 + $0xd8] sm:$0xff]
        %v2427 = vld [vmem:[%s373 + $0xe0] sm:$0xff]
        %v2428 = vld [vmem:[%s373 + $0xe8] sm:$0xff]
        %v2429 = vld [vmem:[%s373 + $0xf0] sm:$0xff]
        %v2430 = vld [vmem:[%s373 + $0xf8] sm:$0xff]
        %v2463 = vunpack.c.l.b16 %v2399
        %v2464 = vunpack.c.h.b16 %v2399
        %v2465 = vunpack.c.l.b16 %v2400
        %v2466 = vunpack.c.h.b16 %v2400
        %v2467 = vunpack.c.l.b16 %v2401
        %v2468 = vunpack.c.h.b16 %v2401
        %v2469 = vunpack.c.l.b16 %v2402
        %v2470 = vunpack.c.h.b16 %v2402
        %v2471 = vunpack.c.l.b16 %v2403
        %v2472 = vunpack.c.h.b16 %v2403
        %v2473 = vunpack.c.l.b16 %v2404
        %v2474 = vunpack.c.h.b16 %v2404
        %v2475 = vunpack.c.l.b16 %v2405
        %v2476 = vunpack.c.h.b16 %v2405
        %v2477 = vunpack.c.l.b16 %v2406
        %v2478 = vunpack.c.h.b16 %v2406
        %v2479 = vunpack.c.l.b16 %v2407
        %v2480 = vunpack.c.h.b16 %v2407
        %v2481 = vunpack.c.l.b16 %v2408
        %v2482 = vunpack.c.h.b16 %v2408
        %v2483 = vunpack.c.l.b16 %v2409
        %v2484 = vunpack.c.h.b16 %v2409
        %v2485 = vunpack.c.l.b16 %v2410
        %v2486 = vunpack.c.h.b16 %v2410
        %v2487 = vunpack.c.l.b16 %v2411
        %v2488 = vunpack.c.h.b16 %v2411
        %v2489 = vunpack.c.l.b16 %v2412
        %v2490 = vunpack.c.h.b16 %v2412
        %v2491 = vunpack.c.l.b16 %v2413
        %v2492 = vunpack.c.h.b16 %v2413
        %v2493 = vunpack.c.l.b16 %v2414
        %v2494 = vunpack.c.h.b16 %v2414
        %v2495 = vunpack.c.l.b16 %v2415
        %v2496 = vunpack.c.h.b16 %v2415
        %v2497 = vunpack.c.l.b16 %v2416
        %v2498 = vunpack.c.h.b16 %v2416
        %v2499 = vunpack.c.l.b16 %v2417
        %v2500 = vunpack.c.h.b16 %v2417
        %v2501 = vunpack.c.l.b16 %v2418
        %v2502 = vunpack.c.h.b16 %v2418
        %v2503 = vunpack.c.l.b16 %v2419
        %v2504 = vunpack.c.h.b16 %v2419
        %v2505 = vunpack.c.l.b16 %v2420
        %v2506 = vunpack.c.h.b16 %v2420
        %v2507 = vunpack.c.l.b16 %v2421
        %v2508 = vunpack.c.h.b16 %v2421
        %v2509 = vunpack.c.l.b16 %v2422
        %v2510 = vunpack.c.h.b16 %v2422
        %v2511 = vunpack.c.l.b16 %v2423
        %v2512 = vunpack.c.h.b16 %v2423
        %v2513 = vunpack.c.l.b16 %v2424
        %v2514 = vunpack.c.h.b16 %v2424
        %v2515 = vunpack.c.l.b16 %v2425
        %v2516 = vunpack.c.h.b16 %v2425
        %v2517 = vunpack.c.l.b16 %v2426
        %v2518 = vunpack.c.h.b16 %v2426
        %v2519 = vunpack.c.l.b16 %v2427
        %v2520 = vunpack.c.h.b16 %v2427
        %v2521 = vunpack.c.l.b16 %v2428
        %v2522 = vunpack.c.h.b16 %v2428
        %v2523 = vunpack.c.l.b16 %v2429
        %v2524 = vunpack.c.h.b16 %v2429
        %v2525 = vunpack.c.l.b16 %v2430
        %v2526 = vunpack.c.h.b16 %v2430
        %v2527 = vpack.c.b16 %v2467, %v2463
        %v2528 = vpack.c.b16 %v2468, %v2464
        %v2529 = vpack.c.b16 %v2469, %v2465
        %v2530 = vpack.c.b16 %v2470, %v2466
        %v2531 = vpack.c.b16 %v2475, %v2471
        %v2532 = vpack.c.b16 %v2476, %v2472
        %v2533 = vpack.c.b16 %v2477, %v2473
        %v2534 = vpack.c.b16 %v2478, %v2474
        %v2535 = vpack.c.b16 %v2483, %v2479
        %v2536 = vpack.c.b16 %v2484, %v2480
        %v2537 = vpack.c.b16 %v2485, %v2481
        %v2538 = vpack.c.b16 %v2486, %v2482
        %v2539 = vpack.c.b16 %v2491, %v2487
        %v2540 = vpack.c.b16 %v2492, %v2488
        %v2541 = vpack.c.b16 %v2493, %v2489
        %v2542 = vpack.c.b16 %v2494, %v2490
        %v2543 = vpack.c.b16 %v2499, %v2495
        %v2544 = vpack.c.b16 %v2500, %v2496
        %v2545 = vpack.c.b16 %v2501, %v2497
        %v2546 = vpack.c.b16 %v2502, %v2498
        %v2547 = vpack.c.b16 %v2507, %v2503
        %v2548 = vpack.c.b16 %v2508, %v2504
        %v2549 = vpack.c.b16 %v2509, %v2505
        %v2550 = vpack.c.b16 %v2510, %v2506
        %v2551 = vpack.c.b16 %v2515, %v2511
        %v2552 = vpack.c.b16 %v2516, %v2512
        %v2553 = vpack.c.b16 %v2517, %v2513
        %v2554 = vpack.c.b16 %v2518, %v2514
        %v2555 = vpack.c.b16 %v2523, %v2519
        %v2556 = vpack.c.b16 %v2524, %v2520
        %v2557 = vpack.c.b16 %v2525, %v2521
        %v2558 = vpack.c.b16 %v2526, %v2522
        %2591 = vmatprep.subr.bf16.mxu0 %v2556
        %2592 = vmatpush1.bf16.msra.mxu0 %v2555
        %2593 = vmatprep.subr.bf16.mxu0 %v2552
        %2594 = vmatpush1.bf16.msra.mxu0 %v2551
        %2595 = vmatprep.subr.bf16.mxu0 %v2548
        %2596 = vmatpush1.bf16.msra.mxu0 %v2547
        %2597 = vmatprep.subr.bf16.mxu0 %v2544
        %2598 = vmatpush1.bf16.msra.mxu0 %v2543
        %2599 = vmatprep.subr.bf16.mxu0 %v2540
        %2600 = vmatpush1.bf16.msra.mxu0 %v2539
        %2601 = vmatprep.subr.bf16.mxu0 %v2536
        %2602 = vmatpush1.bf16.msra.mxu0 %v2535
        %2603 = vmatprep.subr.bf16.mxu0 %v2532
        %2604 = vmatpush1.bf16.msra.mxu0 %v2531
        %2605 = vmatprep.subr.bf16.mxu0 %v2528
        %2606 = vmatpush1.bf16.msra.mxu0 %v2527
        %2607 = vmatprep.subr.bf16.mxu0 0
        %2608 = vmatpush2.bf16.msra.mxu0 0
        %2609 = vmatprep.subr.bf16.mxu0 0
        %2610 = vmatpush2.bf16.msra.mxu0 0
        %2611 = vmatprep.subr.bf16.mxu0 0
        %2612 = vmatpush2.bf16.msra.mxu0 0
        %2613 = vmatprep.subr.bf16.mxu0 0
        %2614 = vmatpush2.bf16.msra.mxu0 0
        %2615 = vmatprep.subr.bf16.mxu0 0
        %2616 = vmatpush2.bf16.msra.mxu0 0
        %2617 = vmatprep.subr.bf16.mxu0 0
        %2618 = vmatpush2.bf16.msra.mxu0 0
        %2619 = vmatprep.subr.bf16.mxu0 0
        %2620 = vmatpush2.bf16.msra.mxu0 0
        %2621 = vmatprep.subr.bf16.mxu0 0
        %2622 = vmatpush2.bf16.msra.mxu0 0
        %2623 = vmatprep.mubr.bf16.mxu0 0
        %2624 = vmatmul.mubr.bf16.gmra.mxu0 %v2398
        %v2625 = vpop.f32.mrf.mxu0
        %v2626 = vadd.f32 0.0, %v2625
        %v2627 = vpop.f32.mrf.mxu0
        %v2628 = vadd.f32 0.0, %v2627
        %v2629 = vpop.f32.mrf.mxu0
        %v2630 = vpop.f32.mrf.mxu0
        %2631 = vdwg.mxu0
        %2632 = vmatprep.subr.bf16.mxu0 %v2558
        %2633 = vmatpush1.bf16.msra.mxu0 %v2557
        %2634 = vmatprep.subr.bf16.mxu0 %v2554
        %2635 = vmatpush1.bf16.msra.mxu0 %v2553
        %2636 = vmatprep.subr.bf16.mxu0 %v2550
        %2637 = vmatpush1.bf16.msra.mxu0 %v2549
        %2638 = vmatprep.subr.bf16.mxu0 %v2546
        %2639 = vmatpush1.bf16.msra.mxu0 %v2545
        %2640 = vmatprep.subr.bf16.mxu0 %v2542
        %2641 = vmatpush1.bf16.msra.mxu0 %v2541
        %2642 = vmatprep.subr.bf16.mxu0 %v2538
        %2643 = vmatpush1.bf16.msra.mxu0 %v2537
        %2644 = vmatprep.subr.bf16.mxu0 %v2534
        %2645 = vmatpush1.bf16.msra.mxu0 %v2533
        %2646 = vmatprep.subr.bf16.mxu0 %v2530
        %2647 = vmatpush1.bf16.msra.mxu0 %v2529
        %2648 = vmatprep.subr.bf16.mxu0 0
        %2649 = vmatpush2.bf16.msra.mxu0 0
        %2650 = vmatprep.subr.bf16.mxu0 0
        %2651 = vmatpush2.bf16.msra.mxu0 0
        %2652 = vmatprep.subr.bf16.mxu0 0
        %2653 = vmatpush2.bf16.msra.mxu0 0
        %2654 = vmatprep.subr.bf16.mxu0 0
        %2655 = vmatpush2.bf16.msra.mxu0 0
        %2656 = vmatprep.subr.bf16.mxu0 0
        %2657 = vmatpush2.bf16.msra.mxu0 0
        %2658 = vmatprep.subr.bf16.mxu0 0
        %2659 = vmatpush2.bf16.msra.mxu0 0
        %2660 = vmatprep.subr.bf16.mxu0 0
        %2661 = vmatpush2.bf16.msra.mxu0 0
        %2662 = vmatprep.subr.bf16.mxu0 0
        %2663 = vmatpush2.bf16.msra.mxu0 0
        %2664 = vmatprep.mubr.bf16.mxu0 0
        %2665 = vmatmul.mubr.bf16.gmra.mxu0 %v2398
        %v2666 = vpop.f32.mrf.mxu0
        %v2667 = vadd.f32 0.0, %v2666
        %v2668 = vpop.f32.mrf.mxu0
        %v2669 = vadd.f32 0.0, %v2668
        %v2670 = vpop.f32.mrf.mxu0
        %v2671 = vpop.f32.mrf.mxu0
        %2672 = vdwg.mxu0
        %v2673 = vadd.f32 %v2394, %v2626
        %v2674 = vadd.f32 %v2395, %v2628
        %v2675 = vadd.f32 %v2396, %v2667
        %v2676 = vadd.f32 %v2397, %v2669
        %v2677 = vxor.u32 %v2673, 2147483648
        %v2678 = vmul.f32 %v2677, 1.442695
        %v2679 = vpow.pop %v2678
        %v2680 = vadd.f32 %v2679, 1.0
        %v2681 = vrcp.pop %v2680
        %v2682 = vmul.f32 1.0, %v2681
        %v2683 = vxor.u32 %v2674, 2147483648
        %v2684 = vmul.f32 %v2683, 1.442695
        %v2685 = vpow.pop %v2684
        %v2686 = vadd.f32 %v2685, 1.0
        %v2687 = vrcp.pop %v2686
        %v2688 = vmul.f32 1.0, %v2687
        %v2689 = vtanh.pop %v2675
        %v2690 = vxor.u32 %v2676, 2147483648
        %v2691 = vmul.f32 %v2690, 1.442695
        %v2692 = vpow.pop %v2691
        %v2693 = vadd.f32 %v2692, 1.0
        %v2694 = vrcp.pop %v2693
        %v2695 = vmul.f32 1.0, %v2694
        %v2696 = vmul.f32 %v2688, %v2380
        %v2697 = vmul.f32 %v2682, %v2689
        %v2698 = vadd.f32 %v2696, %v2697
        %v2699 = vtanh.pop %v2698
        %v2700 = vmul.f32 %v2695, %v2699
        %v2701 = vstv %s2387
        %vm2702 = vcmp.lt.s32.totalorder %v2701, %v758
        %v2703 = vsel %vm2702, %v2700, %v2379
        %v2704 = vsel %vm2702, %v2698, %v2380
        %v2705 = vsel %vm2702, %v2700, 0.0
        %s2706 = scalar_lea.vmem %s418, %s2388 [#allocation8]
        %2707 = vst [vmem:[%s2706] sm:$0xff] %v2705
        %s2708 = smul.u32 %s759, 6
        %s2709 = sadd.s32 %s2708, %s35
        %s2710 = sadd.s32 %s767, %s2709
        %s2711 = smul.u32 %s2709, 8
        %s2712 = sshra.s32 %s2711, 3
        %s2713 = sand.u32 %s2711, 7
        %s2714 = smul.u32 %s2712, 4
        %s2715 = smul.addr %s2714, 8
        %s2716 = scalar_lea.vmem [#allocation2], %s2715
        %v2717 = vld [vmem:[%s2716] sm:$0xff]
        %v2718 = vld [vmem:[%s2716 + $0x8] sm:$0xff]
        %v2719 = vld [vmem:[%s2716 + $0x10] sm:$0xff]
        %v2720 = vld [vmem:[%s2716 + $0x18] sm:$0xff]
        %v2721 = vpack.c.bf16 %v2703, %v2703
        %v2722 = vld [vmem:[%s373] sm:$0xff]
        %v2723 = vld [vmem:[%s373 + $0x8] sm:$0xff]
        %v2724 = vld [vmem:[%s373 + $0x10] sm:$0xff]
        %v2725 = vld [vmem:[%s373 + $0x18] sm:$0xff]
        %v2726 = vld [vmem:[%s373 + $0x20] sm:$0xff]
        %v2727 = vld [vmem:[%s373 + $0x28] sm:$0xff]
        %v2728 = vld [vmem:[%s373 + $0x30] sm:$0xff]
        %v2729 = vld [vmem:[%s373 + $0x38] sm:$0xff]
        %v2730 = vld [vmem:[%s373 + $0x40] sm:$0xff]
        %v2731 = vld [vmem:[%s373 + $0x48] sm:$0xff]
        %v2732 = vld [vmem:[%s373 + $0x50] sm:$0xff]
        %v2733 = vld [vmem:[%s373 + $0x58] sm:$0xff]
        %v2734 = vld [vmem:[%s373 + $0x60] sm:$0xff]
        %v2735 = vld [vmem:[%s373 + $0x68] sm:$0xff]
        %v2736 = vld [vmem:[%s373 + $0x70] sm:$0xff]
        %v2737 = vld [vmem:[%s373 + $0x78] sm:$0xff]
        %v2738 = vld [vmem:[%s373 + $0x80] sm:$0xff]
        %v2739 = vld [vmem:[%s373 + $0x88] sm:$0xff]
        %v2740 = vld [vmem:[%s373 + $0x90] sm:$0xff]
        %v2741 = vld [vmem:[%s373 + $0x98] sm:$0xff]
        %v2742 = vld [vmem:[%s373 + $0xa0] sm:$0xff]
        %v2743 = vld [vmem:[%s373 + $0xa8] sm:$0xff]
        %v2744 = vld [vmem:[%s373 + $0xb0] sm:$0xff]
        %v2745 = vld [vmem:[%s373 + $0xb8] sm:$0xff]
        %v2746 = vld [vmem:[%s373 + $0xc0] sm:$0xff]
        %v2747 = vld [vmem:[%s373 + $0xc8] sm:$0xff]
        %v2748 = vld [vmem:[%s373 + $0xd0] sm:$0xff]
        %v2749 = vld [vmem:[%s373 + $0xd8] sm:$0xff]
        %v2750 = vld [vmem:[%s373 + $0xe0] sm:$0xff]
        %v2751 = vld [vmem:[%s373 + $0xe8] sm:$0xff]
        %v2752 = vld [vmem:[%s373 + $0xf0] sm:$0xff]
        %v2753 = vld [vmem:[%s373 + $0xf8] sm:$0xff]
        %v2786 = vunpack.c.l.b16 %v2722
        %v2787 = vunpack.c.h.b16 %v2722
        %v2788 = vunpack.c.l.b16 %v2723
        %v2789 = vunpack.c.h.b16 %v2723
        %v2790 = vunpack.c.l.b16 %v2724
        %v2791 = vunpack.c.h.b16 %v2724
        %v2792 = vunpack.c.l.b16 %v2725
        %v2793 = vunpack.c.h.b16 %v2725
        %v2794 = vunpack.c.l.b16 %v2726
        %v2795 = vunpack.c.h.b16 %v2726
        %v2796 = vunpack.c.l.b16 %v2727
        %v2797 = vunpack.c.h.b16 %v2727
        %v2798 = vunpack.c.l.b16 %v2728
        %v2799 = vunpack.c.h.b16 %v2728
        %v2800 = vunpack.c.l.b16 %v2729
        %v2801 = vunpack.c.h.b16 %v2729
        %v2802 = vunpack.c.l.b16 %v2730
        %v2803 = vunpack.c.h.b16 %v2730
        %v2804 = vunpack.c.l.b16 %v2731
        %v2805 = vunpack.c.h.b16 %v2731
        %v2806 = vunpack.c.l.b16 %v2732
        %v2807 = vunpack.c.h.b16 %v2732
        %v2808 = vunpack.c.l.b16 %v2733
        %v2809 = vunpack.c.h.b16 %v2733
        %v2810 = vunpack.c.l.b16 %v2734
        %v2811 = vunpack.c.h.b16 %v2734
        %v2812 = vunpack.c.l.b16 %v2735
        %v2813 = vunpack.c.h.b16 %v2735
        %v2814 = vunpack.c.l.b16 %v2736
        %v2815 = vunpack.c.h.b16 %v2736
        %v2816 = vunpack.c.l.b16 %v2737
        %v2817 = vunpack.c.h.b16 %v2737
        %v2818 = vunpack.c.l.b16 %v2738
        %v2819 = vunpack.c.h.b16 %v2738
        %v2820 = vunpack.c.l.b16 %v2739
        %v2821 = vunpack.c.h.b16 %v2739
        %v2822 = vunpack.c.l.b16 %v2740
        %v2823 = vunpack.c.h.b16 %v2740
        %v2824 = vunpack.c.l.b16 %v2741
        %v2825 = vunpack.c.h.b16 %v2741
        %v2826 = vunpack.c.l.b16 %v2742
        %v2827 = vunpack.c.h.b16 %v2742
        %v2828 = vunpack.c.l.b16 %v2743
        %v2829 = vunpack.c.h.b16 %v2743
        %v2830 = vunpack.c.l.b16 %v2744
        %v2831 = vunpack.c.h.b16 %v2744
        %v2832 = vunpack.c.l.b16 %v2745
        %v2833 = vunpack.c.h.b16 %v2745
        %v2834 = vunpack.c.l.b16 %v2746
        %v2835 = vunpack.c.h.b16 %v2746
        %v2836 = vunpack.c.l.b16 %v2747
        %v2837 = vunpack.c.h.b16 %v2747
        %v2838 = vunpack.c.l.b16 %v2748
        %v2839 = vunpack.c.h.b16 %v2748
        %v2840 = vunpack.c.l.b16 %v2749
        %v2841 = vunpack.c.h.b16 %v2749
        %v2842 = vunpack.c.l.b16 %v2750
        %v2843 = vunpack.c.h.b16 %v2750
        %v2844 = vunpack.c.l.b16 %v2751
        %v2845 = vunpack.c.h.b16 %v2751
        %v2846 = vunpack.c.l.b16 %v2752
        %v2847 = vunpack.c.h.b16 %v2752
        %v2848 = vunpack.c.l.b16 %v2753
        %v2849 = vunpack.c.h.b16 %v2753
        %v2850 = vpack.c.b16 %v2790, %v2786
        %v2851 = vpack.c.b16 %v2791, %v2787
        %v2852 = vpack.c.b16 %v2792, %v2788
        %v2853 = vpack.c.b16 %v2793, %v2789
        %v2854 = vpack.c.b16 %v2798, %v2794
        %v2855 = vpack.c.b16 %v2799, %v2795
        %v2856 = vpack.c.b16 %v2800, %v2796
        %v2857 = vpack.c.b16 %v2801, %v2797
        %v2858 = vpack.c.b16 %v2806, %v2802
        %v2859 = vpack.c.b16 %v2807, %v2803
        %v2860 = vpack.c.b16 %v2808, %v2804
        %v2861 = vpack.c.b16 %v2809, %v2805
        %v2862 = vpack.c.b16 %v2814, %v2810
        %v2863 = vpack.c.b16 %v2815, %v2811
        %v2864 = vpack.c.b16 %v2816, %v2812
        %v2865 = vpack.c.b16 %v2817, %v2813
        %v2866 = vpack.c.b16 %v2822, %v2818
        %v2867 = vpack.c.b16 %v2823, %v2819
        %v2868 = vpack.c.b16 %v2824, %v2820
        %v2869 = vpack.c.b16 %v2825, %v2821
        %v2870 = vpack.c.b16 %v2830, %v2826
        %v2871 = vpack.c.b16 %v2831, %v2827
        %v2872 = vpack.c.b16 %v2832, %v2828
        %v2873 = vpack.c.b16 %v2833, %v2829
        %v2874 = vpack.c.b16 %v2838, %v2834
        %v2875 = vpack.c.b16 %v2839, %v2835
        %v2876 = vpack.c.b16 %v2840, %v2836
        %v2877 = vpack.c.b16 %v2841, %v2837
        %v2878 = vpack.c.b16 %v2846, %v2842
        %v2879 = vpack.c.b16 %v2847, %v2843
        %v2880 = vpack.c.b16 %v2848, %v2844
        %v2881 = vpack.c.b16 %v2849, %v2845
        %2914 = vmatprep.subr.bf16.mxu0 %v2879
        %2915 = vmatpush1.bf16.msra.mxu0 %v2878
        %2916 = vmatprep.subr.bf16.mxu0 %v2875
        %2917 = vmatpush1.bf16.msra.mxu0 %v2874
        %2918 = vmatprep.subr.bf16.mxu0 %v2871
        %2919 = vmatpush1.bf16.msra.mxu0 %v2870
        %2920 = vmatprep.subr.bf16.mxu0 %v2867
        %2921 = vmatpush1.bf16.msra.mxu0 %v2866
        %2922 = vmatprep.subr.bf16.mxu0 %v2863
        %2923 = vmatpush1.bf16.msra.mxu0 %v2862
        %2924 = vmatprep.subr.bf16.mxu0 %v2859
        %2925 = vmatpush1.bf16.msra.mxu0 %v2858
        %2926 = vmatprep.subr.bf16.mxu0 %v2855
        %2927 = vmatpush1.bf16.msra.mxu0 %v2854
        %2928 = vmatprep.subr.bf16.mxu0 %v2851
        %2929 = vmatpush1.bf16.msra.mxu0 %v2850
        %2930 = vmatprep.subr.bf16.mxu0 0
        %2931 = vmatpush2.bf16.msra.mxu0 0
        %2932 = vmatprep.subr.bf16.mxu0 0
        %2933 = vmatpush2.bf16.msra.mxu0 0
        %2934 = vmatprep.subr.bf16.mxu0 0
        %2935 = vmatpush2.bf16.msra.mxu0 0
        %2936 = vmatprep.subr.bf16.mxu0 0
        %2937 = vmatpush2.bf16.msra.mxu0 0
        %2938 = vmatprep.subr.bf16.mxu0 0
        %2939 = vmatpush2.bf16.msra.mxu0 0
        %2940 = vmatprep.subr.bf16.mxu0 0
        %2941 = vmatpush2.bf16.msra.mxu0 0
        %2942 = vmatprep.subr.bf16.mxu0 0
        %2943 = vmatpush2.bf16.msra.mxu0 0
        %2944 = vmatprep.subr.bf16.mxu0 0
        %2945 = vmatpush2.bf16.msra.mxu0 0
        %2946 = vmatprep.mubr.bf16.mxu0 0
        %2947 = vmatmul.mubr.bf16.gmra.mxu0 %v2721
        %v2948 = vpop.f32.mrf.mxu0
        %v2949 = vadd.f32 0.0, %v2948
        %v2950 = vpop.f32.mrf.mxu0
        %v2951 = vadd.f32 0.0, %v2950
        %v2952 = vpop.f32.mrf.mxu0
        %v2953 = vpop.f32.mrf.mxu0
        %2954 = vdwg.mxu0
        %2955 = vmatprep.subr.bf16.mxu0 %v2881
        %2956 = vmatpush1.bf16.msra.mxu0 %v2880
        %2957 = vmatprep.subr.bf16.mxu0 %v2877
        %2958 = vmatpush1.bf16.msra.mxu0 %v2876
        %2959 = vmatprep.subr.bf16.mxu0 %v2873
        %2960 = vmatpush1.bf16.msra.mxu0 %v2872
        %2961 = vmatprep.subr.bf16.mxu0 %v2869
        %2962 = vmatpush1.bf16.msra.mxu0 %v2868
        %2963 = vmatprep.subr.bf16.mxu0 %v2865
        %2964 = vmatpush1.bf16.msra.mxu0 %v2864
        %2965 = vmatprep.subr.bf16.mxu0 %v2861
        %2966 = vmatpush1.bf16.msra.mxu0 %v2860
        %2967 = vmatprep.subr.bf16.mxu0 %v2857
        %2968 = vmatpush1.bf16.msra.mxu0 %v2856
        %2969 = vmatprep.subr.bf16.mxu0 %v2853
        %2970 = vmatpush1.bf16.msra.mxu0 %v2852
        %2971 = vmatprep.subr.bf16.mxu0 0
        %2972 = vmatpush2.bf16.msra.mxu0 0
        %2973 = vmatprep.subr.bf16.mxu0 0
        %2974 = vmatpush2.bf16.msra.mxu0 0
        %2975 = vmatprep.subr.bf16.mxu0 0
        %2976 = vmatpush2.bf16.msra.mxu0 0
        %2977 = vmatprep.subr.bf16.mxu0 0
        %2978 = vmatpush2.bf16.msra.mxu0 0
        %2979 = vmatprep.subr.bf16.mxu0 0
        %2980 = vmatpush2.bf16.msra.mxu0 0
        %2981 = vmatprep.subr.bf16.mxu0 0
        %2982 = vmatpush2.bf16.msra.mxu0 0
        %2983 = vmatprep.subr.bf16.mxu0 0
        %2984 = vmatpush2.bf16.msra.mxu0 0
        %2985 = vmatprep.subr.bf16.mxu0 0
        %2986 = vmatpush2.bf16.msra.mxu0 0
        %2987 = vmatprep.mubr.bf16.mxu0 0
        %2988 = vmatmul.mubr.bf16.gmra.mxu0 %v2721
        %v2989 = vpop.f32.mrf.mxu0
        %v2990 = vadd.f32 0.0, %v2989
        %v2991 = vpop.f32.mrf.mxu0
        %v2992 = vadd.f32 0.0, %v2991
        %v2993 = vpop.f32.mrf.mxu0
        %v2994 = vpop.f32.mrf.mxu0
        %2995 = vdwg.mxu0
        %v2996 = vadd.f32 %v2717, %v2949
        %v2997 = vadd.f32 %v2718, %v2951
        %v2998 = vadd.f32 %v2719, %v2990
        %v2999 = vadd.f32 %v2720, %v2992
        %v3000 = vxor.u32 %v2996, 2147483648
        %v3001 = vmul.f32 %v3000, 1.442695
        %v3002 = vpow.pop %v3001
        %v3003 = vadd.f32 %v3002, 1.0
        %v3004 = vrcp.pop %v3003
        %v3005 = vmul.f32 1.0, %v3004
        %v3006 = vxor.u32 %v2997, 2147483648
        %v3007 = vmul.f32 %v3006, 1.442695
        %v3008 = vpow.pop %v3007
        %v3009 = vadd.f32 %v3008, 1.0
        %v3010 = vrcp.pop %v3009
        %v3011 = vmul.f32 1.0, %v3010
        %v3012 = vtanh.pop %v2998
        %v3013 = vxor.u32 %v2999, 2147483648
        %v3014 = vmul.f32 %v3013, 1.442695
        %v3015 = vpow.pop %v3014
        %v3016 = vadd.f32 %v3015, 1.0
        %v3017 = vrcp.pop %v3016
        %v3018 = vmul.f32 1.0, %v3017
        %v3019 = vmul.f32 %v3011, %v2704
        %v3020 = vmul.f32 %v3005, %v3012
        %v3021 = vadd.f32 %v3019, %v3020
        %v3022 = vtanh.pop %v3021
        %v3023 = vmul.f32 %v3018, %v3022
        %v3024 = vstv %s2710
        %vm3025 = vcmp.lt.s32.totalorder %v3024, %v758
        %v3026 = vsel %vm3025, %v3023, %v2703
        %v3027 = vsel %vm3025, %v3021, %v2704
        %v3028 = vsel %vm3025, %v3023, 0.0
        %s3029 = scalar_lea.vmem %s418, %s2711 [#allocation8]
        %3030 = vst [vmem:[%s3029] sm:$0xff] %v3028
        %s3031 = smul.u32 %s759, 7
        %s3032 = sadd.s32 %s767, %s3031
        %s3033 = smul.u32 %s759, 56
        %s3034 = sshra.s32 %s3033, 3
        %s3035 = sand.u32 %s3033, 7
        %s3036 = smul.u32 %s3034, 4
        %s3037 = smul.addr %s3036, 8
        %s3038 = scalar_lea.vmem [#allocation2], %s3037
        %v3039 = vld [vmem:[%s3038] sm:$0xff]
        %v3040 = vld [vmem:[%s3038 + $0x8] sm:$0xff]
        %v3041 = vld [vmem:[%s3038 + $0x10] sm:$0xff]
        %v3042 = vld [vmem:[%s3038 + $0x18] sm:$0xff]
        %v3043 = vpack.c.bf16 %v3026, %v3026
        %v3044 = vld [vmem:[%s373] sm:$0xff]
        %v3045 = vld [vmem:[%s373 + $0x8] sm:$0xff]
        %v3046 = vld [vmem:[%s373 + $0x10] sm:$0xff]
        %v3047 = vld [vmem:[%s373 + $0x18] sm:$0xff]
        %v3048 = vld [vmem:[%s373 + $0x20] sm:$0xff]
        %v3049 = vld [vmem:[%s373 + $0x28] sm:$0xff]
        %v3050 = vld [vmem:[%s373 + $0x30] sm:$0xff]
        %v3051 = vld [vmem:[%s373 + $0x38] sm:$0xff]
        %v3052 = vld [vmem:[%s373 + $0x40] sm:$0xff]
        %v3053 = vld [vmem:[%s373 + $0x48] sm:$0xff]
        %v3054 = vld [vmem:[%s373 + $0x50] sm:$0xff]
        %v3055 = vld [vmem:[%s373 + $0x58] sm:$0xff]
        %v3056 = vld [vmem:[%s373 + $0x60] sm:$0xff]
        %v3057 = vld [vmem:[%s373 + $0x68] sm:$0xff]
        %v3058 = vld [vmem:[%s373 + $0x70] sm:$0xff]
        %v3059 = vld [vmem:[%s373 + $0x78] sm:$0xff]
        %v3060 = vld [vmem:[%s373 + $0x80] sm:$0xff]
        %v3061 = vld [vmem:[%s373 + $0x88] sm:$0xff]
        %v3062 = vld [vmem:[%s373 + $0x90] sm:$0xff]
        %v3063 = vld [vmem:[%s373 + $0x98] sm:$0xff]
        %v3064 = vld [vmem:[%s373 + $0xa0] sm:$0xff]
        %v3065 = vld [vmem:[%s373 + $0xa8] sm:$0xff]
        %v3066 = vld [vmem:[%s373 + $0xb0] sm:$0xff]
        %v3067 = vld [vmem:[%s373 + $0xb8] sm:$0xff]
        %v3068 = vld [vmem:[%s373 + $0xc0] sm:$0xff]
        %v3069 = vld [vmem:[%s373 + $0xc8] sm:$0xff]
        %v3070 = vld [vmem:[%s373 + $0xd0] sm:$0xff]
        %v3071 = vld [vmem:[%s373 + $0xd8] sm:$0xff]
        %v3072 = vld [vmem:[%s373 + $0xe0] sm:$0xff]
        %v3073 = vld [vmem:[%s373 + $0xe8] sm:$0xff]
        %v3074 = vld [vmem:[%s373 + $0xf0] sm:$0xff]
        %v3075 = vld [vmem:[%s373 + $0xf8] sm:$0xff]
        %v3108 = vunpack.c.l.b16 %v3044
        %v3109 = vunpack.c.h.b16 %v3044
        %v3110 = vunpack.c.l.b16 %v3045
        %v3111 = vunpack.c.h.b16 %v3045
        %v3112 = vunpack.c.l.b16 %v3046
        %v3113 = vunpack.c.h.b16 %v3046
        %v3114 = vunpack.c.l.b16 %v3047
        %v3115 = vunpack.c.h.b16 %v3047
        %v3116 = vunpack.c.l.b16 %v3048
        %v3117 = vunpack.c.h.b16 %v3048
        %v3118 = vunpack.c.l.b16 %v3049
        %v3119 = vunpack.c.h.b16 %v3049
        %v3120 = vunpack.c.l.b16 %v3050
        %v3121 = vunpack.c.h.b16 %v3050
        %v3122 = vunpack.c.l.b16 %v3051
        %v3123 = vunpack.c.h.b16 %v3051
        %v3124 = vunpack.c.l.b16 %v3052
        %v3125 = vunpack.c.h.b16 %v3052
        %v3126 = vunpack.c.l.b16 %v3053
        %v3127 = vunpack.c.h.b16 %v3053
        %v3128 = vunpack.c.l.b16 %v3054
        %v3129 = vunpack.c.h.b16 %v3054
        %v3130 = vunpack.c.l.b16 %v3055
        %v3131 = vunpack.c.h.b16 %v3055
        %v3132 = vunpack.c.l.b16 %v3056
        %v3133 = vunpack.c.h.b16 %v3056
        %v3134 = vunpack.c.l.b16 %v3057
        %v3135 = vunpack.c.h.b16 %v3057
        %v3136 = vunpack.c.l.b16 %v3058
        %v3137 = vunpack.c.h.b16 %v3058
        %v3138 = vunpack.c.l.b16 %v3059
        %v3139 = vunpack.c.h.b16 %v3059
        %v3140 = vunpack.c.l.b16 %v3060
        %v3141 = vunpack.c.h.b16 %v3060
        %v3142 = vunpack.c.l.b16 %v3061
        %v3143 = vunpack.c.h.b16 %v3061
        %v3144 = vunpack.c.l.b16 %v3062
        %v3145 = vunpack.c.h.b16 %v3062
        %v3146 = vunpack.c.l.b16 %v3063
        %v3147 = vunpack.c.h.b16 %v3063
        %v3148 = vunpack.c.l.b16 %v3064
        %v3149 = vunpack.c.h.b16 %v3064
        %v3150 = vunpack.c.l.b16 %v3065
        %v3151 = vunpack.c.h.b16 %v3065
        %v3152 = vunpack.c.l.b16 %v3066
        %v3153 = vunpack.c.h.b16 %v3066
        %v3154 = vunpack.c.l.b16 %v3067
        %v3155 = vunpack.c.h.b16 %v3067
        %v3156 = vunpack.c.l.b16 %v3068
        %v3157 = vunpack.c.h.b16 %v3068
        %v3158 = vunpack.c.l.b16 %v3069
        %v3159 = vunpack.c.h.b16 %v3069
        %v3160 = vunpack.c.l.b16 %v3070
        %v3161 = vunpack.c.h.b16 %v3070
        %v3162 = vunpack.c.l.b16 %v3071
        %v3163 = vunpack.c.h.b16 %v3071
        %v3164 = vunpack.c.l.b16 %v3072
        %v3165 = vunpack.c.h.b16 %v3072
        %v3166 = vunpack.c.l.b16 %v3073
        %v3167 = vunpack.c.h.b16 %v3073
        %v3168 = vunpack.c.l.b16 %v3074
        %v3169 = vunpack.c.h.b16 %v3074
        %v3170 = vunpack.c.l.b16 %v3075
        %v3171 = vunpack.c.h.b16 %v3075
        %v3172 = vpack.c.b16 %v3112, %v3108
        %v3173 = vpack.c.b16 %v3113, %v3109
        %v3174 = vpack.c.b16 %v3114, %v3110
        %v3175 = vpack.c.b16 %v3115, %v3111
        %v3176 = vpack.c.b16 %v3120, %v3116
        %v3177 = vpack.c.b16 %v3121, %v3117
        %v3178 = vpack.c.b16 %v3122, %v3118
        %v3179 = vpack.c.b16 %v3123, %v3119
        %v3180 = vpack.c.b16 %v3128, %v3124
        %v3181 = vpack.c.b16 %v3129, %v3125
        %v3182 = vpack.c.b16 %v3130, %v3126
        %v3183 = vpack.c.b16 %v3131, %v3127
        %v3184 = vpack.c.b16 %v3136, %v3132
        %v3185 = vpack.c.b16 %v3137, %v3133
        %v3186 = vpack.c.b16 %v3138, %v3134
        %v3187 = vpack.c.b16 %v3139, %v3135
        %v3188 = vpack.c.b16 %v3144, %v3140
        %v3189 = vpack.c.b16 %v3145, %v3141
        %v3190 = vpack.c.b16 %v3146, %v3142
        %v3191 = vpack.c.b16 %v3147, %v3143
        %v3192 = vpack.c.b16 %v3152, %v3148
        %v3193 = vpack.c.b16 %v3153, %v3149
        %v3194 = vpack.c.b16 %v3154, %v3150
        %v3195 = vpack.c.b16 %v3155, %v3151
        %v3196 = vpack.c.b16 %v3160, %v3156
        %v3197 = vpack.c.b16 %v3161, %v3157
        %v3198 = vpack.c.b16 %v3162, %v3158
        %v3199 = vpack.c.b16 %v3163, %v3159
        %v3200 = vpack.c.b16 %v3168, %v3164
        %v3201 = vpack.c.b16 %v3169, %v3165
        %v3202 = vpack.c.b16 %v3170, %v3166
        %v3203 = vpack.c.b16 %v3171, %v3167
        %3236 = vmatprep.subr.bf16.mxu0 %v3201
        %3237 = vmatpush1.bf16.msra.mxu0 %v3200
        %3238 = vmatprep.subr.bf16.mxu0 %v3197
        %3239 = vmatpush1.bf16.msra.mxu0 %v3196
        %3240 = vmatprep.subr.bf16.mxu0 %v3193
        %3241 = vmatpush1.bf16.msra.mxu0 %v3192
        %3242 = vmatprep.subr.bf16.mxu0 %v3189
        %3243 = vmatpush1.bf16.msra.mxu0 %v3188
        %3244 = vmatprep.subr.bf16.mxu0 %v3185
        %3245 = vmatpush1.bf16.msra.mxu0 %v3184
        %3246 = vmatprep.subr.bf16.mxu0 %v3181
        %3247 = vmatpush1.bf16.msra.mxu0 %v3180
        %3248 = vmatprep.subr.bf16.mxu0 %v3177
        %3249 = vmatpush1.bf16.msra.mxu0 %v3176
        %3250 = vmatprep.subr.bf16.mxu0 %v3173
        %3251 = vmatpush1.bf16.msra.mxu0 %v3172
        %3252 = vmatprep.subr.bf16.mxu0 0
        %3253 = vmatpush2.bf16.msra.mxu0 0
        %3254 = vmatprep.subr.bf16.mxu0 0
        %3255 = vmatpush2.bf16.msra.mxu0 0
        %3256 = vmatprep.subr.bf16.mxu0 0
        %3257 = vmatpush2.bf16.msra.mxu0 0
        %3258 = vmatprep.subr.bf16.mxu0 0
        %3259 = vmatpush2.bf16.msra.mxu0 0
        %3260 = vmatprep.subr.bf16.mxu0 0
        %3261 = vmatpush2.bf16.msra.mxu0 0
        %3262 = vmatprep.subr.bf16.mxu0 0
        %3263 = vmatpush2.bf16.msra.mxu0 0
        %3264 = vmatprep.subr.bf16.mxu0 0
        %3265 = vmatpush2.bf16.msra.mxu0 0
        %3266 = vmatprep.subr.bf16.mxu0 0
        %3267 = vmatpush2.bf16.msra.mxu0 0
        %3268 = vmatprep.mubr.bf16.mxu0 0
        %3269 = vmatmul.mubr.bf16.gmra.mxu0 %v3043
        %v3270 = vpop.f32.mrf.mxu0
        %v3271 = vadd.f32 0.0, %v3270
        %v3272 = vpop.f32.mrf.mxu0
        %v3273 = vadd.f32 0.0, %v3272
        %v3274 = vpop.f32.mrf.mxu0
        %v3275 = vpop.f32.mrf.mxu0
        %3276 = vdwg.mxu0
        %3277 = vmatprep.subr.bf16.mxu0 %v3203
        %3278 = vmatpush1.bf16.msra.mxu0 %v3202
        %3279 = vmatprep.subr.bf16.mxu0 %v3199
        %3280 = vmatpush1.bf16.msra.mxu0 %v3198
        %3281 = vmatprep.subr.bf16.mxu0 %v3195
        %3282 = vmatpush1.bf16.msra.mxu0 %v3194
        %3283 = vmatprep.subr.bf16.mxu0 %v3191
        %3284 = vmatpush1.bf16.msra.mxu0 %v3190
        %3285 = vmatprep.subr.bf16.mxu0 %v3187
        %3286 = vmatpush1.bf16.msra.mxu0 %v3186
        %3287 = vmatprep.subr.bf16.mxu0 %v3183
        %3288 = vmatpush1.bf16.msra.mxu0 %v3182
        %3289 = vmatprep.subr.bf16.mxu0 %v3179
        %3290 = vmatpush1.bf16.msra.mxu0 %v3178
        %3291 = vmatprep.subr.bf16.mxu0 %v3175
        %3292 = vmatpush1.bf16.msra.mxu0 %v3174
        %3293 = vmatprep.subr.bf16.mxu0 0
        %3294 = vmatpush2.bf16.msra.mxu0 0
        %3295 = vmatprep.subr.bf16.mxu0 0
        %3296 = vmatpush2.bf16.msra.mxu0 0
        %3297 = vmatprep.subr.bf16.mxu0 0
        %3298 = vmatpush2.bf16.msra.mxu0 0
        %3299 = vmatprep.subr.bf16.mxu0 0
        %3300 = vmatpush2.bf16.msra.mxu0 0
        %3301 = vmatprep.subr.bf16.mxu0 0
        %3302 = vmatpush2.bf16.msra.mxu0 0
        %3303 = vmatprep.subr.bf16.mxu0 0
        %3304 = vmatpush2.bf16.msra.mxu0 0
        %3305 = vmatprep.subr.bf16.mxu0 0
        %3306 = vmatpush2.bf16.msra.mxu0 0
        %3307 = vmatprep.subr.bf16.mxu0 0
        %3308 = vmatpush2.bf16.msra.mxu0 0
        %3309 = vmatprep.mubr.bf16.mxu0 0
        %3310 = vmatmul.mubr.bf16.gmra.mxu0 %v3043
        %v3311 = vpop.f32.mrf.mxu0
        %v3312 = vadd.f32 0.0, %v3311
        %v3313 = vpop.f32.mrf.mxu0
        %v3314 = vadd.f32 0.0, %v3313
        %v3315 = vpop.f32.mrf.mxu0
        %v3316 = vpop.f32.mrf.mxu0
        %3317 = vdwg.mxu0
        %v3318 = vadd.f32 %v3039, %v3271
        %v3319 = vadd.f32 %v3040, %v3273
        %v3320 = vadd.f32 %v3041, %v3312
        %v3321 = vadd.f32 %v3042, %v3314
        %v3322 = vxor.u32 %v3318, 2147483648
        %v3323 = vmul.f32 %v3322, 1.442695
        %v3324 = vpow.pop %v3323
        %v3325 = vadd.f32 %v3324, 1.0
        %v3326 = vrcp.pop %v3325
        %v3327 = vmul.f32 1.0, %v3326
        %v3328 = vxor.u32 %v3319, 2147483648
        %v3329 = vmul.f32 %v3328, 1.442695
        %v3330 = vpow.pop %v3329
        %v3331 = vadd.f32 %v3330, 1.0
        %v3332 = vrcp.pop %v3331
        %v3333 = vmul.f32 1.0, %v3332
        %v3334 = vtanh.pop %v3320
        %v3335 = vxor.u32 %v3321, 2147483648
        %v3336 = vmul.f32 %v3335, 1.442695
        %v3337 = vpow.pop %v3336
        %v3338 = vadd.f32 %v3337, 1.0
        %v3339 = vrcp.pop %v3338
        %v3340 = vmul.f32 1.0, %v3339
        %v3341 = vmul.f32 %v3333, %v3027
        %v3342 = vmul.f32 %v3327, %v3334
        %v3343 = vadd.f32 %v3341, %v3342
        %v3344 = vtanh.pop %v3343
        %v3345 = vmul.f32 %v3340, %v3344
        %v3346 = vstv %s3032
        %vm3347 = vcmp.lt.s32.totalorder %v3346, %v758
        %v3348 = vsel %vm3347, %v3345, %v3026
        %v3349 = vsel %vm3347, %v3343, %v3027
        %v3350 = vsel %vm3347, %v3345, 0.0
        %s3351 = scalar_lea.vmem %s418, %s3033 [#allocation8]
        %3352 = vst [vmem:[%s3351] sm:$0xff] %v3350
        %3353 = vst [vmem:[%s425] sm:$0xff] %v3348
        %3354 = vst [vmem:[%s432] sm:$0xff] %v3349
        %s3355 = sand.u32 %s198, 1
        %s3356 = scalar_lea.sflag [#allocation5], %s3355
        %s3357 = sand.u32 %s198, 1
        %s3358 = smul.addr %s3357, 64
        %s3359 = scalar_lea.vmem [#allocation8], %s3358
        %s3360 = sand.u32 %s31, 1
        %s3361 = scalar_lea.sflag [#allocation10], %s3360
        %s3362 = sand.u32 %s224, 1
        %s3363 = smul.addr %s3362, 8
        %s3364 = scalar_lea.vmem [#allocation9], %s3363
        %s3365 = sand.u32 %s31, 1
        %s3366 = scalar_lea.sflag [#allocation10], %s3365
        %s3367 = sand.u32 %s250, 1
        %s3368 = smul.addr %s3367, 8
        %s3369 = scalar_lea.vmem [#allocation11], %s3368
        // Predicated region
        $region53: #{tpu_custom_call.1} parent=39 // pred_check
          %p3370 = pneg %p208
        $region54: #{tpu_custom_call.1} parent=39 // pred_check_branch
          %3372 = sbr.rel (%p3370) target = $region56
        $region55: #{tpu_custom_call.1} parent=39 // pred_region
          %s3373 = ssub.s32 1, %s35
          %s3374 = smul.u32 %s3373, %s36
          %s3375 = ssub.s32 0, %s36
          %s3376 = smul.u32 %s35, %s3375
          %s3377 = sadd.s32 %s3374, %s3376
          %s3378 = smul.u32 8, %s3377
          %s3380 = ssub.s32 1024, 1024
          %3381 = vsyncadd %s3356, %s3380
          %s3382 = smul.addr %s3378, 2
          %s3383 = sadd.s32 %s35, %s3382
          %s3384 = smul.addr %s3383, 128
          %s3385 = scalar_lea.hbm %s5, %s3384
          %s3386 = sshll.u32 %s3359, 4
          %s3387 = int_to_ptr.vmem [resolvable:$true] %s3386
          %3392 = dma.vmem_to_hbm [thread:$0]  %s3387, 1024, %s3385, %s3356, 128, 256, 8
        $region56: #{tpu_custom_call.1} parent=39 // pred_fallthru
          _
        // Predicated region
        $region57: #{tpu_custom_call.1} parent=39 // pred_check
          %p3393 = pneg %p234
        $region58: #{tpu_custom_call.1} parent=39 // pred_check_branch
          %3395 = sbr.rel (%p3393) target = $region60
        $region59: #{tpu_custom_call.1} parent=39 // pred_region
          %s3397 = ssub.s32 128, 128
          %3398 = vsyncadd %s3361, %s3397
          %s3399 = smul.addr %s35, 128
          %s3400 = scalar_lea.hbm %s6, %s3399
          %s3402 = sshll.u32 %s3364, 4
          %s3403 = int_to_ptr.vmem [resolvable:$true] %s3402
          %3405 = dma.vmem_to_hbm [thread:$0]  %s3403, 128, %s3400, %s3361
        $region60: #{tpu_custom_call.1} parent=39 // pred_fallthru
          _
        // Predicated region
        $region61: #{tpu_custom_call.1} parent=39 // pred_check
          %p3406 = pneg %p260
        $region62: #{tpu_custom_call.1} parent=39 // pred_check_branch
          %3408 = sbr.rel (%p3406) target = $region64
        $region63: #{tpu_custom_call.1} parent=39 // pred_region
          %s3410 = ssub.s32 128, 128
          %3411 = vsyncadd %s3366, %s3410
          %s3412 = smul.addr %s35, 128
          %s3413 = scalar_lea.hbm %s7, %s3412
          %s3415 = sshll.u32 %s3369, 4
          %s3416 = int_to_ptr.vmem [resolvable:$true] %s3415
          %3418 = dma.vmem_to_hbm [thread:$0]  %s3416, 128, %s3413, %s3366
        $region64: #{tpu_custom_call.1} parent=39 // pred_fallthru
          _
      $region40: #{tpu_custom_call.1} parent=5 // pred_fallthru
        _
      %p3419 = scmp.le.s32.totalorder 2, %s26
      // Predicated region
      $region65: #{tpu_custom_call.1} parent=5 // pred_check
        %p3420 = pneg %p3419
      $region66: #{tpu_custom_call.1} parent=5 // pred_check_branch
        %3422 = sbr.rel (%p3420) target = $region68
      $region67: #{tpu_custom_call.1} parent=5 // pred_region
        %s3423 = ssub.s32 %s26, 2
        // Predicated region
        $region69: #{tpu_custom_call.1} parent=67 // pred_check
          %p3424 = pneg %p214
        $region70: #{tpu_custom_call.1} parent=67 // pred_check_branch
          %3426 = sbr.rel (%p3424) target = $region72
        $region71: #{tpu_custom_call.1} parent=67 // pred_region
          %s3427 = sand.u32 %s199, 1
          %s3428 = scalar_lea.sflag [#allocation5], %s3427
          %s3429 = sand.u32 %s199, 1
          %s3430 = smul.addr %s3429, 64
          %s3431 = scalar_lea.vmem [#allocation8], %s3430
          %3432 = dma.done %s3428, 1024
        $region72: #{tpu_custom_call.1} parent=67 // pred_fallthru
          _
        // Predicated region
        $region73: #{tpu_custom_call.1} parent=67 // pred_check
          %p3433 = pneg %p240
        $region74: #{tpu_custom_call.1} parent=67 // pred_check_branch
          %3435 = sbr.rel (%p3433) target = $region76
        $region75: #{tpu_custom_call.1} parent=67 // pred_region
          %s3436 = sand.u32 %s32, 1
          %s3437 = scalar_lea.sflag [#allocation10], %s3436
          %s3438 = sand.u32 %s225, 1
          %s3439 = smul.addr %s3438, 8
          %s3440 = scalar_lea.vmem [#allocation9], %s3439
          %3441 = dma.done %s3437, 128
        $region76: #{tpu_custom_call.1} parent=67 // pred_fallthru
          _
        // Predicated region
        $region77: #{tpu_custom_call.1} parent=67 // pred_check
          %p3442 = pneg %p266
        $region78: #{tpu_custom_call.1} parent=67 // pred_check_branch
          %3444 = sbr.rel (%p3442) target = $region80
        $region79: #{tpu_custom_call.1} parent=67 // pred_region
          %s3445 = sand.u32 %s32, 1
          %s3446 = scalar_lea.sflag [#allocation10], %s3445
          %s3447 = sand.u32 %s251, 1
          %s3448 = smul.addr %s3447, 8
          %s3449 = scalar_lea.vmem [#allocation11], %s3448
          %3450 = dma.done %s3446, 128
        $region80: #{tpu_custom_call.1} parent=67 // pred_fallthru
          _
      $region68: #{tpu_custom_call.1} parent=5 // pred_fallthru
        _
    $region6: #{tpu_custom_call.1} parent=1 // loop_footer
      %s30 = sadd.s32 1, %s26
    $region7: #{tpu_custom_call.1} parent=1 // loop_footer_branch
      %25 = sbr.rel target = $region3
    $region8: #{tpu_custom_call.1} parent=1 // loop_exit
      _
    %3451 = vsyncpa [#allocation4], 1
    %s3452 = scalar_lea.sflag [#allocation4], 1
    %3453 = vsyncpa %s3452, 1
    %3454 = vsyncpa [#allocation7], 1
    %s3455 = scalar_lea.sflag [#allocation7], 1
    %3456 = vsyncpa %s3455, 1
    %3457 = vsyncpa [#allocation5], 1
    %s3458 = scalar_lea.sflag [#allocation5], 1
    %3459 = vsyncpa %s3458, 1
    %3460 = vsyncpa [#allocation10], 1
    %s3461 = scalar_lea.sflag [#allocation10], 1
    %3462 = vsyncpa %s3461, 1

</llo_original>
